<compile_context>
chip_gen: v7x
topology: tpu7x:2x2x1
jax: 0.10.0
libtpu: 0.0.40
codegen_flags: <defaults>
</compile_context>

<pallas_src>
import functools

import jax
import jax.numpy as jnp
from jax.experimental import pallas as pl
from jax.experimental.pallas import tpu as pltpu

_EPS = 1e-5
_LANE = 128
_VMEM_LIMIT = 40 * 1024 * 1024      # headroom on v5e/v6e (128 MiB), fits v7x (64 MiB)


def _round_up(n, m):
    return (n + m - 1) // m * m


def _pick_tile_n(N, H, W, max_rows=4096):
    """Largest batch tile with a modest matmul M-dim; prefer >= 2 grid steps so
    the 'parallel' batch axis can split across the two TensorCores (v7x)."""
    best_any, best_par = 1, None
    for d in range(1, N + 1):
        if N % d == 0 and d * H * W <= max_rows:
            best_any = d
            if N // d >= 2:
                best_par = d
    return best_par if best_par is not None else best_any


def _fill_padded(hpad_ref, interior, H, W):
    """Write `interior` (f32, (TN,H,W,Cp)) into the spatially padded scratch.

    Only the halo / right width-padding is zero-filled; the interior is fully
    overwritten every grid step, so this is safe under megacore 'parallel'.
    """
    TN, Hp, Wp, Cp = hpad_ref.shape
    hpad_ref[:, 0:1, :, :] = jnp.zeros((TN, 1, Wp, Cp), jnp.float32)
    hpad_ref[:, H + 1:H + 2, :, :] = jnp.zeros((TN, 1, Wp, Cp), jnp.float32)
    hpad_ref[:, :, 0:1, :] = jnp.zeros((TN, Hp, 1, Cp), jnp.float32)
    hpad_ref[:, :, W + 1:Wp, :] = jnp.zeros((TN, Hp, Wp - (W + 1), Cp),
                                            jnp.float32)
    hpad_ref[:, 1:H + 1, 1:W + 1, :] = interior


def _conv3x3_deepk(hpad_ref, w_ref, H, W):
    """3x3 'same' conv of the padded scratch as ONE deep-K bf16 MXU matmul.

    hpad_ref: (TN, H+2, Wp, Cp) f32 zero-haloed input (Wp = roundup(W+2, 8))
    w_ref   : (9*Cp, Cp) bf16; row block k = dy*3+dx holds the (Cin,Cout) matrix
    returns : (TN*H*W, Cp) float32 accumulator
    """
    TN, Hp, Wp, Cp = hpad_ref.shape
    rows = TN * H * W
    # Only the dx width-shifts touch the sublane axis (3 loads, not 9 per-tap
    # copies); dy shifts are free major-axis slices of these values.
    shifted = [hpad_ref[:, :, dx:dx + W, :] for dx in range(3)]
    pieces = []
    for dy in range(3):
        for dx in range(3):
            win = shifted[dx][:, dy:dy + H, :, :].reshape(rows, Cp)
            pieces.append(win.astype(jnp.bfloat16))
    patches = jnp.concatenate(pieces, axis=1)                # (rows, 9*Cp) bf16
    return jnp.dot(patches, w_ref[...],
                   preferred_element_type=jnp.float32)       # (rows, Cp) f32


def _partial_moments(acc):
    """Per-channel sum and sum-of-squares of a (rows, Cp) f32 block."""
    s = jnp.sum(acc, axis=0, keepdims=True)
    ss = jnp.sum(acc * acc, axis=0, keepdims=True)
    return jnp.concatenate([s, ss], axis=0)                  # (2, Cp) f32


def _finalize_bn(stats, gb, count):
    """Fold per-tile (sum, sumsq) partials + (gamma, beta) into scale/shift."""
    sums = jnp.sum(stats, axis=0)                            # (2, Cp)
    mean = sums[0:1, :] / count
    var = jnp.maximum(sums[1:2, :] / count - mean * mean, 0.0)
    scale = gb[0:1, :] * jax.lax.rsqrt(var + _EPS)           # rsqrt -> EUP
    shift = gb[1:2, :] - mean * scale
    return scale, shift


def _conv1_kernel(x_ref, w_ref, y_ref, stats_ref, hpad_ref, *, H, W):
    TN, _, _, Cp = x_ref.shape
    _fill_padded(hpad_ref, x_ref[...], H, W)
    acc = _conv3x3_deepk(hpad_ref, w_ref, H, W)
    y_ref[...] = acc.astype(y_ref.dtype).reshape(TN, H, W, Cp)
    stats_ref[...] = _partial_moments(acc).reshape(1, 2, Cp)


def _bn_relu_conv2_kernel(y1_ref, stats1_ref, gb1_ref, w_ref,
                          y2_ref, stats2_ref, hpad_ref, *, H, W, count):
    TN, _, _, Cp = y1_ref.shape
    scale, shift = _finalize_bn(stats1_ref[...], gb1_ref[...], count)
    h = (y1_ref[...].astype(jnp.float32) * scale.reshape(1, 1, 1, Cp)
         + shift.reshape(1, 1, 1, Cp))
    h = jnp.maximum(h, 0.0)
    _fill_padded(hpad_ref, h, H, W)
    acc = _conv3x3_deepk(hpad_ref, w_ref, H, W)
    y2_ref[...] = acc.astype(y2_ref.dtype).reshape(TN, H, W, Cp)
    stats2_ref[...] = _partial_moments(acc).reshape(1, 2, Cp)


def _bn_residual_relu_kernel(y2_ref, x_ref, stats2_ref, gb2_ref, out_ref, *,
                             count):
    Cp = y2_ref.shape[-1]
    scale, shift = _finalize_bn(stats2_ref[...], gb2_ref[...], count)
    h = (y2_ref[...].astype(jnp.float32) * scale.reshape(1, 1, 1, Cp)
         + shift.reshape(1, 1, 1, Cp))
    out_ref[...] = jnp.maximum(h + x_ref[...].astype(jnp.float32),
                               0.0).astype(out_ref.dtype)


@functools.partial(jax.jit, static_argnames=("tile_n",))
def resblock_pallas(x_nchw, params, *, tile_n=None):
    """ResBlock forward; x_nchw is (N, C, H, W) like the PyTorch module."""
    w1, b1, g1, be1, w2, b2, g2, be2 = params
    del b1, b2  # exactly cancelled by training-mode BN mean subtraction
    N, C, H, W = x_nchw.shape
    Cp = _round_up(max(C, _LANE), _LANE)     # lane-dense channel axis
    Hp = H + 2
    Wp = _round_up(W + 2, 8)                 # sublane-aligned padded width
    if tile_n is None:
        tile_n = _pick_tile_n(N, H, W)
    assert N % tile_n == 0
    num_tiles = N // tile_n
    cnt = float(N * H * W)

    # ---- layout glue: NCHW -> lane-dense NHWC (padded channels carry zeros) --
    x_nhwc = jnp.transpose(x_nchw, (0, 2, 3, 1)).astype(jnp.float32)
    x_c = jnp.pad(x_nhwc, ((0, 0), (0, 0), (0, 0), (0, Cp - C)))

    def conv_w(w):   # PyTorch OIHW (Co,Ci,3,3) -> (9*Cp, Cp) bf16, block k=dy*3+dx
        w = jnp.transpose(w, (2, 3, 1, 0)).astype(jnp.float32)   # (3,3,Ci,Co)
        w = jnp.pad(w, ((0, 0), (0, 0), (0, Cp - C), (0, Cp - C)))
        return w.reshape(9 * Cp, Cp).astype(jnp.bfloat16)

    def gamma_beta(g, be):
        g = jnp.pad(g.astype(jnp.float32), (0, Cp - C), constant_values=1.0)
        be = jnp.pad(be.astype(jnp.float32), (0, Cp - C), constant_values=0.0)
        return jnp.stack([g, be], axis=0)                        # (2, Cp)

    w1m, w2m = conv_w(w1), conv_w(w2)
    gb1, gb2 = gamma_beta(g1, be1), gamma_beta(g2, be2)

    tile_spec = pl.BlockSpec((tile_n, H, W, Cp), lambda i: (i, 0, 0, 0))
    w_spec = pl.BlockSpec((9 * Cp, Cp), lambda i: (0, 0))
    gb_spec = pl.BlockSpec((2, Cp), lambda i: (0, 0))
    stats_all_spec = pl.BlockSpec((num_tiles, 2, Cp), lambda i: (0, 0, 0))
    stats_tile_spec = pl.BlockSpec((1, 2, Cp), lambda i: (i, 0, 0))
    hpad_scratch = pltpu.VMEM((tile_n, Hp, Wp, Cp), jnp.float32)
    stats_shape = jax.ShapeDtypeStruct((num_tiles, 2, Cp), jnp.float32)
    act_shape = jax.ShapeDtypeStruct((N, H, W, Cp), jnp.bfloat16)
    cparams = pltpu.CompilerParams(
        dimension_semantics=("parallel",),
        vmem_limit_bytes=_VMEM_LIMIT)

    # ---- pass 1: conv1 (deep-K bf16 MXU) + per-tile batch-stat partials -----
    y1, stats1 = pl.pallas_call(
        functools.partial(_conv1_kernel, H=H, W=W),
        grid=(num_tiles,),
        in_specs=[tile_spec, w_spec],
        out_specs=[tile_spec, stats_tile_spec],
        out_shape=[act_shape, stats_shape],
        scratch_shapes=[hpad_scratch],
        compiler_params=cparams,
    )(x_c, w1m)

    # ---- pass 2: bn1 (finalized in-kernel) + relu + conv2 + stat partials ----
    y2, stats2 = pl.pallas_call(
        functools.partial(_bn_relu_conv2_kernel, H=H, W=W, count=cnt),
        grid=(num_tiles,),
        in_specs=[tile_spec, stats_all_spec, gb_spec, w_spec],
        out_specs=[tile_spec, stats_tile_spec],
        out_shape=[act_shape, stats_shape],
        scratch_shapes=[hpad_scratch],
        compiler_params=cparams,
    )(y1, stats1, gb1, w2m)

    # ---- pass 3: bn2 (finalized in-kernel) + residual add + relu ------------
    out_c = pl.pallas_call(
        functools.partial(_bn_residual_relu_kernel, count=cnt),
        grid=(num_tiles,),
        in_specs=[tile_spec, tile_spec, stats_all_spec, gb_spec],
        out_specs=tile_spec,
        out_shape=jax.ShapeDtypeStruct((N, H, W, Cp), x_nchw.dtype),
        compiler_params=cparams,
    )(y2, x_c, stats2, gb2)

    return jnp.transpose(out_c[..., :C], (0, 3, 1, 2))


def resblock_ref(x, params):
    """Pure-JAX reference (same semantics as the PyTorch module)."""
    w1, b1, g1, be1, w2, b2, g2, be2 = params

    def conv(h, w, b):
        y = jax.lax.conv_general_dilated(
            h, w, window_strides=(1, 1), padding=((1, 1), (1, 1)),
            dimension_numbers=('NCHW', 'OIHW', 'NCHW'),
            precision=jax.lax.Precision.HIGHEST)
        return y + b[None, :, None, None]

    def bn(h, g, be):
        m = h.mean(axis=(0, 2, 3), keepdims=True)
        v = ((h - m) ** 2).mean(axis=(0, 2, 3), keepdims=True)
        return ((h - m) * jax.lax.rsqrt(v + _EPS) * g[None, :, None, None]
                + be[None, :, None, None])

    h = jax.nn.relu(bn(conv(x, w1, b1), g1, be1))
    h = bn(conv(h, w2, b2), g2, be2)
    return jax.nn.relu(h + x)


if __name__ == "__main__":
    N, C, H, W = 2, 4, 16, 16          # num_hidden = 4
    key = jax.random.PRNGKey(0)
    k = jax.random.split(key, 5)

    x = jax.random.normal(k[0], (N, C, H, W), jnp.float32)

    # Deterministic synthetic parameters (shapes from ResBlock.__init__).
    w1 = jax.random.normal(k[1], (C, C, 3, 3), jnp.float32) * 0.1
    b1 = jax.random.normal(k[2], (C,), jnp.float32) * 0.1
    w2 = jax.random.normal(k[3], (C, C, 3, 3), jnp.float32) * 0.1
    b2 = jax.random.normal(k[4], (C,), jnp.float32) * 0.1
    g1 = jnp.ones((C,), jnp.float32)    # BatchNorm2d default gamma
    be1 = jnp.zeros((C,), jnp.float32)  # BatchNorm2d default beta
    g2 = jnp.ones((C,), jnp.float32)
    be2 = jnp.zeros((C,), jnp.float32)
    params = (w1, b1, g1, be1, w2, b2, g2, be2)

    out = jax.block_until_ready(resblock_pallas(x, params))
    ref = jax.block_until_ready(resblock_ref(x, params))

    assert out.shape == x.shape and out.dtype == x.dtype
    # bf16 MXU operands + bf16 inter-pass activations -> looser tolerance than
    # the pure-f32 version (BN stats are still accumulated in f32).
    max_err = float(jnp.max(jnp.abs(out - ref)))
    assert max_err < 1e-1, f"mismatch vs reference, max abs err = {max_err}"
    print("KERNEL_OK")
</pallas_src>

<mosaic_0001>
module attributes {stable_mosaic.version = 11 : i64} {
  func.func @_bn_residual_relu_kernel(%arg0: i32, %arg1: memref<1x16x16x128xbf16, #tpu.memory_space<vmem>>, %arg2: memref<1x16x16x128xf32, #tpu.memory_space<vmem>>, %arg3: memref<2x2x128xf32, #tpu.memory_space<vmem>>, %arg4: memref<2x128xf32, #tpu.memory_space<vmem>>, %arg5: memref<1x16x16x128xf32, #tpu.memory_space<vmem>>) attributes {dimension_semantics = [#tpu.dimension_semantics<parallel>], iteration_bounds = array<i64: 2>, scalar_prefetch = 0 : i64, scratch_operands = 0 : i64, tpu.core_type = #tpu.core_type<tc>, window_params = [{transform_indices = @transform_0, window_bounds = array<i64: 1, 16, 16, 128>}, {transform_indices = @transform_1, window_bounds = array<i64: 1, 16, 16, 128>}, {pipeline_mode = #tpu.pipeline_mode<synchronous>, transform_indices = @transform_2, window_bounds = array<i64: 2, 2, 128>}, {pipeline_mode = #tpu.pipeline_mode<synchronous>, transform_indices = @transform_3, window_bounds = array<i64: 2, 128>}, {transform_indices = @transform_4, window_bounds = array<i64: 1, 16, 16, 128>}]} {
    %c0 = arith.constant 0 : index
    %c0_0 = arith.constant 0 : index
    %c0_1 = arith.constant 0 : index
    %0 = vector.load %arg3[%c0, %c0_0, %c0_1] : memref<2x2x128xf32, #tpu.memory_space<vmem>>, vector<2x2x128xf32>
    %c0_2 = arith.constant 0 : index
    %c0_3 = arith.constant 0 : index
    %1 = vector.load %arg4[%c0_2, %c0_3] : memref<2x128xf32, #tpu.memory_space<vmem>>, vector<2x128xf32>
    %cst = arith.constant dense<0.000000e+00> : vector<2x128xf32>
    %2 = vector.multi_reduction <add>, %0, %cst [0] : vector<2x2x128xf32> to vector<2x128xf32>
    %3 = vector.extract_strided_slice %2 {offsets = [0, 0], sizes = [1, 128], strides = [1, 1]} : vector<2x128xf32> to vector<1x128xf32>
    %cst_4 = arith.constant 5.120000e+02 : f32
    %4 = vector.broadcast %cst_4 : f32 to vector<1x128xf32>
    %5 = arith.divf %3, %4 : vector<1x128xf32>
    %6 = vector.extract_strided_slice %2 {offsets = [1, 0], sizes = [1, 128], strides = [1, 1]} : vector<2x128xf32> to vector<1x128xf32>
    %cst_5 = arith.constant 5.120000e+02 : f32
    %7 = vector.broadcast %cst_5 : f32 to vector<1x128xf32>
    %8 = arith.divf %6, %7 : vector<1x128xf32>
    %9 = arith.mulf %5, %5 : vector<1x128xf32>
    %10 = arith.subf %8, %9 : vector<1x128xf32>
    %cst_6 = arith.constant 0.000000e+00 : f32
    %11 = vector.broadcast %cst_6 : f32 to vector<1x128xf32>
    %12 = arith.maximumf %10, %11 : vector<1x128xf32>
    %13 = vector.extract_strided_slice %1 {offsets = [0, 0], sizes = [1, 128], strides = [1, 1]} : vector<2x128xf32> to vector<1x128xf32>
    %cst_7 = arith.constant 9.99999974E-6 : f32
    %14 = vector.broadcast %cst_7 : f32 to vector<1x128xf32>
    %15 = arith.addf %12, %14 : vector<1x128xf32>
    %16 = math.rsqrt %15 : vector<1x128xf32>
    %17 = arith.mulf %13, %16 : vector<1x128xf32>
    %18 = vector.extract_strided_slice %1 {offsets = [1, 0], sizes = [1, 128], strides = [1, 1]} : vector<2x128xf32> to vector<1x128xf32>
    %19 = arith.mulf %5, %17 : vector<1x128xf32>
    %20 = arith.subf %18, %19 : vector<1x128xf32>
    %c0_8 = arith.constant 0 : index
    %c0_9 = arith.constant 0 : index
    %c0_10 = arith.constant 0 : index
    %c0_11 = arith.constant 0 : index
    %21 = vector.load %arg1[%c0_8, %c0_9, %c0_10, %c0_11] : memref<1x16x16x128xbf16, #tpu.memory_space<vmem>>, vector<1x16x16x128xbf16>
    %22 = arith.extf %21 : vector<1x16x16x128xbf16> to vector<1x16x16x128xf32>
    %23 = vector.shape_cast %17 : vector<1x128xf32> to vector<1x1x1x128xf32>
    %24 = vector.broadcast %23 : vector<1x1x1x128xf32> to vector<1x16x16x128xf32>
    %25 = arith.mulf %22, %24 : vector<1x16x16x128xf32>
    %26 = vector.shape_cast %20 : vector<1x128xf32> to vector<1x1x1x128xf32>
    %27 = vector.broadcast %26 : vector<1x1x1x128xf32> to vector<1x16x16x128xf32>
    %28 = arith.addf %25, %27 : vector<1x16x16x128xf32>
    %c0_12 = arith.constant 0 : index
    %c0_13 = arith.constant 0 : index
    %c0_14 = arith.constant 0 : index
    %c0_15 = arith.constant 0 : index
    %29 = vector.load %arg2[%c0_12, %c0_13, %c0_14, %c0_15] : memref<1x16x16x128xf32, #tpu.memory_space<vmem>>, vector<1x16x16x128xf32>
    %30 = arith.addf %28, %29 : vector<1x16x16x128xf32>
    %cst_16 = arith.constant 0.000000e+00 : f32
    %31 = vector.broadcast %cst_16 : f32 to vector<1x16x16x128xf32>
    %32 = arith.maximumf %30, %31 : vector<1x16x16x128xf32>
    %c0_17 = arith.constant 0 : index
    %c0_18 = arith.constant 0 : index
    %c0_19 = arith.constant 0 : index
    %c0_20 = arith.constant 0 : index
    %33 = vector.load %arg5[%c0_17, %c0_18, %c0_19, %c0_20] : memref<1x16x16x128xf32, #tpu.memory_space<vmem>>, vector<1x16x16x128xf32>
    tpu.vector_store %arg5[%c0_17, %c0_18, %c0_19, %c0_20], %32 {strides = array<i32>} : memref<1x16x16x128xf32, #tpu.memory_space<vmem>>, vector<1x16x16x128xf32>,
    return
  }
  func.func @transform_0(%arg0: i32) -> (i32, i32, i32, i32) {
    %c0_i32 = arith.constant 0 : i32
    %c0_i32_0 = arith.constant 0 : i32
    %c0_i32_1 = arith.constant 0 : i32
    %c0_i32_2 = arith.constant 0 : i32
    return %arg0, %c0_i32, %c0_i32_0, %c0_i32_1 : i32, i32, i32, i32
  }
  func.func @transform_1(%arg0: i32) -> (i32, i32, i32, i32) {
    %c0_i32 = arith.constant 0 : i32
    %c0_i32_0 = arith.constant 0 : i32
    %c0_i32_1 = arith.constant 0 : i32
    %c0_i32_2 = arith.constant 0 : i32
    return %arg0, %c0_i32, %c0_i32_0, %c0_i32_1 : i32, i32, i32, i32
  }
  func.func @transform_2(%arg0: i32) -> (i32, i32, i32) {
    %c0_i32 = arith.constant 0 : i32
    %c0_i32_0 = arith.constant 0 : i32
    %c0_i32_1 = arith.constant 0 : i32
    %c0_i32_2 = arith.constant 0 : i32
    return %c0_i32, %c0_i32_0, %c0_i32_1 : i32, i32, i32
  }
  func.func @transform_3(%arg0: i32) -> (i32, i32) {
    %c0_i32 = arith.constant 0 : i32
    %c0_i32_0 = arith.constant 0 : i32
    %c0_i32_1 = arith.constant 0 : i32
    return %c0_i32, %c0_i32_0 : i32, i32
  }
  func.func @transform_4(%arg0: i32) -> (i32, i32, i32, i32) {
    %c0_i32 = arith.constant 0 : i32
    %c0_i32_0 = arith.constant 0 : i32
    %c0_i32_1 = arith.constant 0 : i32
    %c0_i32_2 = arith.constant 0 : i32
    return %arg0, %c0_i32, %c0_i32_0, %c0_i32_1 : i32, i32, i32, i32
  }
}

module attributes {stable_mosaic.version = 11 : i64} {
  func.func @_bn_relu_conv2_kernel(%arg0: i32, %arg1: memref<1x16x16x128xbf16, #tpu.memory_space<vmem>>, %arg2: memref<2x2x128xf32, #tpu.memory_space<vmem>>, %arg3: memref<2x128xf32, #tpu.memory_space<vmem>>, %arg4: memref<1152x128xbf16, #tpu.memory_space<vmem>>, %arg5: memref<1x16x16x128xbf16, #tpu.memory_space<vmem>>, %arg6: memref<1x2x128xf32, #tpu.memory_space<vmem>>, %arg7: memref<1x18x24x128xf32, #tpu.memory_space<vmem>>) attributes {dimension_semantics = [#tpu.dimension_semantics<parallel>], iteration_bounds = array<i64: 2>, scalar_prefetch = 0 : i64, scratch_operands = 1 : i64, tpu.core_type = #tpu.core_type<tc>, window_params = [{transform_indices = @transform_0, window_bounds = array<i64: 1, 16, 16, 128>}, {pipeline_mode = #tpu.pipeline_mode<synchronous>, transform_indices = @transform_1, window_bounds = array<i64: 2, 2, 128>}, {pipeline_mode = #tpu.pipeline_mode<synchronous>, transform_indices = @transform_2, window_bounds = array<i64: 2, 128>}, {pipeline_mode = #tpu.pipeline_mode<synchronous>, transform_indices = @transform_3, window_bounds = array<i64: 1152, 128>}, {transform_indices = @transform_4, window_bounds = array<i64: 1, 16, 16, 128>}, {transform_indices = @transform_5, window_bounds = array<i64: 1, 2, 128>}]} {
    %c0 = arith.constant 0 : index
    %c0_0 = arith.constant 0 : index
    %c0_1 = arith.constant 0 : index
    %0 = vector.load %arg2[%c0, %c0_0, %c0_1] : memref<2x2x128xf32, #tpu.memory_space<vmem>>, vector<2x2x128xf32>
    %c0_2 = arith.constant 0 : index
    %c0_3 = arith.constant 0 : index
    %1 = vector.load %arg3[%c0_2, %c0_3] : memref<2x128xf32, #tpu.memory_space<vmem>>, vector<2x128xf32>
    %cst = arith.constant dense<0.000000e+00> : vector<2x128xf32>
    %2 = vector.multi_reduction <add>, %0, %cst [0] : vector<2x2x128xf32> to vector<2x128xf32>
    %3 = vector.extract_strided_slice %2 {offsets = [0, 0], sizes = [1, 128], strides = [1, 1]} : vector<2x128xf32> to vector<1x128xf32>
    %cst_4 = arith.constant 5.120000e+02 : f32
    %4 = vector.broadcast %cst_4 : f32 to vector<1x128xf32>
    %5 = arith.divf %3, %4 : vector<1x128xf32>
    %6 = vector.extract_strided_slice %2 {offsets = [1, 0], sizes = [1, 128], strides = [1, 1]} : vector<2x128xf32> to vector<1x128xf32>
    %cst_5 = arith.constant 5.120000e+02 : f32
    %7 = vector.broadcast %cst_5 : f32 to vector<1x128xf32>
    %8 = arith.divf %6, %7 : vector<1x128xf32>
    %9 = arith.mulf %5, %5 : vector<1x128xf32>
    %10 = arith.subf %8, %9 : vector<1x128xf32>
    %cst_6 = arith.constant 0.000000e+00 : f32
    %11 = vector.broadcast %cst_6 : f32 to vector<1x128xf32>
    %12 = arith.maximumf %10, %11 : vector<1x128xf32>
    %13 = vector.extract_strided_slice %1 {offsets = [0, 0], sizes = [1, 128], strides = [1, 1]} : vector<2x128xf32> to vector<1x128xf32>
    %cst_7 = arith.constant 9.99999974E-6 : f32
    %14 = vector.broadcast %cst_7 : f32 to vector<1x128xf32>
    %15 = arith.addf %12, %14 : vector<1x128xf32>
    %16 = math.rsqrt %15 : vector<1x128xf32>
    %17 = arith.mulf %13, %16 : vector<1x128xf32>
    %18 = vector.extract_strided_slice %1 {offsets = [1, 0], sizes = [1, 128], strides = [1, 1]} : vector<2x128xf32> to vector<1x128xf32>
    %19 = arith.mulf %5, %17 : vector<1x128xf32>
    %20 = arith.subf %18, %19 : vector<1x128xf32>
    %c0_8 = arith.constant 0 : index
    %c0_9 = arith.constant 0 : index
    %c0_10 = arith.constant 0 : index
    %c0_11 = arith.constant 0 : index
    %21 = vector.load %arg1[%c0_8, %c0_9, %c0_10, %c0_11] : memref<1x16x16x128xbf16, #tpu.memory_space<vmem>>, vector<1x16x16x128xbf16>
    %22 = arith.extf %21 : vector<1x16x16x128xbf16> to vector<1x16x16x128xf32>
    %23 = vector.shape_cast %17 : vector<1x128xf32> to vector<1x1x1x128xf32>
    %24 = vector.broadcast %23 : vector<1x1x1x128xf32> to vector<1x16x16x128xf32>
    %25 = arith.mulf %22, %24 : vector<1x16x16x128xf32>
    %26 = vector.shape_cast %20 : vector<1x128xf32> to vector<1x1x1x128xf32>
    %27 = vector.broadcast %26 : vector<1x1x1x128xf32> to vector<1x16x16x128xf32>
    %28 = arith.addf %25, %27 : vector<1x16x16x128xf32>
    %cst_12 = arith.constant 0.000000e+00 : f32
    %29 = vector.broadcast %cst_12 : f32 to vector<1x16x16x128xf32>
    %30 = arith.maximumf %28, %29 : vector<1x16x16x128xf32>
    %cst_13 = arith.constant 0.000000e+00 : f32
    %31 = vector.broadcast %cst_13 : f32 to vector<1x1x24x128xf32>
    %c0_14 = arith.constant 0 : index
    %c0_15 = arith.constant 0 : index
    %c0_16 = arith.constant 0 : index
    %c0_17 = arith.constant 0 : index
    %32 = vector.load %arg7[%c0_14, %c0_15, %c0_16, %c0_17] : memref<1x18x24x128xf32, #tpu.memory_space<vmem>>, vector<1x1x24x128xf32>
    tpu.vector_store %arg7[%c0_14, %c0_15, %c0_16, %c0_17], %31 {strides = array<i32>} : memref<1x18x24x128xf32, #tpu.memory_space<vmem>>, vector<1x1x24x128xf32>,
    %cst_18 = arith.constant 0.000000e+00 : f32
    %33 = vector.broadcast %cst_18 : f32 to vector<1x1x24x128xf32>
    %c0_19 = arith.constant 0 : index
    %c17 = arith.constant 17 : index
    %c0_20 = arith.constant 0 : index
    %c0_21 = arith.constant 0 : index
    %34 = vector.load %arg7[%c0_19, %c17, %c0_20, %c0_21] : memref<1x18x24x128xf32, #tpu.memory_space<vmem>>, vector<1x1x24x128xf32>
    tpu.vector_store %arg7[%c0_19, %c17, %c0_20, %c0_21], %33 {strides = array<i32>} : memref<1x18x24x128xf32, #tpu.memory_space<vmem>>, vector<1x1x24x128xf32>,
    %cst_22 = arith.constant 0.000000e+00 : f32
    %35 = vector.broadcast %cst_22 : f32 to vector<1x18x1x128xf32>
    %c0_23 = arith.constant 0 : index
    %c0_24 = arith.constant 0 : index
    %c0_25 = arith.constant 0 : index
    %c0_26 = arith.constant 0 : index
    %36 = vector.load %arg7[%c0_23, %c0_24, %c0_25, %c0_26] : memref<1x18x24x128xf32, #tpu.memory_space<vmem>>, vector<1x18x1x128xf32>
    tpu.vector_store %arg7[%c0_23, %c0_24, %c0_25, %c0_26], %35 {strides = array<i32>} : memref<1x18x24x128xf32, #tpu.memory_space<vmem>>, vector<1x18x1x128xf32>,
    %cst_27 = arith.constant 0.000000e+00 : f32
    %37 = vector.broadcast %cst_27 : f32 to vector<1x18x7x128xf32>
    %c0_28 = arith.constant 0 : index
    %c0_29 = arith.constant 0 : index
    %c17_30 = arith.constant 17 : index
    %c0_31 = arith.constant 0 : index
    %38 = vector.load %arg7[%c0_28, %c0_29, %c17_30, %c0_31] : memref<1x18x24x128xf32, #tpu.memory_space<vmem>>, vector<1x18x7x128xf32>
    tpu.vector_store %arg7[%c0_28, %c0_29, %c17_30, %c0_31], %37 {strides = array<i32>} : memref<1x18x24x128xf32, #tpu.memory_space<vmem>>, vector<1x18x7x128xf32>,
    %c0_32 = arith.constant 0 : index
    %c1 = arith.constant 1 : index
    %c1_33 = arith.constant 1 : index
    %c0_34 = arith.constant 0 : index
    %39 = vector.load %arg7[%c0_32, %c1, %c1_33, %c0_34] : memref<1x18x24x128xf32, #tpu.memory_space<vmem>>, vector<1x16x16x128xf32>
    tpu.vector_store %arg7[%c0_32, %c1, %c1_33, %c0_34], %30 {strides = array<i32>} : memref<1x18x24x128xf32, #tpu.memory_space<vmem>>, vector<1x16x16x128xf32>,
    %c0_35 = arith.constant 0 : index
    %c0_36 = arith.constant 0 : index
    %c0_37 = arith.constant 0 : index
    %c0_38 = arith.constant 0 : index
    %40 = vector.load %arg7[%c0_35, %c0_36, %c0_37, %c0_38] : memref<1x18x24x128xf32, #tpu.memory_space<vmem>>, vector<1x18x16x128xf32>
    %c0_39 = arith.constant 0 : index
    %c0_40 = arith.constant 0 : index
    %c1_41 = arith.constant 1 : index
    %c0_42 = arith.constant 0 : index
    %41 = vector.load %arg7[%c0_39, %c0_40, %c1_41, %c0_42] : memref<1x18x24x128xf32, #tpu.memory_space<vmem>>, vector<1x18x16x128xf32>
    %c0_43 = arith.constant 0 : index
    %c0_44 = arith.constant 0 : index
    %c2 = arith.constant 2 : index
    %c0_45 = arith.constant 0 : index
    %42 = vector.load %arg7[%c0_43, %c0_44, %c2, %c0_45] : memref<1x18x24x128xf32, #tpu.memory_space<vmem>>, vector<1x18x16x128xf32>
    %43 = vector.extract_strided_slice %40 {offsets = [0, 0, 0, 0], sizes = [1, 16, 16, 128], strides = [1, 1, 1, 1]} : vector<1x18x16x128xf32> to vector<1x16x16x128xf32>
    %44 = vector.shape_cast %43 : vector<1x16x16x128xf32> to vector<256x128xf32>
    %45 = arith.truncf %44 : vector<256x128xf32> to vector<256x128xbf16>
    %46 = vector.extract_strided_slice %41 {offsets = [0, 0, 0, 0], sizes = [1, 16, 16, 128], strides = [1, 1, 1, 1]} : vector<1x18x16x128xf32> to vector<1x16x16x128xf32>
    %47 = vector.shape_cast %46 : vector<1x16x16x128xf32> to vector<256x128xf32>
    %48 = arith.truncf %47 : vector<256x128xf32> to vector<256x128xbf16>
    %49 = vector.extract_strided_slice %42 {offsets = [0, 0, 0, 0], sizes = [1, 16, 16, 128], strides = [1, 1, 1, 1]} : vector<1x18x16x128xf32> to vector<1x16x16x128xf32>
    %50 = vector.shape_cast %49 : vector<1x16x16x128xf32> to vector<256x128xf32>
    %51 = arith.truncf %50 : vector<256x128xf32> to vector<256x128xbf16>
    %52 = vector.extract_strided_slice %40 {offsets = [0, 1, 0, 0], sizes = [1, 16, 16, 128], strides = [1, 1, 1, 1]} : vector<1x18x16x128xf32> to vector<1x16x16x128xf32>
    %53 = vector.shape_cast %52 : vector<1x16x16x128xf32> to vector<256x128xf32>
    %54 = arith.truncf %53 : vector<256x128xf32> to vector<256x128xbf16>
    %55 = vector.extract_strided_slice %41 {offsets = [0, 1, 0, 0], sizes = [1, 16, 16, 128], strides = [1, 1, 1, 1]} : vector<1x18x16x128xf32> to vector<1x16x16x128xf32>
    %56 = vector.shape_cast %55 : vector<1x16x16x128xf32> to vector<256x128xf32>
    %57 = arith.truncf %56 : vector<256x128xf32> to vector<256x128xbf16>
    %58 = vector.extract_strided_slice %42 {offsets = [0, 1, 0, 0], sizes = [1, 16, 16, 128], strides = [1, 1, 1, 1]} : vector<1x18x16x128xf32> to vector<1x16x16x128xf32>
    %59 = vector.shape_cast %58 : vector<1x16x16x128xf32> to vector<256x128xf32>
    %60 = arith.truncf %59 : vector<256x128xf32> to vector<256x128xbf16>
    %61 = vector.extract_strided_slice %40 {offsets = [0, 2, 0, 0], sizes = [1, 16, 16, 128], strides = [1, 1, 1, 1]} : vector<1x18x16x128xf32> to vector<1x16x16x128xf32>
    %62 = vector.shape_cast %61 : vector<1x16x16x128xf32> to vector<256x128xf32>
    %63 = arith.truncf %62 : vector<256x128xf32> to vector<256x128xbf16>
    %64 = vector.extract_strided_slice %41 {offsets = [0, 2, 0, 0], sizes = [1, 16, 16, 128], strides = [1, 1, 1, 1]} : vector<1x18x16x128xf32> to vector<1x16x16x128xf32>
    %65 = vector.shape_cast %64 : vector<1x16x16x128xf32> to vector<256x128xf32>
    %66 = arith.truncf %65 : vector<256x128xf32> to vector<256x128xbf16>
    %67 = vector.extract_strided_slice %42 {offsets = [0, 2, 0, 0], sizes = [1, 16, 16, 128], strides = [1, 1, 1, 1]} : vector<1x18x16x128xf32> to vector<1x16x16x128xf32>
    %68 = vector.shape_cast %67 : vector<1x16x16x128xf32> to vector<256x128xf32>
    %69 = arith.truncf %68 : vector<256x128xf32> to vector<256x128xbf16>
    %70 = tpu.concatenate %45, %48, %51, %54, %57, %60, %63, %66, %69 in 1 : vector<256x128xbf16>, vector<256x128xbf16>, vector<256x128xbf16>, vector<256x128xbf16>, vector<256x128xbf16>, vector<256x128xbf16>, vector<256x128xbf16>, vector<256x128xbf16>, vector<256x128xbf16> -> vector<256x1152xbf16>
    %c0_46 = arith.constant 0 : index
    %c0_47 = arith.constant 0 : index
    %71 = vector.load %arg4[%c0_46, %c0_47] : memref<1152x128xbf16, #tpu.memory_space<vmem>>, vector<1152x128xbf16>
    %cst_48 = arith.constant dense<0.000000e+00> : vector<256x128xf32>
    %72 = tpu.matmul %70, %71, %cst_48 {dimension_numbers = #tpu.dot_dimension_numbers<[1], [0], [0], [1], [0, 0, 1, 1], [], []>} : vector<256x1152xbf16>, vector<1152x128xbf16>, vector<256x128xf32> -> vector<256x128xf32>
    %73 = arith.truncf %72 : vector<256x128xf32> to vector<256x128xbf16>
    %74 = vector.shape_cast %73 : vector<256x128xbf16> to vector<1x16x16x128xbf16>
    %c0_49 = arith.constant 0 : index
    %c0_50 = arith.constant 0 : index
    %c0_51 = arith.constant 0 : index
    %c0_52 = arith.constant 0 : index
    %75 = vector.load %arg5[%c0_49, %c0_50, %c0_51, %c0_52] : memref<1x16x16x128xbf16, #tpu.memory_space<vmem>>, vector<1x16x16x128xbf16>
    tpu.vector_store %arg5[%c0_49, %c0_50, %c0_51, %c0_52], %74 {strides = array<i32>} : memref<1x16x16x128xbf16, #tpu.memory_space<vmem>>, vector<1x16x16x128xbf16>,
    %cst_53 = arith.constant dense<0.000000e+00> : vector<128xf32>
    %76 = vector.multi_reduction <add>, %72, %cst_53 [0] : vector<256x128xf32> to vector<128xf32>
    %77 = vector.shape_cast %76 : vector<128xf32> to vector<1x128xf32>
    %78 = arith.mulf %72, %72 : vector<256x128xf32>
    %cst_54 = arith.constant dense<0.000000e+00> : vector<128xf32>
    %79 = vector.multi_reduction <add>, %78, %cst_54 [0] : vector<256x128xf32> to vector<128xf32>
    %80 = vector.shape_cast %79 : vector<128xf32> to vector<1x128xf32>
    %81 = tpu.concatenate %77, %80 in 0 : vector<1x128xf32>, vector<1x128xf32> -> vector<2x128xf32>
    %82 = vector.shape_cast %81 : vector<2x128xf32> to vector<1x2x128xf32>
    %c0_55 = arith.constant 0 : index
    %c0_56 = arith.constant 0 : index
    %c0_57 = arith.constant 0 : index
    %83 = vector.load %arg6[%c0_55, %c0_56, %c0_57] : memref<1x2x128xf32, #tpu.memory_space<vmem>>, vector<1x2x128xf32>
    tpu.vector_store %arg6[%c0_55, %c0_56, %c0_57], %82 {strides = array<i32>} : memref<1x2x128xf32, #tpu.memory_space<vmem>>, vector<1x2x128xf32>,
    return
  }
  func.func @transform_0(%arg0: i32) -> (i32, i32, i32, i32) {
    %c0_i32 = arith.constant 0 : i32
    %c0_i32_0 = arith.constant 0 : i32
    %c0_i32_1 = arith.constant 0 : i32
    %c0_i32_2 = arith.constant 0 : i32
    return %arg0, %c0_i32, %c0_i32_0, %c0_i32_1 : i32, i32, i32, i32
  }
  func.func @transform_1(%arg0: i32) -> (i32, i32, i32) {
    %c0_i32 = arith.constant 0 : i32
    %c0_i32_0 = arith.constant 0 : i32
    %c0_i32_1 = arith.constant 0 : i32
    %c0_i32_2 = arith.constant 0 : i32
    return %c0_i32, %c0_i32_0, %c0_i32_1 : i32, i32, i32
  }
  func.func @transform_2(%arg0: i32) -> (i32, i32) {
    %c0_i32 = arith.constant 0 : i32
    %c0_i32_0 = arith.constant 0 : i32
    %c0_i32_1 = arith.constant 0 : i32
    return %c0_i32, %c0_i32_0 : i32, i32
  }
  func.func @transform_3(%arg0: i32) -> (i32, i32) {
    %c0_i32 = arith.constant 0 : i32
    %c0_i32_0 = arith.constant 0 : i32
    %c0_i32_1 = arith.constant 0 : i32
    return %c0_i32, %c0_i32_0 : i32, i32
  }
  func.func @transform_4(%arg0: i32) -> (i32, i32, i32, i32) {
    %c0_i32 = arith.constant 0 : i32
    %c0_i32_0 = arith.constant 0 : i32
    %c0_i32_1 = arith.constant 0 : i32
    %c0_i32_2 = arith.constant 0 : i32
    return %arg0, %c0_i32, %c0_i32_0, %c0_i32_1 : i32, i32, i32, i32
  }
  func.func @transform_5(%arg0: i32) -> (i32, i32, i32) {
    %c0_i32 = arith.constant 0 : i32
    %c0_i32_0 = arith.constant 0 : i32
    %c0_i32_1 = arith.constant 0 : i32
    return %arg0, %c0_i32, %c0_i32_0 : i32, i32, i32
  }
}

module attributes {stable_mosaic.version = 11 : i64} {
  func.func @_conv1_kernel(%arg0: i32, %arg1: memref<1x16x16x128xf32, #tpu.memory_space<vmem>>, %arg2: memref<1152x128xbf16, #tpu.memory_space<vmem>>, %arg3: memref<1x16x16x128xbf16, #tpu.memory_space<vmem>>, %arg4: memref<1x2x128xf32, #tpu.memory_space<vmem>>, %arg5: memref<1x18x24x128xf32, #tpu.memory_space<vmem>>) attributes {dimension_semantics = [#tpu.dimension_semantics<parallel>], iteration_bounds = array<i64: 2>, scalar_prefetch = 0 : i64, scratch_operands = 1 : i64, tpu.core_type = #tpu.core_type<tc>, window_params = [{transform_indices = @transform_0, window_bounds = array<i64: 1, 16, 16, 128>}, {pipeline_mode = #tpu.pipeline_mode<synchronous>, transform_indices = @transform_1, window_bounds = array<i64: 1152, 128>}, {transform_indices = @transform_2, window_bounds = array<i64: 1, 16, 16, 128>}, {transform_indices = @transform_3, window_bounds = array<i64: 1, 2, 128>}]} {
    %c0 = arith.constant 0 : index
    %c0_0 = arith.constant 0 : index
    %c0_1 = arith.constant 0 : index
    %c0_2 = arith.constant 0 : index
    %0 = vector.load %arg1[%c0, %c0_0, %c0_1, %c0_2] : memref<1x16x16x128xf32, #tpu.memory_space<vmem>>, vector<1x16x16x128xf32>
    %cst = arith.constant 0.000000e+00 : f32
    %1 = vector.broadcast %cst : f32 to vector<1x1x24x128xf32>
    %c0_3 = arith.constant 0 : index
    %c0_4 = arith.constant 0 : index
    %c0_5 = arith.constant 0 : index
    %c0_6 = arith.constant 0 : index
    %2 = vector.load %arg5[%c0_3, %c0_4, %c0_5, %c0_6] : memref<1x18x24x128xf32, #tpu.memory_space<vmem>>, vector<1x1x24x128xf32>
    tpu.vector_store %arg5[%c0_3, %c0_4, %c0_5, %c0_6], %1 {strides = array<i32>} : memref<1x18x24x128xf32, #tpu.memory_space<vmem>>, vector<1x1x24x128xf32>,
    %cst_7 = arith.constant 0.000000e+00 : f32
    %3 = vector.broadcast %cst_7 : f32 to vector<1x1x24x128xf32>
    %c0_8 = arith.constant 0 : index
    %c17 = arith.constant 17 : index
    %c0_9 = arith.constant 0 : index
    %c0_10 = arith.constant 0 : index
    %4 = vector.load %arg5[%c0_8, %c17, %c0_9, %c0_10] : memref<1x18x24x128xf32, #tpu.memory_space<vmem>>, vector<1x1x24x128xf32>
    tpu.vector_store %arg5[%c0_8, %c17, %c0_9, %c0_10], %3 {strides = array<i32>} : memref<1x18x24x128xf32, #tpu.memory_space<vmem>>, vector<1x1x24x128xf32>,
    %cst_11 = arith.constant 0.000000e+00 : f32
    %5 = vector.broadcast %cst_11 : f32 to vector<1x18x1x128xf32>
    %c0_12 = arith.constant 0 : index
    %c0_13 = arith.constant 0 : index
    %c0_14 = arith.constant 0 : index
    %c0_15 = arith.constant 0 : index
    %6 = vector.load %arg5[%c0_12, %c0_13, %c0_14, %c0_15] : memref<1x18x24x128xf32, #tpu.memory_space<vmem>>, vector<1x18x1x128xf32>
    tpu.vector_store %arg5[%c0_12, %c0_13, %c0_14, %c0_15], %5 {strides = array<i32>} : memref<1x18x24x128xf32, #tpu.memory_space<vmem>>, vector<1x18x1x128xf32>,
    %cst_16 = arith.constant 0.000000e+00 : f32
    %7 = vector.broadcast %cst_16 : f32 to vector<1x18x7x128xf32>
    %c0_17 = arith.constant 0 : index
    %c0_18 = arith.constant 0 : index
    %c17_19 = arith.constant 17 : index
    %c0_20 = arith.constant 0 : index
    %8 = vector.load %arg5[%c0_17, %c0_18, %c17_19, %c0_20] : memref<1x18x24x128xf32, #tpu.memory_space<vmem>>, vector<1x18x7x128xf32>
    tpu.vector_store %arg5[%c0_17, %c0_18, %c17_19, %c0_20], %7 {strides = array<i32>} : memref<1x18x24x128xf32, #tpu.memory_space<vmem>>, vector<1x18x7x128xf32>,
    %c0_21 = arith.constant 0 : index
    %c1 = arith.constant 1 : index
    %c1_22 = arith.constant 1 : index
    %c0_23 = arith.constant 0 : index
    %9 = vector.load %arg5[%c0_21, %c1, %c1_22, %c0_23] : memref<1x18x24x128xf32, #tpu.memory_space<vmem>>, vector<1x16x16x128xf32>
    tpu.vector_store %arg5[%c0_21, %c1, %c1_22, %c0_23], %0 {strides = array<i32>} : memref<1x18x24x128xf32, #tpu.memory_space<vmem>>, vector<1x16x16x128xf32>,
    %c0_24 = arith.constant 0 : index
    %c0_25 = arith.constant 0 : index
    %c0_26 = arith.constant 0 : index
    %c0_27 = arith.constant 0 : index
    %10 = vector.load %arg5[%c0_24, %c0_25, %c0_26, %c0_27] : memref<1x18x24x128xf32, #tpu.memory_space<vmem>>, vector<1x18x16x128xf32>
    %c0_28 = arith.constant 0 : index
    %c0_29 = arith.constant 0 : index
    %c1_30 = arith.constant 1 : index
    %c0_31 = arith.constant 0 : index
    %11 = vector.load %arg5[%c0_28, %c0_29, %c1_30, %c0_31] : memref<1x18x24x128xf32, #tpu.memory_space<vmem>>, vector<1x18x16x128xf32>
    %c0_32 = arith.constant 0 : index
    %c0_33 = arith.constant 0 : index
    %c2 = arith.constant 2 : index
    %c0_34 = arith.constant 0 : index
    %12 = vector.load %arg5[%c0_32, %c0_33, %c2, %c0_34] : memref<1x18x24x128xf32, #tpu.memory_space<vmem>>, vector<1x18x16x128xf32>
    %13 = vector.extract_strided_slice %10 {offsets = [0, 0, 0, 0], sizes = [1, 16, 16, 128], strides = [1, 1, 1, 1]} : vector<1x18x16x128xf32> to vector<1x16x16x128xf32>
    %14 = vector.shape_cast %13 : vector<1x16x16x128xf32> to vector<256x128xf32>
    %15 = arith.truncf %14 : vector<256x128xf32> to vector<256x128xbf16>
    %16 = vector.extract_strided_slice %11 {offsets = [0, 0, 0, 0], sizes = [1, 16, 16, 128], strides = [1, 1, 1, 1]} : vector<1x18x16x128xf32> to vector<1x16x16x128xf32>
    %17 = vector.shape_cast %16 : vector<1x16x16x128xf32> to vector<256x128xf32>
    %18 = arith.truncf %17 : vector<256x128xf32> to vector<256x128xbf16>
    %19 = vector.extract_strided_slice %12 {offsets = [0, 0, 0, 0], sizes = [1, 16, 16, 128], strides = [1, 1, 1, 1]} : vector<1x18x16x128xf32> to vector<1x16x16x128xf32>
    %20 = vector.shape_cast %19 : vector<1x16x16x128xf32> to vector<256x128xf32>
    %21 = arith.truncf %20 : vector<256x128xf32> to vector<256x128xbf16>
    %22 = vector.extract_strided_slice %10 {offsets = [0, 1, 0, 0], sizes = [1, 16, 16, 128], strides = [1, 1, 1, 1]} : vector<1x18x16x128xf32> to vector<1x16x16x128xf32>
    %23 = vector.shape_cast %22 : vector<1x16x16x128xf32> to vector<256x128xf32>
    %24 = arith.truncf %23 : vector<256x128xf32> to vector<256x128xbf16>
    %25 = vector.extract_strided_slice %11 {offsets = [0, 1, 0, 0], sizes = [1, 16, 16, 128], strides = [1, 1, 1, 1]} : vector<1x18x16x128xf32> to vector<1x16x16x128xf32>
    %26 = vector.shape_cast %25 : vector<1x16x16x128xf32> to vector<256x128xf32>
    %27 = arith.truncf %26 : vector<256x128xf32> to vector<256x128xbf16>
    %28 = vector.extract_strided_slice %12 {offsets = [0, 1, 0, 0], sizes = [1, 16, 16, 128], strides = [1, 1, 1, 1]} : vector<1x18x16x128xf32> to vector<1x16x16x128xf32>
    %29 = vector.shape_cast %28 : vector<1x16x16x128xf32> to vector<256x128xf32>
    %30 = arith.truncf %29 : vector<256x128xf32> to vector<256x128xbf16>
    %31 = vector.extract_strided_slice %10 {offsets = [0, 2, 0, 0], sizes = [1, 16, 16, 128], strides = [1, 1, 1, 1]} : vector<1x18x16x128xf32> to vector<1x16x16x128xf32>
    %32 = vector.shape_cast %31 : vector<1x16x16x128xf32> to vector<256x128xf32>
    %33 = arith.truncf %32 : vector<256x128xf32> to vector<256x128xbf16>
    %34 = vector.extract_strided_slice %11 {offsets = [0, 2, 0, 0], sizes = [1, 16, 16, 128], strides = [1, 1, 1, 1]} : vector<1x18x16x128xf32> to vector<1x16x16x128xf32>
    %35 = vector.shape_cast %34 : vector<1x16x16x128xf32> to vector<256x128xf32>
    %36 = arith.truncf %35 : vector<256x128xf32> to vector<256x128xbf16>
    %37 = vector.extract_strided_slice %12 {offsets = [0, 2, 0, 0], sizes = [1, 16, 16, 128], strides = [1, 1, 1, 1]} : vector<1x18x16x128xf32> to vector<1x16x16x128xf32>
    %38 = vector.shape_cast %37 : vector<1x16x16x128xf32> to vector<256x128xf32>
    %39 = arith.truncf %38 : vector<256x128xf32> to vector<256x128xbf16>
    %40 = tpu.concatenate %15, %18, %21, %24, %27, %30, %33, %36, %39 in 1 : vector<256x128xbf16>, vector<256x128xbf16>, vector<256x128xbf16>, vector<256x128xbf16>, vector<256x128xbf16>, vector<256x128xbf16>, vector<256x128xbf16>, vector<256x128xbf16>, vector<256x128xbf16> -> vector<256x1152xbf16>
    %c0_35 = arith.constant 0 : index
    %c0_36 = arith.constant 0 : index
    %41 = vector.load %arg2[%c0_35, %c0_36] : memref<1152x128xbf16, #tpu.memory_space<vmem>>, vector<1152x128xbf16>
    %cst_37 = arith.constant dense<0.000000e+00> : vector<256x128xf32>
    %42 = tpu.matmul %40, %41, %cst_37 {dimension_numbers = #tpu.dot_dimension_numbers<[1], [0], [0], [1], [0, 0, 1, 1], [], []>} : vector<256x1152xbf16>, vector<1152x128xbf16>, vector<256x128xf32> -> vector<256x128xf32>
    %43 = arith.truncf %42 : vector<256x128xf32> to vector<256x128xbf16>
    %44 = vector.shape_cast %43 : vector<256x128xbf16> to vector<1x16x16x128xbf16>
    %c0_38 = arith.constant 0 : index
    %c0_39 = arith.constant 0 : index
    %c0_40 = arith.constant 0 : index
    %c0_41 = arith.constant 0 : index
    %45 = vector.load %arg3[%c0_38, %c0_39, %c0_40, %c0_41] : memref<1x16x16x128xbf16, #tpu.memory_space<vmem>>, vector<1x16x16x128xbf16>
    tpu.vector_store %arg3[%c0_38, %c0_39, %c0_40, %c0_41], %44 {strides = array<i32>} : memref<1x16x16x128xbf16, #tpu.memory_space<vmem>>, vector<1x16x16x128xbf16>,
    %cst_42 = arith.constant dense<0.000000e+00> : vector<128xf32>
    %46 = vector.multi_reduction <add>, %42, %cst_42 [0] : vector<256x128xf32> to vector<128xf32>
    %47 = vector.shape_cast %46 : vector<128xf32> to vector<1x128xf32>
    %48 = arith.mulf %42, %42 : vector<256x128xf32>
    %cst_43 = arith.constant dense<0.000000e+00> : vector<128xf32>
    %49 = vector.multi_reduction <add>, %48, %cst_43 [0] : vector<256x128xf32> to vector<128xf32>
    %50 = vector.shape_cast %49 : vector<128xf32> to vector<1x128xf32>
    %51 = tpu.concatenate %47, %50 in 0 : vector<1x128xf32>, vector<1x128xf32> -> vector<2x128xf32>
    %52 = vector.shape_cast %51 : vector<2x128xf32> to vector<1x2x128xf32>
    %c0_44 = arith.constant 0 : index
    %c0_45 = arith.constant 0 : index
    %c0_46 = arith.constant 0 : index
    %53 = vector.load %arg4[%c0_44, %c0_45, %c0_46] : memref<1x2x128xf32, #tpu.memory_space<vmem>>, vector<1x2x128xf32>
    tpu.vector_store %arg4[%c0_44, %c0_45, %c0_46], %52 {strides = array<i32>} : memref<1x2x128xf32, #tpu.memory_space<vmem>>, vector<1x2x128xf32>,
    return
  }
  func.func @transform_0(%arg0: i32) -> (i32, i32, i32, i32) {
    %c0_i32 = arith.constant 0 : i32
    %c0_i32_0 = arith.constant 0 : i32
    %c0_i32_1 = arith.constant 0 : i32
    %c0_i32_2 = arith.constant 0 : i32
    return %arg0, %c0_i32, %c0_i32_0, %c0_i32_1 : i32, i32, i32, i32
  }
  func.func @transform_1(%arg0: i32) -> (i32, i32) {
    %c0_i32 = arith.constant 0 : i32
    %c0_i32_0 = arith.constant 0 : i32
    %c0_i32_1 = arith.constant 0 : i32
    return %c0_i32, %c0_i32_0 : i32, i32
  }
  func.func @transform_2(%arg0: i32) -> (i32, i32, i32, i32) {
    %c0_i32 = arith.constant 0 : i32
    %c0_i32_0 = arith.constant 0 : i32
    %c0_i32_1 = arith.constant 0 : i32
    %c0_i32_2 = arith.constant 0 : i32
    return %arg0, %c0_i32, %c0_i32_0, %c0_i32_1 : i32, i32, i32, i32
  }
  func.func @transform_3(%arg0: i32) -> (i32, i32, i32) {
    %c0_i32 = arith.constant 0 : i32
    %c0_i32_0 = arith.constant 0 : i32
    %c0_i32_1 = arith.constant 0 : i32
    return %arg0, %c0_i32, %c0_i32_0 : i32, i32, i32
  }
}

</mosaic_0001>

<llo_original>
// kernel: resblock_pallas.5
$region0: #{resblock_pallas.5}
  #allocation0 [shape = 'u32[]', space=smem, size = 0x4, offset = 0x4, fixed_abs, tag = 'smem constant byte address 0x4 - core index']
  #allocation1 [shape = 'u32[144,128]{1,0:T(1,128)}', space=vmem, size = 0x12000, scoped, tag = 'internal scratch']
  %s0 = inlined_call_operand.vmem [shape: bf16[2,16,16,128], index: 0, kind: input, shape index: {}]
  %s1 = inlined_call_operand.vmem [shape: f32[2,16,16,128], index: 1, kind: input, shape index: {}]
  %s2 = inlined_call_operand.vmem [shape: f32[2,2,128], index: 2, kind: input, shape index: {}]
  %s3 = inlined_call_operand.vmem [shape: f32[2,128], index: 3, kind: input, shape index: {}]
  %s4 = inlined_call_operand.vmem [shape: f32[2,16,16,128], index: 4, kind: output, shape index: {}]
  %s5 = sld [smem:[#allocation0]]
  $region49: #{resblock_pallas.5} parent=0
    _
  %s7 = ssub.s32 1, %s5
  %s8 = scalar_select 0, %s7, %s5
  loop: start=0, step=1, limit=4
  $region2: #{resblock_pallas.5} parent=0 // loop_pre_header
    _
  $region3: #{resblock_pallas.5} parent=0 // loop_header
    %s10 = sphi 0, %s14
    %p11 = scmp.ge.s32.totalorder %s10, 4
    %s20 = sphi 0, %s22
    %s23 = sphi 0, %s20
    %s24 = sphi 0, %s23
    %s40 = sphi 0, %s24
    %s46 = sphi 0, %s48
    %s49 = sphi 0, %s46
    %s50 = sphi 0, %s49
    %s66 = sphi 0, %s50
    %s70 = sphi 0, %s70
    %s72 = sphi 0, %s70
    %s73 = sphi 0, %s72
    %s87 = sphi 0, %s73
    %s91 = sphi 0, %s91
    %s93 = sphi 0, %s91
    %s94 = sphi 0, %s93
    %s108 = sphi 0, %s94
    %s114 = sphi 0, %s116
    %s117 = sphi 0, %s114
    %s118 = sphi 0, %s117
    %s134 = sphi 0, %s118
  $region4: #{resblock_pallas.5} parent=0 // loop_header_branch
    %13 = sbr.rel (%p11) target = $region8
  $region5: #{resblock_pallas.5} parent=0 // loop_body
    %s15 = ssub.s32 %s10, 1
    %s16 = ssub.s32 %s10, 2
    %s17 = sadd.s32 %s10, 1
    %s18 = ssub.s32 %s10, %s17
    %p19 = scmp.eq.s32.totalorder %s18, 0
    %s21 = sadd.s32 %s20, 1
    %s22 = scalar_select %p19, %s20, %s21
    %p25 = pneg %p19
    %p26 = scmp.eq.s32.totalorder %s10, 1
    %p27 = por %p25, %p26
    %p28 = scmp.ne.s32.totalorder %s20, %s23
    %p29 = scmp.eq.s32.totalorder %s10, 0
    %p30 = por %p28, %p29
    %p31 = scmp.ne.s32.totalorder %s20, %s23
    %p32 = scmp.eq.s32.totalorder %s15, 1
    %p33 = por %p31, %p32
    %p34 = scmp.ne.s32.totalorder %s23, %s24
    %p35 = scmp.eq.s32.totalorder %s15, 0
    %p36 = por %p34, %p35
    %p37 = scmp.ne.s32.totalorder %s23, %s24
    %p38 = scmp.eq.s32.totalorder %s16, 1
    %p39 = por %p37, %p38
    %p41 = scmp.ne.s32.totalorder %s24, %s40
    %p42 = scmp.eq.s32.totalorder %s16, 0
    %p43 = por %p41, %p42
    %s44 = ssub.s32 %s10, %s17
    %p45 = scmp.eq.s32.totalorder %s44, 0
    %s47 = sadd.s32 %s46, 1
    %s48 = scalar_select %p45, %s46, %s47
    %p51 = pneg %p45
    %p52 = scmp.eq.s32.totalorder %s10, 1
    %p53 = por %p51, %p52
    %p54 = scmp.ne.s32.totalorder %s46, %s49
    %p55 = scmp.eq.s32.totalorder %s10, 0
    %p56 = por %p54, %p55
    %p57 = scmp.ne.s32.totalorder %s46, %s49
    %p58 = scmp.eq.s32.totalorder %s15, 1
    %p59 = por %p57, %p58
    %p60 = scmp.ne.s32.totalorder %s49, %s50
    %p61 = scmp.eq.s32.totalorder %s15, 0
    %p62 = por %p60, %p61
    %p63 = scmp.ne.s32.totalorder %s49, %s50
    %p64 = scmp.eq.s32.totalorder %s16, 1
    %p65 = por %p63, %p64
    %p67 = scmp.ne.s32.totalorder %s50, %s66
    %p68 = scmp.eq.s32.totalorder %s16, 0
    %p69 = por %p67, %p68
    %s71 = sadd.s32 %s70, 1
    %p74 = scmp.eq.s32.totalorder %s10, 1
    %p75 = scmp.ne.s32.totalorder %s70, %s72
    %p76 = scmp.eq.s32.totalorder %s10, 0
    %p77 = por %p75, %p76
    %p78 = scmp.ne.s32.totalorder %s70, %s72
    %p79 = scmp.eq.s32.totalorder %s15, 1
    %p80 = por %p78, %p79
    %p81 = scmp.ne.s32.totalorder %s72, %s73
    %p82 = scmp.eq.s32.totalorder %s15, 0
    %p83 = por %p81, %p82
    %p84 = scmp.ne.s32.totalorder %s72, %s73
    %p85 = scmp.eq.s32.totalorder %s16, 1
    %p86 = por %p84, %p85
    %p88 = scmp.ne.s32.totalorder %s73, %s87
    %p89 = scmp.eq.s32.totalorder %s16, 0
    %p90 = por %p88, %p89
    %s92 = sadd.s32 %s91, 1
    %p95 = scmp.eq.s32.totalorder %s10, 1
    %p96 = scmp.ne.s32.totalorder %s91, %s93
    %p97 = scmp.eq.s32.totalorder %s10, 0
    %p98 = por %p96, %p97
    %p99 = scmp.ne.s32.totalorder %s91, %s93
    %p100 = scmp.eq.s32.totalorder %s15, 1
    %p101 = por %p99, %p100
    %p102 = scmp.ne.s32.totalorder %s93, %s94
    %p103 = scmp.eq.s32.totalorder %s15, 0
    %p104 = por %p102, %p103
    %p105 = scmp.ne.s32.totalorder %s93, %s94
    %p106 = scmp.eq.s32.totalorder %s16, 1
    %p107 = por %p105, %p106
    %p109 = scmp.ne.s32.totalorder %s94, %s108
    %p110 = scmp.eq.s32.totalorder %s16, 0
    %p111 = por %p109, %p110
    %s112 = ssub.s32 %s10, %s17
    %p113 = scmp.eq.s32.totalorder %s112, 0
    %s115 = sadd.s32 %s114, 1
    %s116 = scalar_select %p113, %s114, %s115
    %p119 = pneg %p113
    %p120 = scmp.eq.s32.totalorder %s10, 1
    %p121 = por %p119, %p120
    %p122 = scmp.ne.s32.totalorder %s114, %s117
    %p123 = scmp.eq.s32.totalorder %s10, 0
    %p124 = por %p122, %p123
    %p125 = scmp.ne.s32.totalorder %s114, %s117
    %p126 = scmp.eq.s32.totalorder %s15, 1
    %p127 = por %p125, %p126
    %p128 = scmp.ne.s32.totalorder %s117, %s118
    %p129 = scmp.eq.s32.totalorder %s15, 0
    %p130 = por %p128, %p129
    %p131 = scmp.ne.s32.totalorder %s117, %s118
    %p132 = scmp.eq.s32.totalorder %s16, 1
    %p133 = por %p131, %p132
    %p135 = scmp.ne.s32.totalorder %s118, %s134
    %p136 = scmp.eq.s32.totalorder %s16, 0
    %p137 = por %p135, %p136
    %p138 = scmp.le.s32.totalorder 1, %s10
    %p139 = scmp.lt.s32.totalorder %s10, 3
    %p140 = pnand %p138, %p139
    %p141 = pneg %p140
    // Predicated region
    $region9: #{resblock_pallas.5} parent=5 // pred_check
      _
    $region10: #{resblock_pallas.5} parent=5 // pred_check_branch
      %143 = sbr.rel (%p140) target = $region12
    $region11: #{resblock_pallas.5} parent=5 // pred_region
      %s144 = ssub.s32 %s10, 1
      // Predicated region
      $region13: #{resblock_pallas.5} parent=11 // pred_check
        %p145 = pneg %p83
      $region14: #{resblock_pallas.5} parent=11 // pred_check_branch
        %147 = sbr.rel (%p145) target = $region16
      $region15: #{resblock_pallas.5} parent=11 // pred_region
        _
      $region16: #{resblock_pallas.5} parent=11 // pred_fallthru
        _
      // Predicated region
      $region17: #{resblock_pallas.5} parent=11 // pred_check
        %p148 = pneg %p104
      $region18: #{resblock_pallas.5} parent=11 // pred_check_branch
        %150 = sbr.rel (%p148) target = $region20
      $region19: #{resblock_pallas.5} parent=11 // pred_region
        _
      $region20: #{resblock_pallas.5} parent=11 // pred_fallthru
        _
    $region12: #{resblock_pallas.5} parent=5 // pred_fallthru
      _
    %p151 = scmp.lt.s32.totalorder %s10, 2
    // Predicated region
    $region21: #{resblock_pallas.5} parent=5 // pred_check
      %p152 = pneg %p151
    $region22: #{resblock_pallas.5} parent=5 // pred_check_branch
      %154 = sbr.rel (%p152) target = $region24
    $region23: #{resblock_pallas.5} parent=5 // pred_region
      // Predicated region
      $region25: #{resblock_pallas.5} parent=23 // pred_check
        %p155 = pneg %p30
      $region26: #{resblock_pallas.5} parent=23 // pred_check_branch
        %157 = sbr.rel (%p155) target = $region28
      $region27: #{resblock_pallas.5} parent=23 // pred_region
        %p158 = scmp.lt.s32.totalorder %s10, 1
        %s159 = scalar_select %p158, %s10, 1
        %s160 = smul.addr %s159, 32
        %s161 = smul.addr %s160, 4
        %s162 = scalar_lea.vmem %s0, %s161
      $region28: #{resblock_pallas.5} parent=23 // pred_fallthru
        _
      // Predicated region
      $region29: #{resblock_pallas.5} parent=23 // pred_check
        %p163 = pneg %p56
      $region30: #{resblock_pallas.5} parent=23 // pred_check_branch
        %165 = sbr.rel (%p163) target = $region32
      $region31: #{resblock_pallas.5} parent=23 // pred_region
        %p166 = scmp.lt.s32.totalorder %s10, 1
        %s167 = scalar_select %p166, %s10, 1
        %s168 = smul.addr %s167, 32
        %s169 = smul.addr %s168, 8
        %s170 = scalar_lea.vmem %s1, %s169
      $region32: #{resblock_pallas.5} parent=23 // pred_fallthru
        _
    $region24: #{resblock_pallas.5} parent=5 // pred_fallthru
      _
    %p171 = scmp.le.s32.totalorder 1, %s10
    %p172 = scmp.lt.s32.totalorder %s10, 3
    %p173 = pnand %p171, %p172
    %p174 = pneg %p173
    // Predicated region
    $region33: #{resblock_pallas.5} parent=5 // pred_check
      _
    $region34: #{resblock_pallas.5} parent=5 // pred_check_branch
      %176 = sbr.rel (%p173) target = $region36
    $region35: #{resblock_pallas.5} parent=5 // pred_region
      %s177 = ssub.s32 %s10, 1
      %p178 = scmp.lt.s32.totalorder %s15, 1
      %s179 = scalar_select %p178, %s15, 1
      %s180 = smul.addr %s179, 32
      %s181 = smul.addr %s180, 4
      %s182 = scalar_lea.vmem %s0, %s181
      %p183 = pneg %p36
      %p184 = pneg %p33
      %p185 = scmp.lt.s32.totalorder %s15, 1
      %s186 = scalar_select %p185, %s15, 1
      %s187 = smul.addr %s186, 32
      %s188 = smul.addr %s187, 8
      %s189 = scalar_lea.vmem %s1, %s188
      %p190 = pneg %p62
      %p191 = pneg %p59
      %p192 = pneg %p83
      %p193 = pneg %p80
      %p194 = pneg %p104
      %p195 = pneg %p101
      %p196 = pneg %p130
      %p197 = pneg %p127
      %p198 = scmp.lt.s32.totalorder %s15, 1
      %s199 = scalar_select %p198, %s15, 1
      %s200 = smul.addr %s199, 32
      %s201 = smul.addr %s200, 8
      %s202 = scalar_lea.vmem %s4, %s201
      %p203 = scmp.lt.s32.totalorder %s15, 1
      %s204 = scalar_select %p203, %s15, 1
      %s205 = smul.addr %s204, 32
      %s206 = smul.addr %s205, 4
      %s207 = scalar_lea.vmem %s0, %s206
      %p208 = scmp.lt.s32.totalorder %s15, 1
      %s209 = scalar_select %p208, %s15, 1
      %s210 = smul.addr %s209, 32
      %s211 = smul.addr %s210, 8
      %s212 = scalar_lea.vmem %s1, %s211
      %p213 = scmp.lt.s32.totalorder %s15, 1
      %s214 = scalar_select %p213, %s15, 1
      %s215 = smul.addr %s214, 32
      %s216 = smul.addr %s215, 8
      %s217 = scalar_lea.vmem %s4, %s216
      %v218 = vld [vmem:[%s2] sm:$0x3]
      %v219 = vld [vmem:[%s2 + $0x2] sm:$0x3]
      %v220 = vld [vmem:[%s3] sm:$0x3]
      %vm221 = vcmask 1041408
      %v222 = vsel %vm221, %v218, 0.0
      %v223 = vsel %vm221, %v219, 0.0
      %v224 = vadd.f32 %v222, %v223
      %v225 = vrcp.pop 512.0
      %v226 = vmul.f32 %v224, %v225
      %v227 = vmul.f32 %v226, %v226
      %v229 = vrot.slane %v227, 7
      %v231 = vsub.f32 %v226, %v229
      %v232 = vmax.f32 %v231, 0.0
      %v233 = vadd.f32 %v232, 1e-05
      %v234 = vrsqrt.pop %v233
      %v236 = vrot.slane %v234, 1
      %v238 = vmul.f32 %v220, %v236
      %v239 = vmul.f32 %v226, %v238
      %v241 = vrot.slane %v239, 7
      %v243 = vsub.f32 %v220, %v241
      %v244 = vld [vmem:[%s207] sm:$0xf]
      %v245 = vld [vmem:[%s207 + $0x4] sm:$0xf]
      %v246 = vld [vmem:[%s207 + $0x8] sm:$0xf]
      %v247 = vld [vmem:[%s207 + $0xc] sm:$0xf]
      %v248 = vld [vmem:[%s207 + $0x10] sm:$0xf]
      %v249 = vld [vmem:[%s207 + $0x14] sm:$0xf]
      %v250 = vld [vmem:[%s207 + $0x18] sm:$0xf]
      %v251 = vld [vmem:[%s207 + $0x1c] sm:$0xf]
      %v252 = vld [vmem:[%s207 + $0x20] sm:$0xf]
      %v253 = vld [vmem:[%s207 + $0x24] sm:$0xf]
      %v254 = vld [vmem:[%s207 + $0x28] sm:$0xf]
      %v255 = vld [vmem:[%s207 + $0x2c] sm:$0xf]
      %v256 = vld [vmem:[%s207 + $0x30] sm:$0xf]
      %v257 = vld [vmem:[%s207 + $0x34] sm:$0xf]
      %v258 = vld [vmem:[%s207 + $0x38] sm:$0xf]
      %v259 = vld [vmem:[%s207 + $0x3c] sm:$0xf]
      %v260 = vld [vmem:[%s207 + $0x40] sm:$0xf]
      %v261 = vld [vmem:[%s207 + $0x44] sm:$0xf]
      %v262 = vld [vmem:[%s207 + $0x48] sm:$0xf]
      %v263 = vld [vmem:[%s207 + $0x4c] sm:$0xf]
      %v264 = vld [vmem:[%s207 + $0x50] sm:$0xf]
      %v265 = vld [vmem:[%s207 + $0x54] sm:$0xf]
      %v266 = vld [vmem:[%s207 + $0x58] sm:$0xf]
      %v267 = vld [vmem:[%s207 + $0x5c] sm:$0xf]
      %v268 = vld [vmem:[%s207 + $0x60] sm:$0xf]
      %v269 = vld [vmem:[%s207 + $0x64] sm:$0xf]
      %v270 = vld [vmem:[%s207 + $0x68] sm:$0xf]
      %v271 = vld [vmem:[%s207 + $0x6c] sm:$0xf]
      %v272 = vld [vmem:[%s207 + $0x70] sm:$0xf]
      %v273 = vld [vmem:[%s207 + $0x74] sm:$0xf]
      %v274 = vld [vmem:[%s207 + $0x78] sm:$0xf]
      %v275 = vld [vmem:[%s207 + $0x7c] sm:$0xf]
      %v276 = vunpack.c.l.bf16 %v244
      %v277 = vunpack.c.l.bf16 %v245
      %v278 = vunpack.c.l.bf16 %v246
      %v279 = vunpack.c.l.bf16 %v247
      %v280 = vunpack.c.l.bf16 %v248
      %v281 = vunpack.c.l.bf16 %v249
      %v282 = vunpack.c.l.bf16 %v250
      %v283 = vunpack.c.l.bf16 %v251
      %v284 = vunpack.c.l.bf16 %v252
      %v285 = vunpack.c.l.bf16 %v253
      %v286 = vunpack.c.l.bf16 %v254
      %v287 = vunpack.c.l.bf16 %v255
      %v288 = vunpack.c.l.bf16 %v256
      %v289 = vunpack.c.l.bf16 %v257
      %v290 = vunpack.c.l.bf16 %v258
      %v291 = vunpack.c.l.bf16 %v259
      %v292 = vunpack.c.l.bf16 %v260
      %v293 = vunpack.c.l.bf16 %v261
      %v294 = vunpack.c.l.bf16 %v262
      %v295 = vunpack.c.l.bf16 %v263
      %v296 = vunpack.c.l.bf16 %v264
      %v297 = vunpack.c.l.bf16 %v265
      %v298 = vunpack.c.l.bf16 %v266
      %v299 = vunpack.c.l.bf16 %v267
      %v300 = vunpack.c.l.bf16 %v268
      %v301 = vunpack.c.l.bf16 %v269
      %v302 = vunpack.c.l.bf16 %v270
      %v303 = vunpack.c.l.bf16 %v271
      %v304 = vunpack.c.l.bf16 %v272
      %v305 = vunpack.c.l.bf16 %v273
      %v306 = vunpack.c.l.bf16 %v274
      %v307 = vunpack.c.l.bf16 %v275
      %v308 = vlaneseq
      %v309 = vshrl.u32 %v308, 7
      %v310 = vsub.s32 0, %v309
      %v311 = vrot.slane %v238, %v310
      %v312 = vmul.f32 %v276, %v311
      %v313 = vmul.f32 %v277, %v311
      %v314 = vmul.f32 %v278, %v311
      %v315 = vmul.f32 %v279, %v311
      %v316 = vmul.f32 %v280, %v311
      %v317 = vmul.f32 %v281, %v311
      %v318 = vmul.f32 %v282, %v311
      %v319 = vmul.f32 %v283, %v311
      %v320 = vmul.f32 %v284, %v311
      %v321 = vmul.f32 %v285, %v311
      %v322 = vmul.f32 %v286, %v311
      %v323 = vmul.f32 %v287, %v311
      %v324 = vmul.f32 %v288, %v311
      %v325 = vmul.f32 %v289, %v311
      %v326 = vmul.f32 %v290, %v311
      %v327 = vmul.f32 %v291, %v311
      %v328 = vmul.f32 %v292, %v311
      %v329 = vmul.f32 %v293, %v311
      %v330 = vmul.f32 %v294, %v311
      %v331 = vmul.f32 %v295, %v311
      %v332 = vmul.f32 %v296, %v311
      %v333 = vmul.f32 %v297, %v311
      %v334 = vmul.f32 %v298, %v311
      %v335 = vmul.f32 %v299, %v311
      %v336 = vmul.f32 %v300, %v311
      %v337 = vmul.f32 %v301, %v311
      %v338 = vmul.f32 %v302, %v311
      %v339 = vmul.f32 %v303, %v311
      %v340 = vmul.f32 %v304, %v311
      %v341 = vmul.f32 %v305, %v311
      %v342 = vmul.f32 %v306, %v311
      %v343 = vmul.f32 %v307, %v311
      %v344 = vlaneseq
      %v345 = vshrl.u32 %v344, 7
      %v346 = vsub.s32 1, %v345
      %v347 = vrot.slane %v243, %v346
      %v348 = vadd.f32 %v312, %v347
      %v349 = vadd.f32 %v313, %v347
      %v350 = vadd.f32 %v314, %v347
      %v351 = vadd.f32 %v315, %v347
      %v352 = vadd.f32 %v316, %v347
      %v353 = vadd.f32 %v317, %v347
      %v354 = vadd.f32 %v318, %v347
      %v355 = vadd.f32 %v319, %v347
      %v356 = vadd.f32 %v320, %v347
      %v357 = vadd.f32 %v321, %v347
      %v358 = vadd.f32 %v322, %v347
      %v359 = vadd.f32 %v323, %v347
      %v360 = vadd.f32 %v324, %v347
      %v361 = vadd.f32 %v325, %v347
      %v362 = vadd.f32 %v326, %v347
      %v363 = vadd.f32 %v327, %v347
      %v364 = vadd.f32 %v328, %v347
      %v365 = vadd.f32 %v329, %v347
      %v366 = vadd.f32 %v330, %v347
      %v367 = vadd.f32 %v331, %v347
      %v368 = vadd.f32 %v332, %v347
      %v369 = vadd.f32 %v333, %v347
      %v370 = vadd.f32 %v334, %v347
      %v371 = vadd.f32 %v335, %v347
      %v372 = vadd.f32 %v336, %v347
      %v373 = vadd.f32 %v337, %v347
      %v374 = vadd.f32 %v338, %v347
      %v375 = vadd.f32 %v339, %v347
      %v376 = vadd.f32 %v340, %v347
      %v377 = vadd.f32 %v341, %v347
      %v378 = vadd.f32 %v342, %v347
      %v379 = vadd.f32 %v343, %v347
      %v380 = vld [vmem:[%s212] sm:$0xff]
      %v381 = vld [vmem:[%s212 + $0x8] sm:$0xff]
      %v382 = vld [vmem:[%s212 + $0x10] sm:$0xff]
      %v383 = vld [vmem:[%s212 + $0x18] sm:$0xff]
      %v384 = vld [vmem:[%s212 + $0x20] sm:$0xff]
      %v385 = vld [vmem:[%s212 + $0x28] sm:$0xff]
      %v386 = vld [vmem:[%s212 + $0x30] sm:$0xff]
      %v387 = vld [vmem:[%s212 + $0x38] sm:$0xff]
      %v388 = vld [vmem:[%s212 + $0x40] sm:$0xff]
      %v389 = vld [vmem:[%s212 + $0x48] sm:$0xff]
      %v390 = vld [vmem:[%s212 + $0x50] sm:$0xff]
      %v391 = vld [vmem:[%s212 + $0x58] sm:$0xff]
      %v392 = vld [vmem:[%s212 + $0x60] sm:$0xff]
      %v393 = vld [vmem:[%s212 + $0x68] sm:$0xff]
      %v394 = vld [vmem:[%s212 + $0x70] sm:$0xff]
      %v395 = vld [vmem:[%s212 + $0x78] sm:$0xff]
      %v396 = vld [vmem:[%s212 + $0x80] sm:$0xff]
      %v397 = vld [vmem:[%s212 + $0x88] sm:$0xff]
      %v398 = vld [vmem:[%s212 + $0x90] sm:$0xff]
      %v399 = vld [vmem:[%s212 + $0x98] sm:$0xff]
      %v400 = vld [vmem:[%s212 + $0xa0] sm:$0xff]
      %v401 = vld [vmem:[%s212 + $0xa8] sm:$0xff]
      %v402 = vld [vmem:[%s212 + $0xb0] sm:$0xff]
      %v403 = vld [vmem:[%s212 + $0xb8] sm:$0xff]
      %v404 = vld [vmem:[%s212 + $0xc0] sm:$0xff]
      %v405 = vld [vmem:[%s212 + $0xc8] sm:$0xff]
      %v406 = vld [vmem:[%s212 + $0xd0] sm:$0xff]
      %v407 = vld [vmem:[%s212 + $0xd8] sm:$0xff]
      %v408 = vld [vmem:[%s212 + $0xe0] sm:$0xff]
      %v409 = vld [vmem:[%s212 + $0xe8] sm:$0xff]
      %v410 = vld [vmem:[%s212 + $0xf0] sm:$0xff]
      %v411 = vld [vmem:[%s212 + $0xf8] sm:$0xff]
      %v412 = vadd.f32 %v348, %v380
      %v413 = vadd.f32 %v349, %v381
      %v414 = vadd.f32 %v350, %v382
      %v415 = vadd.f32 %v351, %v383
      %v416 = vadd.f32 %v352, %v384
      %v417 = vadd.f32 %v353, %v385
      %v418 = vadd.f32 %v354, %v386
      %v419 = vadd.f32 %v355, %v387
      %v420 = vadd.f32 %v356, %v388
      %v421 = vadd.f32 %v357, %v389
      %v422 = vadd.f32 %v358, %v390
      %v423 = vadd.f32 %v359, %v391
      %v424 = vadd.f32 %v360, %v392
      %v425 = vadd.f32 %v361, %v393
      %v426 = vadd.f32 %v362, %v394
      %v427 = vadd.f32 %v363, %v395
      %v428 = vadd.f32 %v364, %v396
      %v429 = vadd.f32 %v365, %v397
      %v430 = vadd.f32 %v366, %v398
      %v431 = vadd.f32 %v367, %v399
      %v432 = vadd.f32 %v368, %v400
      %v433 = vadd.f32 %v369, %v401
      %v434 = vadd.f32 %v370, %v402
      %v435 = vadd.f32 %v371, %v403
      %v436 = vadd.f32 %v372, %v404
      %v437 = vadd.f32 %v373, %v405
      %v438 = vadd.f32 %v374, %v406
      %v439 = vadd.f32 %v375, %v407
      %v440 = vadd.f32 %v376, %v408
      %v441 = vadd.f32 %v377, %v409
      %v442 = vadd.f32 %v378, %v410
      %v443 = vadd.f32 %v379, %v411
      %v444 = vmax.f32 %v412, 0.0
      %v445 = vmax.f32 %v413, 0.0
      %v446 = vmax.f32 %v414, 0.0
      %v447 = vmax.f32 %v415, 0.0
      %v448 = vmax.f32 %v416, 0.0
      %v449 = vmax.f32 %v417, 0.0
      %v450 = vmax.f32 %v418, 0.0
      %v451 = vmax.f32 %v419, 0.0
      %v452 = vmax.f32 %v420, 0.0
      %v453 = vmax.f32 %v421, 0.0
      %v454 = vmax.f32 %v422, 0.0
      %v455 = vmax.f32 %v423, 0.0
      %v456 = vmax.f32 %v424, 0.0
      %v457 = vmax.f32 %v425, 0.0
      %v458 = vmax.f32 %v426, 0.0
      %v459 = vmax.f32 %v427, 0.0
      %v460 = vmax.f32 %v428, 0.0
      %v461 = vmax.f32 %v429, 0.0
      %v462 = vmax.f32 %v430, 0.0
      %v463 = vmax.f32 %v431, 0.0
      %v464 = vmax.f32 %v432, 0.0
      %v465 = vmax.f32 %v433, 0.0
      %v466 = vmax.f32 %v434, 0.0
      %v467 = vmax.f32 %v435, 0.0
      %v468 = vmax.f32 %v436, 0.0
      %v469 = vmax.f32 %v437, 0.0
      %v470 = vmax.f32 %v438, 0.0
      %v471 = vmax.f32 %v439, 0.0
      %v472 = vmax.f32 %v440, 0.0
      %v473 = vmax.f32 %v441, 0.0
      %v474 = vmax.f32 %v442, 0.0
      %v475 = vmax.f32 %v443, 0.0
      %476 = vst [vmem:[%s217] sm:$0xff] %v444
      %477 = vst [vmem:[%s217 + $0x8] sm:$0xff] %v445
      %478 = vst [vmem:[%s217 + $0x10] sm:$0xff] %v446
      %479 = vst [vmem:[%s217 + $0x18] sm:$0xff] %v447
      %480 = vst [vmem:[%s217 + $0x20] sm:$0xff] %v448
      %481 = vst [vmem:[%s217 + $0x28] sm:$0xff] %v449
      %482 = vst [vmem:[%s217 + $0x30] sm:$0xff] %v450
      %483 = vst [vmem:[%s217 + $0x38] sm:$0xff] %v451
      %484 = vst [vmem:[%s217 + $0x40] sm:$0xff] %v452
      %485 = vst [vmem:[%s217 + $0x48] sm:$0xff] %v453
      %486 = vst [vmem:[%s217 + $0x50] sm:$0xff] %v454
      %487 = vst [vmem:[%s217 + $0x58] sm:$0xff] %v455
      %488 = vst [vmem:[%s217 + $0x60] sm:$0xff] %v456
      %489 = vst [vmem:[%s217 + $0x68] sm:$0xff] %v457
      %490 = vst [vmem:[%s217 + $0x70] sm:$0xff] %v458
      %491 = vst [vmem:[%s217 + $0x78] sm:$0xff] %v459
      %492 = vst [vmem:[%s217 + $0x80] sm:$0xff] %v460
      %493 = vst [vmem:[%s217 + $0x88] sm:$0xff] %v461
      %494 = vst [vmem:[%s217 + $0x90] sm:$0xff] %v462
      %495 = vst [vmem:[%s217 + $0x98] sm:$0xff] %v463
      %496 = vst [vmem:[%s217 + $0xa0] sm:$0xff] %v464
      %497 = vst [vmem:[%s217 + $0xa8] sm:$0xff] %v465
      %498 = vst [vmem:[%s217 + $0xb0] sm:$0xff] %v466
      %499 = vst [vmem:[%s217 + $0xb8] sm:$0xff] %v467
      %500 = vst [vmem:[%s217 + $0xc0] sm:$0xff] %v468
      %501 = vst [vmem:[%s217 + $0xc8] sm:$0xff] %v469
      %502 = vst [vmem:[%s217 + $0xd0] sm:$0xff] %v470
      %503 = vst [vmem:[%s217 + $0xd8] sm:$0xff] %v471
      %504 = vst [vmem:[%s217 + $0xe0] sm:$0xff] %v472
      %505 = vst [vmem:[%s217 + $0xe8] sm:$0xff] %v473
      %506 = vst [vmem:[%s217 + $0xf0] sm:$0xff] %v474
      %507 = vst [vmem:[%s217 + $0xf8] sm:$0xff] %v475
      %p508 = scmp.lt.s32.totalorder %s15, 1
      %s509 = scalar_select %p508, %s15, 1
      %s510 = smul.addr %s509, 32
      %s511 = smul.addr %s510, 8
      %s512 = scalar_lea.vmem %s4, %s511
      // Predicated region
      $region37: #{resblock_pallas.5} parent=35 // pred_check
        %p513 = pneg %p127
      $region38: #{resblock_pallas.5} parent=35 // pred_check_branch
        %515 = sbr.rel (%p513) target = $region40
      $region39: #{resblock_pallas.5} parent=35 // pred_region
        _
      $region40: #{resblock_pallas.5} parent=35 // pred_fallthru
        _
    $region36: #{resblock_pallas.5} parent=5 // pred_fallthru
      _
    %p516 = scmp.le.s32.totalorder 2, %s10
    // Predicated region
    $region41: #{resblock_pallas.5} parent=5 // pred_check
      %p517 = pneg %p516
    $region42: #{resblock_pallas.5} parent=5 // pred_check_branch
      %519 = sbr.rel (%p517) target = $region44
    $region43: #{resblock_pallas.5} parent=5 // pred_region
      %s520 = ssub.s32 %s10, 2
      // Predicated region
      $region45: #{resblock_pallas.5} parent=43 // pred_check
        %p521 = pneg %p133
      $region46: #{resblock_pallas.5} parent=43 // pred_check_branch
        %523 = sbr.rel (%p521) target = $region48
      $region47: #{resblock_pallas.5} parent=43 // pred_region
        %p524 = scmp.lt.s32.totalorder %s16, 1
        %s525 = scalar_select %p524, %s16, 1
        %s526 = smul.addr %s525, 32
        %s527 = smul.addr %s526, 8
        %s528 = scalar_lea.vmem %s4, %s527
      $region48: #{resblock_pallas.5} parent=43 // pred_fallthru
        _
    $region44: #{resblock_pallas.5} parent=5 // pred_fallthru
      _
  $region6: #{resblock_pallas.5} parent=0 // loop_footer
    %s14 = sadd.s32 1, %s10
  $region7: #{resblock_pallas.5} parent=0 // loop_footer_branch
    %9 = sbr.rel target = $region3
  $region8: #{resblock_pallas.5} parent=0 // loop_exit
    _

// kernel: resblock_pallas.4
$region0: #{resblock_pallas.4}
  #allocation0 [shape = 'u32[]', space=smem, size = 0x4, offset = 0x4, fixed_abs, tag = 'smem constant byte address 0x4 - core index']
  #allocation1 [shape = 'u32[144,128]{1,0:T(1,128)}', space=vmem, size = 0x12000, scoped, tag = 'internal scratch']
  #allocation2 [shape = 'f32[1,18,24,128]{3,2,1,0:T(8,128)}', space=vmem, size = 0x36000, scoped, tag = 'scratch operand']
  %s0 = inlined_call_operand.vmem [shape: bf16[2,16,16,128], index: 0, kind: input, shape index: {}]
  %s1 = inlined_call_operand.vmem [shape: f32[2,2,128], index: 1, kind: input, shape index: {}]
  %s2 = inlined_call_operand.vmem [shape: f32[2,128], index: 2, kind: input, shape index: {}]
  %s3 = inlined_call_operand.vmem [shape: bf16[1152,128], index: 3, kind: input, shape index: {}]
  %s4 = inlined_call_operand.vmem [shape: bf16[2,16,16,128], index: 4, kind: output, shape index: {0}]
  %s5 = inlined_call_operand.vmem [shape: f32[2,2,128], index: 5, kind: output, shape index: {1}]
  %6 = xla_tuple %s4, %s5
  %s7 = sld [smem:[#allocation0]]
  $region57: #{resblock_pallas.4} parent=0
    _
  %s9 = ssub.s32 1, %s7
  %s10 = scalar_select 0, %s9, %s7
  loop: start=0, step=1, limit=4
  $region2: #{resblock_pallas.4} parent=0 // loop_pre_header
    _
  $region3: #{resblock_pallas.4} parent=0 // loop_header
    %s12 = sphi 0, %s16
    %p13 = scmp.ge.s32.totalorder %s12, 4
    %s22 = sphi 0, %s24
    %s25 = sphi 0, %s22
    %s26 = sphi 0, %s25
    %s42 = sphi 0, %s26
    %s46 = sphi 0, %s46
    %s48 = sphi 0, %s46
    %s49 = sphi 0, %s48
    %s63 = sphi 0, %s49
    %s67 = sphi 0, %s67
    %s69 = sphi 0, %s67
    %s70 = sphi 0, %s69
    %s84 = sphi 0, %s70
    %s88 = sphi 0, %s88
    %s90 = sphi 0, %s88
    %s91 = sphi 0, %s90
    %s105 = sphi 0, %s91
    %s111 = sphi 0, %s113
    %s114 = sphi 0, %s111
    %s115 = sphi 0, %s114
    %s131 = sphi 0, %s115
    %s137 = sphi 0, %s139
    %s140 = sphi 0, %s137
    %s141 = sphi 0, %s140
    %s157 = sphi 0, %s141
  $region4: #{resblock_pallas.4} parent=0 // loop_header_branch
    %15 = sbr.rel (%p13) target = $region8
  $region5: #{resblock_pallas.4} parent=0 // loop_body
    %s17 = ssub.s32 %s12, 1
    %s18 = ssub.s32 %s12, 2
    %s19 = sadd.s32 %s12, 1
    %s20 = ssub.s32 %s12, %s19
    %p21 = scmp.eq.s32.totalorder %s20, 0
    %s23 = sadd.s32 %s22, 1
    %s24 = scalar_select %p21, %s22, %s23
    %p27 = pneg %p21
    %p28 = scmp.eq.s32.totalorder %s12, 1
    %p29 = por %p27, %p28
    %p30 = scmp.ne.s32.totalorder %s22, %s25
    %p31 = scmp.eq.s32.totalorder %s12, 0
    %p32 = por %p30, %p31
    %p33 = scmp.ne.s32.totalorder %s22, %s25
    %p34 = scmp.eq.s32.totalorder %s17, 1
    %p35 = por %p33, %p34
    %p36 = scmp.ne.s32.totalorder %s25, %s26
    %p37 = scmp.eq.s32.totalorder %s17, 0
    %p38 = por %p36, %p37
    %p39 = scmp.ne.s32.totalorder %s25, %s26
    %p40 = scmp.eq.s32.totalorder %s18, 1
    %p41 = por %p39, %p40
    %p43 = scmp.ne.s32.totalorder %s26, %s42
    %p44 = scmp.eq.s32.totalorder %s18, 0
    %p45 = por %p43, %p44
    %s47 = sadd.s32 %s46, 1
    %p50 = scmp.eq.s32.totalorder %s12, 1
    %p51 = scmp.ne.s32.totalorder %s46, %s48
    %p52 = scmp.eq.s32.totalorder %s12, 0
    %p53 = por %p51, %p52
    %p54 = scmp.ne.s32.totalorder %s46, %s48
    %p55 = scmp.eq.s32.totalorder %s17, 1
    %p56 = por %p54, %p55
    %p57 = scmp.ne.s32.totalorder %s48, %s49
    %p58 = scmp.eq.s32.totalorder %s17, 0
    %p59 = por %p57, %p58
    %p60 = scmp.ne.s32.totalorder %s48, %s49
    %p61 = scmp.eq.s32.totalorder %s18, 1
    %p62 = por %p60, %p61
    %p64 = scmp.ne.s32.totalorder %s49, %s63
    %p65 = scmp.eq.s32.totalorder %s18, 0
    %p66 = por %p64, %p65
    %s68 = sadd.s32 %s67, 1
    %p71 = scmp.eq.s32.totalorder %s12, 1
    %p72 = scmp.ne.s32.totalorder %s67, %s69
    %p73 = scmp.eq.s32.totalorder %s12, 0
    %p74 = por %p72, %p73
    %p75 = scmp.ne.s32.totalorder %s67, %s69
    %p76 = scmp.eq.s32.totalorder %s17, 1
    %p77 = por %p75, %p76
    %p78 = scmp.ne.s32.totalorder %s69, %s70
    %p79 = scmp.eq.s32.totalorder %s17, 0
    %p80 = por %p78, %p79
    %p81 = scmp.ne.s32.totalorder %s69, %s70
    %p82 = scmp.eq.s32.totalorder %s18, 1
    %p83 = por %p81, %p82
    %p85 = scmp.ne.s32.totalorder %s70, %s84
    %p86 = scmp.eq.s32.totalorder %s18, 0
    %p87 = por %p85, %p86
    %s89 = sadd.s32 %s88, 1
    %p92 = scmp.eq.s32.totalorder %s12, 1
    %p93 = scmp.ne.s32.totalorder %s88, %s90
    %p94 = scmp.eq.s32.totalorder %s12, 0
    %p95 = por %p93, %p94
    %p96 = scmp.ne.s32.totalorder %s88, %s90
    %p97 = scmp.eq.s32.totalorder %s17, 1
    %p98 = por %p96, %p97
    %p99 = scmp.ne.s32.totalorder %s90, %s91
    %p100 = scmp.eq.s32.totalorder %s17, 0
    %p101 = por %p99, %p100
    %p102 = scmp.ne.s32.totalorder %s90, %s91
    %p103 = scmp.eq.s32.totalorder %s18, 1
    %p104 = por %p102, %p103
    %p106 = scmp.ne.s32.totalorder %s91, %s105
    %p107 = scmp.eq.s32.totalorder %s18, 0
    %p108 = por %p106, %p107
    %s109 = ssub.s32 %s12, %s19
    %p110 = scmp.eq.s32.totalorder %s109, 0
    %s112 = sadd.s32 %s111, 1
    %s113 = scalar_select %p110, %s111, %s112
    %p116 = pneg %p110
    %p117 = scmp.eq.s32.totalorder %s12, 1
    %p118 = por %p116, %p117
    %p119 = scmp.ne.s32.totalorder %s111, %s114
    %p120 = scmp.eq.s32.totalorder %s12, 0
    %p121 = por %p119, %p120
    %p122 = scmp.ne.s32.totalorder %s111, %s114
    %p123 = scmp.eq.s32.totalorder %s17, 1
    %p124 = por %p122, %p123
    %p125 = scmp.ne.s32.totalorder %s114, %s115
    %p126 = scmp.eq.s32.totalorder %s17, 0
    %p127 = por %p125, %p126
    %p128 = scmp.ne.s32.totalorder %s114, %s115
    %p129 = scmp.eq.s32.totalorder %s18, 1
    %p130 = por %p128, %p129
    %p132 = scmp.ne.s32.totalorder %s115, %s131
    %p133 = scmp.eq.s32.totalorder %s18, 0
    %p134 = por %p132, %p133
    %s135 = ssub.s32 %s12, %s19
    %p136 = scmp.eq.s32.totalorder %s135, 0
    %s138 = sadd.s32 %s137, 1
    %s139 = scalar_select %p136, %s137, %s138
    %p142 = pneg %p136
    %p143 = scmp.eq.s32.totalorder %s12, 1
    %p144 = por %p142, %p143
    %p145 = scmp.ne.s32.totalorder %s137, %s140
    %p146 = scmp.eq.s32.totalorder %s12, 0
    %p147 = por %p145, %p146
    %p148 = scmp.ne.s32.totalorder %s137, %s140
    %p149 = scmp.eq.s32.totalorder %s17, 1
    %p150 = por %p148, %p149
    %p151 = scmp.ne.s32.totalorder %s140, %s141
    %p152 = scmp.eq.s32.totalorder %s17, 0
    %p153 = por %p151, %p152
    %p154 = scmp.ne.s32.totalorder %s140, %s141
    %p155 = scmp.eq.s32.totalorder %s18, 1
    %p156 = por %p154, %p155
    %p158 = scmp.ne.s32.totalorder %s141, %s157
    %p159 = scmp.eq.s32.totalorder %s18, 0
    %p160 = por %p158, %p159
    %p161 = scmp.le.s32.totalorder 1, %s12
    %p162 = scmp.lt.s32.totalorder %s12, 3
    %p163 = pnand %p161, %p162
    %p164 = pneg %p163
    // Predicated region
    $region9: #{resblock_pallas.4} parent=5 // pred_check
      _
    $region10: #{resblock_pallas.4} parent=5 // pred_check_branch
      %166 = sbr.rel (%p163) target = $region12
    $region11: #{resblock_pallas.4} parent=5 // pred_region
      %s167 = ssub.s32 %s12, 1
      // Predicated region
      $region13: #{resblock_pallas.4} parent=11 // pred_check
        %p168 = pneg %p59
      $region14: #{resblock_pallas.4} parent=11 // pred_check_branch
        %170 = sbr.rel (%p168) target = $region16
      $region15: #{resblock_pallas.4} parent=11 // pred_region
        _
      $region16: #{resblock_pallas.4} parent=11 // pred_fallthru
        _
      // Predicated region
      $region17: #{resblock_pallas.4} parent=11 // pred_check
        %p171 = pneg %p80
      $region18: #{resblock_pallas.4} parent=11 // pred_check_branch
        %173 = sbr.rel (%p171) target = $region20
      $region19: #{resblock_pallas.4} parent=11 // pred_region
        _
      $region20: #{resblock_pallas.4} parent=11 // pred_fallthru
        _
      // Predicated region
      $region21: #{resblock_pallas.4} parent=11 // pred_check
        %p174 = pneg %p101
      $region22: #{resblock_pallas.4} parent=11 // pred_check_branch
        %176 = sbr.rel (%p174) target = $region24
      $region23: #{resblock_pallas.4} parent=11 // pred_region
        _
      $region24: #{resblock_pallas.4} parent=11 // pred_fallthru
        _
    $region12: #{resblock_pallas.4} parent=5 // pred_fallthru
      _
    %p177 = scmp.lt.s32.totalorder %s12, 2
    // Predicated region
    $region25: #{resblock_pallas.4} parent=5 // pred_check
      %p178 = pneg %p177
    $region26: #{resblock_pallas.4} parent=5 // pred_check_branch
      %180 = sbr.rel (%p178) target = $region28
    $region27: #{resblock_pallas.4} parent=5 // pred_region
      // Predicated region
      $region29: #{resblock_pallas.4} parent=27 // pred_check
        %p181 = pneg %p32
      $region30: #{resblock_pallas.4} parent=27 // pred_check_branch
        %183 = sbr.rel (%p181) target = $region32
      $region31: #{resblock_pallas.4} parent=27 // pred_region
        %p184 = scmp.lt.s32.totalorder %s12, 1
        %s185 = scalar_select %p184, %s12, 1
        %s186 = smul.addr %s185, 32
        %s187 = smul.addr %s186, 4
        %s188 = scalar_lea.vmem %s0, %s187
      $region32: #{resblock_pallas.4} parent=27 // pred_fallthru
        _
    $region28: #{resblock_pallas.4} parent=5 // pred_fallthru
      _
    %p189 = scmp.le.s32.totalorder 1, %s12
    %p190 = scmp.lt.s32.totalorder %s12, 3
    %p191 = pnand %p189, %p190
    %p192 = pneg %p191
    // Predicated region
    $region33: #{resblock_pallas.4} parent=5 // pred_check
      _
    $region34: #{resblock_pallas.4} parent=5 // pred_check_branch
      %194 = sbr.rel (%p191) target = $region36
    $region35: #{resblock_pallas.4} parent=5 // pred_region
      %s195 = ssub.s32 %s12, 1
      %p196 = scmp.lt.s32.totalorder %s17, 1
      %s197 = scalar_select %p196, %s17, 1
      %s198 = smul.addr %s197, 32
      %s199 = smul.addr %s198, 4
      %s200 = scalar_lea.vmem %s0, %s199
      %p201 = pneg %p38
      %p202 = pneg %p35
      %p203 = pneg %p59
      %p204 = pneg %p56
      %p205 = pneg %p80
      %p206 = pneg %p77
      %p207 = pneg %p101
      %p208 = pneg %p98
      %p209 = pneg %p127
      %p210 = pneg %p124
      %p211 = scmp.lt.s32.totalorder %s17, 1
      %s212 = scalar_select %p211, %s17, 1
      %s213 = smul.addr %s212, 32
      %s214 = smul.addr %s213, 4
      %s215 = scalar_lea.vmem %s4, %s214
      %p216 = pneg %p153
      %p217 = pneg %p150
      %p218 = scmp.lt.s32.totalorder %s17, 1
      %s219 = scalar_select %p218, %s17, 1
      %s220 = smul.addr %s219, 2
      %s221 = scalar_lea.vmem %s5, %s220
      %p222 = scmp.lt.s32.totalorder %s17, 1
      %s223 = scalar_select %p222, %s17, 1
      %s224 = smul.addr %s223, 32
      %s225 = smul.addr %s224, 4
      %s226 = scalar_lea.vmem %s0, %s225
      %p227 = scmp.lt.s32.totalorder %s17, 1
      %s228 = scalar_select %p227, %s17, 1
      %s229 = smul.addr %s228, 32
      %s230 = smul.addr %s229, 4
      %s231 = scalar_lea.vmem %s4, %s230
      %p232 = scmp.lt.s32.totalorder %s17, 1
      %s233 = scalar_select %p232, %s17, 1
      %s234 = smul.addr %s233, 2
      %s235 = scalar_lea.vmem %s5, %s234
      %v237 = vld [vmem:[%s1] sm:$0x3]
      %v238 = vld [vmem:[%s1 + $0x2] sm:$0x3]
      %v239 = vld [vmem:[%s2] sm:$0x3]
      %vm240 = vcmask 1041408
      %v241 = vsel %vm240, %v237, 0.0
      %v242 = vsel %vm240, %v238, 0.0
      %v243 = vadd.f32 %v241, %v242
      %v244 = vrcp.pop 512.0
      %v245 = vmul.f32 %v243, %v244
      %v246 = vmul.f32 %v245, %v245
      %v248 = vrot.slane %v246, 7
      %v250 = vsub.f32 %v245, %v248
      %v251 = vmax.f32 %v250, 0.0
      %v252 = vadd.f32 %v251, 1e-05
      %v253 = vrsqrt.pop %v252
      %v255 = vrot.slane %v253, 1
      %v257 = vmul.f32 %v239, %v255
      %v258 = vmul.f32 %v245, %v257
      %v260 = vrot.slane %v258, 7
      %v262 = vsub.f32 %v239, %v260
      %v263 = vld [vmem:[%s226] sm:$0xf]
      %v264 = vld [vmem:[%s226 + $0x4] sm:$0xf]
      %v265 = vld [vmem:[%s226 + $0x8] sm:$0xf]
      %v266 = vld [vmem:[%s226 + $0xc] sm:$0xf]
      %v267 = vld [vmem:[%s226 + $0x10] sm:$0xf]
      %v268 = vld [vmem:[%s226 + $0x14] sm:$0xf]
      %v269 = vld [vmem:[%s226 + $0x18] sm:$0xf]
      %v270 = vld [vmem:[%s226 + $0x1c] sm:$0xf]
      %v271 = vld [vmem:[%s226 + $0x20] sm:$0xf]
      %v272 = vld [vmem:[%s226 + $0x24] sm:$0xf]
      %v273 = vld [vmem:[%s226 + $0x28] sm:$0xf]
      %v274 = vld [vmem:[%s226 + $0x2c] sm:$0xf]
      %v275 = vld [vmem:[%s226 + $0x30] sm:$0xf]
      %v276 = vld [vmem:[%s226 + $0x34] sm:$0xf]
      %v277 = vld [vmem:[%s226 + $0x38] sm:$0xf]
      %v278 = vld [vmem:[%s226 + $0x3c] sm:$0xf]
      %v279 = vld [vmem:[%s226 + $0x40] sm:$0xf]
      %v280 = vld [vmem:[%s226 + $0x44] sm:$0xf]
      %v281 = vld [vmem:[%s226 + $0x48] sm:$0xf]
      %v282 = vld [vmem:[%s226 + $0x4c] sm:$0xf]
      %v283 = vld [vmem:[%s226 + $0x50] sm:$0xf]
      %v284 = vld [vmem:[%s226 + $0x54] sm:$0xf]
      %v285 = vld [vmem:[%s226 + $0x58] sm:$0xf]
      %v286 = vld [vmem:[%s226 + $0x5c] sm:$0xf]
      %v287 = vld [vmem:[%s226 + $0x60] sm:$0xf]
      %v288 = vld [vmem:[%s226 + $0x64] sm:$0xf]
      %v289 = vld [vmem:[%s226 + $0x68] sm:$0xf]
      %v290 = vld [vmem:[%s226 + $0x6c] sm:$0xf]
      %v291 = vld [vmem:[%s226 + $0x70] sm:$0xf]
      %v292 = vld [vmem:[%s226 + $0x74] sm:$0xf]
      %v293 = vld [vmem:[%s226 + $0x78] sm:$0xf]
      %v294 = vld [vmem:[%s226 + $0x7c] sm:$0xf]
      %v295 = vunpack.c.l.bf16 %v263
      %v296 = vunpack.c.l.bf16 %v264
      %v297 = vunpack.c.l.bf16 %v265
      %v298 = vunpack.c.l.bf16 %v266
      %v299 = vunpack.c.l.bf16 %v267
      %v300 = vunpack.c.l.bf16 %v268
      %v301 = vunpack.c.l.bf16 %v269
      %v302 = vunpack.c.l.bf16 %v270
      %v303 = vunpack.c.l.bf16 %v271
      %v304 = vunpack.c.l.bf16 %v272
      %v305 = vunpack.c.l.bf16 %v273
      %v306 = vunpack.c.l.bf16 %v274
      %v307 = vunpack.c.l.bf16 %v275
      %v308 = vunpack.c.l.bf16 %v276
      %v309 = vunpack.c.l.bf16 %v277
      %v310 = vunpack.c.l.bf16 %v278
      %v311 = vunpack.c.l.bf16 %v279
      %v312 = vunpack.c.l.bf16 %v280
      %v313 = vunpack.c.l.bf16 %v281
      %v314 = vunpack.c.l.bf16 %v282
      %v315 = vunpack.c.l.bf16 %v283
      %v316 = vunpack.c.l.bf16 %v284
      %v317 = vunpack.c.l.bf16 %v285
      %v318 = vunpack.c.l.bf16 %v286
      %v319 = vunpack.c.l.bf16 %v287
      %v320 = vunpack.c.l.bf16 %v288
      %v321 = vunpack.c.l.bf16 %v289
      %v322 = vunpack.c.l.bf16 %v290
      %v323 = vunpack.c.l.bf16 %v291
      %v324 = vunpack.c.l.bf16 %v292
      %v325 = vunpack.c.l.bf16 %v293
      %v326 = vunpack.c.l.bf16 %v294
      %v327 = vlaneseq
      %v328 = vshrl.u32 %v327, 7
      %v329 = vsub.s32 0, %v328
      %v330 = vrot.slane %v257, %v329
      %v331 = vmul.f32 %v295, %v330
      %v332 = vmul.f32 %v296, %v330
      %v333 = vmul.f32 %v297, %v330
      %v334 = vmul.f32 %v298, %v330
      %v335 = vmul.f32 %v299, %v330
      %v336 = vmul.f32 %v300, %v330
      %v337 = vmul.f32 %v301, %v330
      %v338 = vmul.f32 %v302, %v330
      %v339 = vmul.f32 %v303, %v330
      %v340 = vmul.f32 %v304, %v330
      %v341 = vmul.f32 %v305, %v330
      %v342 = vmul.f32 %v306, %v330
      %v343 = vmul.f32 %v307, %v330
      %v344 = vmul.f32 %v308, %v330
      %v345 = vmul.f32 %v309, %v330
      %v346 = vmul.f32 %v310, %v330
      %v347 = vmul.f32 %v311, %v330
      %v348 = vmul.f32 %v312, %v330
      %v349 = vmul.f32 %v313, %v330
      %v350 = vmul.f32 %v314, %v330
      %v351 = vmul.f32 %v315, %v330
      %v352 = vmul.f32 %v316, %v330
      %v353 = vmul.f32 %v317, %v330
      %v354 = vmul.f32 %v318, %v330
      %v355 = vmul.f32 %v319, %v330
      %v356 = vmul.f32 %v320, %v330
      %v357 = vmul.f32 %v321, %v330
      %v358 = vmul.f32 %v322, %v330
      %v359 = vmul.f32 %v323, %v330
      %v360 = vmul.f32 %v324, %v330
      %v361 = vmul.f32 %v325, %v330
      %v362 = vmul.f32 %v326, %v330
      %v363 = vlaneseq
      %v364 = vshrl.u32 %v363, 7
      %v365 = vsub.s32 1, %v364
      %v366 = vrot.slane %v262, %v365
      %v367 = vadd.f32 %v331, %v366
      %v368 = vadd.f32 %v332, %v366
      %v369 = vadd.f32 %v333, %v366
      %v370 = vadd.f32 %v334, %v366
      %v371 = vadd.f32 %v335, %v366
      %v372 = vadd.f32 %v336, %v366
      %v373 = vadd.f32 %v337, %v366
      %v374 = vadd.f32 %v338, %v366
      %v375 = vadd.f32 %v339, %v366
      %v376 = vadd.f32 %v340, %v366
      %v377 = vadd.f32 %v341, %v366
      %v378 = vadd.f32 %v342, %v366
      %v379 = vadd.f32 %v343, %v366
      %v380 = vadd.f32 %v344, %v366
      %v381 = vadd.f32 %v345, %v366
      %v382 = vadd.f32 %v346, %v366
      %v383 = vadd.f32 %v347, %v366
      %v384 = vadd.f32 %v348, %v366
      %v385 = vadd.f32 %v349, %v366
      %v386 = vadd.f32 %v350, %v366
      %v387 = vadd.f32 %v351, %v366
      %v388 = vadd.f32 %v352, %v366
      %v389 = vadd.f32 %v353, %v366
      %v390 = vadd.f32 %v354, %v366
      %v391 = vadd.f32 %v355, %v366
      %v392 = vadd.f32 %v356, %v366
      %v393 = vadd.f32 %v357, %v366
      %v394 = vadd.f32 %v358, %v366
      %v395 = vadd.f32 %v359, %v366
      %v396 = vadd.f32 %v360, %v366
      %v397 = vadd.f32 %v361, %v366
      %v398 = vadd.f32 %v362, %v366
      %v399 = vmax.f32 %v367, 0.0
      %v400 = vmax.f32 %v368, 0.0
      %v401 = vmax.f32 %v369, 0.0
      %v402 = vmax.f32 %v370, 0.0
      %v403 = vmax.f32 %v371, 0.0
      %v404 = vmax.f32 %v372, 0.0
      %v405 = vmax.f32 %v373, 0.0
      %v406 = vmax.f32 %v374, 0.0
      %v407 = vmax.f32 %v375, 0.0
      %v408 = vmax.f32 %v376, 0.0
      %v409 = vmax.f32 %v377, 0.0
      %v410 = vmax.f32 %v378, 0.0
      %v411 = vmax.f32 %v379, 0.0
      %v412 = vmax.f32 %v380, 0.0
      %v413 = vmax.f32 %v381, 0.0
      %v414 = vmax.f32 %v382, 0.0
      %v415 = vmax.f32 %v383, 0.0
      %v416 = vmax.f32 %v384, 0.0
      %v417 = vmax.f32 %v385, 0.0
      %v418 = vmax.f32 %v386, 0.0
      %v419 = vmax.f32 %v387, 0.0
      %v420 = vmax.f32 %v388, 0.0
      %v421 = vmax.f32 %v389, 0.0
      %v422 = vmax.f32 %v390, 0.0
      %v423 = vmax.f32 %v391, 0.0
      %v424 = vmax.f32 %v392, 0.0
      %v425 = vmax.f32 %v393, 0.0
      %v426 = vmax.f32 %v394, 0.0
      %v427 = vmax.f32 %v395, 0.0
      %v428 = vmax.f32 %v396, 0.0
      %v429 = vmax.f32 %v397, 0.0
      %v430 = vmax.f32 %v398, 0.0
      %431 = vst [vmem:[#allocation2] sm:$0xff] 0.0
      %432 = vst [vmem:[#allocation2 + $0x8] sm:$0xff] 0.0
      %433 = vst [vmem:[#allocation2 + $0x10] sm:$0xff] 0.0
      %s434 = scalar_lea.vmem [#allocation2], 408
      %435 = vst [vmem:[%s434] sm:$0xff] 0.0
      %436 = vst [vmem:[%s434 + $0x8] sm:$0xff] 0.0
      %437 = vst [vmem:[%s434 + $0x10] sm:$0xff] 0.0
      %438 = vst [vmem:[#allocation2] sm:$0x1] 0.0
      %439 = vst [vmem:[#allocation2 + $0x18] sm:$0x1] 0.0
      %440 = vst [vmem:[#allocation2 + $0x30] sm:$0x1] 0.0
      %441 = vst [vmem:[#allocation2 + $0x48] sm:$0x1] 0.0
      %442 = vst [vmem:[#allocation2 + $0x60] sm:$0x1] 0.0
      %443 = vst [vmem:[#allocation2 + $0x78] sm:$0x1] 0.0
      %444 = vst [vmem:[#allocation2 + $0x90] sm:$0x1] 0.0
      %445 = vst [vmem:[#allocation2 + $0xa8] sm:$0x1] 0.0
      %446 = vst [vmem:[#allocation2 + $0xc0] sm:$0x1] 0.0
      %447 = vst [vmem:[#allocation2 + $0xd8] sm:$0x1] 0.0
      %448 = vst [vmem:[#allocation2 + $0xf0] sm:$0x1] 0.0
      %449 = vst [vmem:[#allocation2 + $0x108] sm:$0x1] 0.0
      %450 = vst [vmem:[#allocation2 + $0x120] sm:$0x1] 0.0
      %451 = vst [vmem:[#allocation2 + $0x138] sm:$0x1] 0.0
      %452 = vst [vmem:[#allocation2 + $0x150] sm:$0x1] 0.0
      %453 = vst [vmem:[#allocation2 + $0x168] sm:$0x1] 0.0
      %454 = vst [vmem:[#allocation2 + $0x180] sm:$0x1] 0.0
      %455 = vst [vmem:[#allocation2 + $0x198] sm:$0x1] 0.0
      %456 = vst [vmem:[#allocation2 + $0x11] sm:$0x7f] 0.0
      %457 = vst [vmem:[#allocation2 + $0x29] sm:$0x7f] 0.0
      %458 = vst [vmem:[#allocation2 + $0x41] sm:$0x7f] 0.0
      %459 = vst [vmem:[#allocation2 + $0x59] sm:$0x7f] 0.0
      %460 = vst [vmem:[#allocation2 + $0x71] sm:$0x7f] 0.0
      %461 = vst [vmem:[#allocation2 + $0x89] sm:$0x7f] 0.0
      %462 = vst [vmem:[#allocation2 + $0xa1] sm:$0x7f] 0.0
      %463 = vst [vmem:[#allocation2 + $0xb9] sm:$0x7f] 0.0
      %464 = vst [vmem:[#allocation2 + $0xd1] sm:$0x7f] 0.0
      %465 = vst [vmem:[#allocation2 + $0xe9] sm:$0x7f] 0.0
      %466 = vst [vmem:[#allocation2 + $0x101] sm:$0x7f] 0.0
      %467 = vst [vmem:[#allocation2 + $0x119] sm:$0x7f] 0.0
      %468 = vst [vmem:[#allocation2 + $0x131] sm:$0x7f] 0.0
      %469 = vst [vmem:[#allocation2 + $0x149] sm:$0x7f] 0.0
      %470 = vst [vmem:[#allocation2 + $0x161] sm:$0x7f] 0.0
      %471 = vst [vmem:[#allocation2 + $0x179] sm:$0x7f] 0.0
      %472 = vst [vmem:[#allocation2 + $0x191] sm:$0x7f] 0.0
      %473 = vst [vmem:[#allocation2 + $0x1a9] sm:$0x7f] 0.0
      %s474 = scalar_lea.vmem [#allocation2], 24
      %475 = vst [vmem:[%s474 + $0x1] sm:$0xff] %v399
      %476 = vst [vmem:[%s474 + $0x9] sm:$0xff] %v400
      %477 = vst [vmem:[%s474 + $0x19] sm:$0xff] %v401
      %478 = vst [vmem:[%s474 + $0x21] sm:$0xff] %v402
      %479 = vst [vmem:[%s474 + $0x31] sm:$0xff] %v403
      %480 = vst [vmem:[%s474 + $0x39] sm:$0xff] %v404
      %481 = vst [vmem:[%s474 + $0x49] sm:$0xff] %v405
      %482 = vst [vmem:[%s474 + $0x51] sm:$0xff] %v406
      %483 = vst [vmem:[%s474 + $0x61] sm:$0xff] %v407
      %484 = vst [vmem:[%s474 + $0x69] sm:$0xff] %v408
      %485 = vst [vmem:[%s474 + $0x79] sm:$0xff] %v409
      %486 = vst [vmem:[%s474 + $0x81] sm:$0xff] %v410
      %487 = vst [vmem:[%s474 + $0x91] sm:$0xff] %v411
      %488 = vst [vmem:[%s474 + $0x99] sm:$0xff] %v412
      %489 = vst [vmem:[%s474 + $0xa9] sm:$0xff] %v413
      %490 = vst [vmem:[%s474 + $0xb1] sm:$0xff] %v414
      %491 = vst [vmem:[%s474 + $0xc1] sm:$0xff] %v415
      %492 = vst [vmem:[%s474 + $0xc9] sm:$0xff] %v416
      %493 = vst [vmem:[%s474 + $0xd9] sm:$0xff] %v417
      %494 = vst [vmem:[%s474 + $0xe1] sm:$0xff] %v418
      %495 = vst [vmem:[%s474 + $0xf1] sm:$0xff] %v419
      %496 = vst [vmem:[%s474 + $0xf9] sm:$0xff] %v420
      %497 = vst [vmem:[%s474 + $0x109] sm:$0xff] %v421
      %498 = vst [vmem:[%s474 + $0x111] sm:$0xff] %v422
      %499 = vst [vmem:[%s474 + $0x121] sm:$0xff] %v423
      %500 = vst [vmem:[%s474 + $0x129] sm:$0xff] %v424
      %501 = vst [vmem:[%s474 + $0x139] sm:$0xff] %v425
      %502 = vst [vmem:[%s474 + $0x141] sm:$0xff] %v426
      %503 = vst [vmem:[%s474 + $0x151] sm:$0xff] %v427
      %504 = vst [vmem:[%s474 + $0x159] sm:$0xff] %v428
      %505 = vst [vmem:[%s474 + $0x169] sm:$0xff] %v429
      %506 = vst [vmem:[%s474 + $0x171] sm:$0xff] %v430
      %v507 = vld [vmem:[#allocation2] sm:$0xff]
      %v508 = vld [vmem:[#allocation2 + $0x8] sm:$0xff]
      %v509 = vld [vmem:[#allocation2 + $0x18] sm:$0xff]
      %v510 = vld [vmem:[#allocation2 + $0x20] sm:$0xff]
      %v511 = vld [vmem:[#allocation2 + $0x30] sm:$0xff]
      %v512 = vld [vmem:[#allocation2 + $0x38] sm:$0xff]
      %v513 = vld [vmem:[#allocation2 + $0x48] sm:$0xff]
      %v514 = vld [vmem:[#allocation2 + $0x50] sm:$0xff]
      %v515 = vld [vmem:[#allocation2 + $0x60] sm:$0xff]
      %v516 = vld [vmem:[#allocation2 + $0x68] sm:$0xff]
      %v517 = vld [vmem:[#allocation2 + $0x78] sm:$0xff]
      %v518 = vld [vmem:[#allocation2 + $0x80] sm:$0xff]
      %v519 = vld [vmem:[#allocation2 + $0x90] sm:$0xff]
      %v520 = vld [vmem:[#allocation2 + $0x98] sm:$0xff]
      %v521 = vld [vmem:[#allocation2 + $0xa8] sm:$0xff]
      %v522 = vld [vmem:[#allocation2 + $0xb0] sm:$0xff]
      %v523 = vld [vmem:[#allocation2 + $0xc0] sm:$0xff]
      %v524 = vld [vmem:[#allocation2 + $0xc8] sm:$0xff]
      %v525 = vld [vmem:[#allocation2 + $0xd8] sm:$0xff]
      %v526 = vld [vmem:[#allocation2 + $0xe0] sm:$0xff]
      %v527 = vld [vmem:[#allocation2 + $0xf0] sm:$0xff]
      %v528 = vld [vmem:[#allocation2 + $0xf8] sm:$0xff]
      %v529 = vld [vmem:[#allocation2 + $0x108] sm:$0xff]
      %v530 = vld [vmem:[#allocation2 + $0x110] sm:$0xff]
      %v531 = vld [vmem:[#allocation2 + $0x120] sm:$0xff]
      %v532 = vld [vmem:[#allocation2 + $0x128] sm:$0xff]
      %v533 = vld [vmem:[#allocation2 + $0x138] sm:$0xff]
      %v534 = vld [vmem:[#allocation2 + $0x140] sm:$0xff]
      %v535 = vld [vmem:[#allocation2 + $0x150] sm:$0xff]
      %v536 = vld [vmem:[#allocation2 + $0x158] sm:$0xff]
      %v537 = vld [vmem:[#allocation2 + $0x168] sm:$0xff]
      %v538 = vld [vmem:[#allocation2 + $0x170] sm:$0xff]
      %v539 = vld [vmem:[#allocation2 + $0x180] sm:$0xff]
      %v540 = vld [vmem:[#allocation2 + $0x188] sm:$0xff]
      %v541 = vld [vmem:[#allocation2 + $0x198] sm:$0xff]
      %v542 = vld [vmem:[#allocation2 + $0x1a0] sm:$0xff]
      %v543 = vld [vmem:[#allocation2 + $0x1] sm:$0xff]
      %v544 = vld [vmem:[#allocation2 + $0x9] sm:$0xff]
      %v545 = vld [vmem:[#allocation2 + $0x19] sm:$0xff]
      %v546 = vld [vmem:[#allocation2 + $0x21] sm:$0xff]
      %v547 = vld [vmem:[#allocation2 + $0x31] sm:$0xff]
      %v548 = vld [vmem:[#allocation2 + $0x39] sm:$0xff]
      %v549 = vld [vmem:[#allocation2 + $0x49] sm:$0xff]
      %v550 = vld [vmem:[#allocation2 + $0x51] sm:$0xff]
      %v551 = vld [vmem:[#allocation2 + $0x61] sm:$0xff]
      %v552 = vld [vmem:[#allocation2 + $0x69] sm:$0xff]
      %v553 = vld [vmem:[#allocation2 + $0x79] sm:$0xff]
      %v554 = vld [vmem:[#allocation2 + $0x81] sm:$0xff]
      %v555 = vld [vmem:[#allocation2 + $0x91] sm:$0xff]
      %v556 = vld [vmem:[#allocation2 + $0x99] sm:$0xff]
      %v557 = vld [vmem:[#allocation2 + $0xa9] sm:$0xff]
      %v558 = vld [vmem:[#allocation2 + $0xb1] sm:$0xff]
      %v559 = vld [vmem:[#allocation2 + $0xc1] sm:$0xff]
      %v560 = vld [vmem:[#allocation2 + $0xc9] sm:$0xff]
      %v561 = vld [vmem:[#allocation2 + $0xd9] sm:$0xff]
      %v562 = vld [vmem:[#allocation2 + $0xe1] sm:$0xff]
      %v563 = vld [vmem:[#allocation2 + $0xf1] sm:$0xff]
      %v564 = vld [vmem:[#allocation2 + $0xf9] sm:$0xff]
      %v565 = vld [vmem:[#allocation2 + $0x109] sm:$0xff]
      %v566 = vld [vmem:[#allocation2 + $0x111] sm:$0xff]
      %v567 = vld [vmem:[#allocation2 + $0x121] sm:$0xff]
      %v568 = vld [vmem:[#allocation2 + $0x129] sm:$0xff]
      %v569 = vld [vmem:[#allocation2 + $0x139] sm:$0xff]
      %v570 = vld [vmem:[#allocation2 + $0x141] sm:$0xff]
      %v571 = vld [vmem:[#allocation2 + $0x151] sm:$0xff]
      %v572 = vld [vmem:[#allocation2 + $0x159] sm:$0xff]
      %v573 = vld [vmem:[#allocation2 + $0x169] sm:$0xff]
      %v574 = vld [vmem:[#allocation2 + $0x171] sm:$0xff]
      %v575 = vld [vmem:[#allocation2 + $0x181] sm:$0xff]
      %v576 = vld [vmem:[#allocation2 + $0x189] sm:$0xff]
      %v577 = vld [vmem:[#allocation2 + $0x199] sm:$0xff]
      %v578 = vld [vmem:[#allocation2 + $0x1a1] sm:$0xff]
      %v579 = vld [vmem:[#allocation2 + $0x2] sm:$0xff]
      %v580 = vld [vmem:[#allocation2 + $0xa] sm:$0xff]
      %v581 = vld [vmem:[#allocation2 + $0x1a] sm:$0xff]
      %v582 = vld [vmem:[#allocation2 + $0x22] sm:$0xff]
      %v583 = vld [vmem:[#allocation2 + $0x32] sm:$0xff]
      %v584 = vld [vmem:[#allocation2 + $0x3a] sm:$0xff]
      %v585 = vld [vmem:[#allocation2 + $0x4a] sm:$0xff]
      %v586 = vld [vmem:[#allocation2 + $0x52] sm:$0xff]
      %v587 = vld [vmem:[#allocation2 + $0x62] sm:$0xff]
      %v588 = vld [vmem:[#allocation2 + $0x6a] sm:$0xff]
      %v589 = vld [vmem:[#allocation2 + $0x7a] sm:$0xff]
      %v590 = vld [vmem:[#allocation2 + $0x82] sm:$0xff]
      %v591 = vld [vmem:[#allocation2 + $0x92] sm:$0xff]
      %v592 = vld [vmem:[#allocation2 + $0x9a] sm:$0xff]
      %v593 = vld [vmem:[#allocation2 + $0xaa] sm:$0xff]
      %v594 = vld [vmem:[#allocation2 + $0xb2] sm:$0xff]
      %v595 = vld [vmem:[#allocation2 + $0xc2] sm:$0xff]
      %v596 = vld [vmem:[#allocation2 + $0xca] sm:$0xff]
      %v597 = vld [vmem:[#allocation2 + $0xda] sm:$0xff]
      %v598 = vld [vmem:[#allocation2 + $0xe2] sm:$0xff]
      %v599 = vld [vmem:[#allocation2 + $0xf2] sm:$0xff]
      %v600 = vld [vmem:[#allocation2 + $0xfa] sm:$0xff]
      %v601 = vld [vmem:[#allocation2 + $0x10a] sm:$0xff]
      %v602 = vld [vmem:[#allocation2 + $0x112] sm:$0xff]
      %v603 = vld [vmem:[#allocation2 + $0x122] sm:$0xff]
      %v604 = vld [vmem:[#allocation2 + $0x12a] sm:$0xff]
      %v605 = vld [vmem:[#allocation2 + $0x13a] sm:$0xff]
      %v606 = vld [vmem:[#allocation2 + $0x142] sm:$0xff]
      %v607 = vld [vmem:[#allocation2 + $0x152] sm:$0xff]
      %v608 = vld [vmem:[#allocation2 + $0x15a] sm:$0xff]
      %v609 = vld [vmem:[#allocation2 + $0x16a] sm:$0xff]
      %v610 = vld [vmem:[#allocation2 + $0x172] sm:$0xff]
      %v611 = vld [vmem:[#allocation2 + $0x182] sm:$0xff]
      %v612 = vld [vmem:[#allocation2 + $0x18a] sm:$0xff]
      %v613 = vld [vmem:[#allocation2 + $0x19a] sm:$0xff]
      %v614 = vld [vmem:[#allocation2 + $0x1a2] sm:$0xff]
      %v615 = vpack.c.bf16 %v508, %v507
      %v616 = vpack.c.bf16 %v510, %v509
      %v617 = vpack.c.bf16 %v512, %v511
      %v618 = vpack.c.bf16 %v514, %v513
      %v619 = vpack.c.bf16 %v516, %v515
      %v620 = vpack.c.bf16 %v518, %v517
      %v621 = vpack.c.bf16 %v520, %v519
      %v622 = vpack.c.bf16 %v522, %v521
      %v623 = vpack.c.bf16 %v524, %v523
      %v624 = vpack.c.bf16 %v526, %v525
      %v625 = vpack.c.bf16 %v528, %v527
      %v626 = vpack.c.bf16 %v530, %v529
      %v627 = vpack.c.bf16 %v532, %v531
      %v628 = vpack.c.bf16 %v534, %v533
      %v629 = vpack.c.bf16 %v536, %v535
      %v630 = vpack.c.bf16 %v538, %v537
      %v631 = vpack.c.bf16 %v544, %v543
      %v632 = vpack.c.bf16 %v546, %v545
      %v633 = vpack.c.bf16 %v548, %v547
      %v634 = vpack.c.bf16 %v550, %v549
      %v635 = vpack.c.bf16 %v552, %v551
      %v636 = vpack.c.bf16 %v554, %v553
      %v637 = vpack.c.bf16 %v556, %v555
      %v638 = vpack.c.bf16 %v558, %v557
      %v639 = vpack.c.bf16 %v560, %v559
      %v640 = vpack.c.bf16 %v562, %v561
      %v641 = vpack.c.bf16 %v564, %v563
      %v642 = vpack.c.bf16 %v566, %v565
      %v643 = vpack.c.bf16 %v568, %v567
      %v644 = vpack.c.bf16 %v570, %v569
      %v645 = vpack.c.bf16 %v572, %v571
      %v646 = vpack.c.bf16 %v574, %v573
      %v647 = vpack.c.bf16 %v580, %v579
      %v648 = vpack.c.bf16 %v582, %v581
      %v649 = vpack.c.bf16 %v584, %v583
      %v650 = vpack.c.bf16 %v586, %v585
      %v651 = vpack.c.bf16 %v588, %v587
      %v652 = vpack.c.bf16 %v590, %v589
      %v653 = vpack.c.bf16 %v592, %v591
      %v654 = vpack.c.bf16 %v594, %v593
      %v655 = vpack.c.bf16 %v596, %v595
      %v656 = vpack.c.bf16 %v598, %v597
      %v657 = vpack.c.bf16 %v600, %v599
      %v658 = vpack.c.bf16 %v602, %v601
      %v659 = vpack.c.bf16 %v604, %v603
      %v660 = vpack.c.bf16 %v606, %v605
      %v661 = vpack.c.bf16 %v608, %v607
      %v662 = vpack.c.bf16 %v610, %v609
      %v663 = vpack.c.bf16 %v540, %v539
      %v664 = vpack.c.bf16 %v576, %v575
      %v665 = vpack.c.bf16 %v612, %v611
      %v666 = vpack.c.bf16 %v542, %v541
      %v667 = vpack.c.bf16 %v578, %v577
      %v668 = vpack.c.bf16 %v614, %v613
      %v669 = vld [vmem:[%s3] sm:$0xf]
      %v670 = vld [vmem:[%s3 + $0x4] sm:$0xf]
      %v671 = vld [vmem:[%s3 + $0x8] sm:$0xf]
      %v672 = vld [vmem:[%s3 + $0xc] sm:$0xf]
      %v673 = vld [vmem:[%s3 + $0x10] sm:$0xf]
      %v674 = vld [vmem:[%s3 + $0x14] sm:$0xf]
      %v675 = vld [vmem:[%s3 + $0x18] sm:$0xf]
      %v676 = vld [vmem:[%s3 + $0x1c] sm:$0xf]
      %v677 = vld [vmem:[%s3 + $0x20] sm:$0xf]
      %v678 = vld [vmem:[%s3 + $0x24] sm:$0xf]
      %v679 = vld [vmem:[%s3 + $0x28] sm:$0xf]
      %v680 = vld [vmem:[%s3 + $0x2c] sm:$0xf]
      %v681 = vld [vmem:[%s3 + $0x30] sm:$0xf]
      %v682 = vld [vmem:[%s3 + $0x34] sm:$0xf]
      %v683 = vld [vmem:[%s3 + $0x38] sm:$0xf]
      %v684 = vld [vmem:[%s3 + $0x3c] sm:$0xf]
      %v685 = vld [vmem:[%s3 + $0x40] sm:$0xf]
      %v686 = vld [vmem:[%s3 + $0x44] sm:$0xf]
      %v687 = vld [vmem:[%s3 + $0x48] sm:$0xf]
      %v688 = vld [vmem:[%s3 + $0x4c] sm:$0xf]
      %v689 = vld [vmem:[%s3 + $0x50] sm:$0xf]
      %v690 = vld [vmem:[%s3 + $0x54] sm:$0xf]
      %v691 = vld [vmem:[%s3 + $0x58] sm:$0xf]
      %v692 = vld [vmem:[%s3 + $0x5c] sm:$0xf]
      %v693 = vld [vmem:[%s3 + $0x60] sm:$0xf]
      %v694 = vld [vmem:[%s3 + $0x64] sm:$0xf]
      %v695 = vld [vmem:[%s3 + $0x68] sm:$0xf]
      %v696 = vld [vmem:[%s3 + $0x6c] sm:$0xf]
      %v697 = vld [vmem:[%s3 + $0x70] sm:$0xf]
      %v698 = vld [vmem:[%s3 + $0x74] sm:$0xf]
      %v699 = vld [vmem:[%s3 + $0x78] sm:$0xf]
      %v700 = vld [vmem:[%s3 + $0x7c] sm:$0xf]
      %v701 = vld [vmem:[%s3 + $0x80] sm:$0xf]
      %v702 = vld [vmem:[%s3 + $0x84] sm:$0xf]
      %v703 = vld [vmem:[%s3 + $0x88] sm:$0xf]
      %v704 = vld [vmem:[%s3 + $0x8c] sm:$0xf]
      %v705 = vld [vmem:[%s3 + $0x90] sm:$0xf]
      %v706 = vld [vmem:[%s3 + $0x94] sm:$0xf]
      %v707 = vld [vmem:[%s3 + $0x98] sm:$0xf]
      %v708 = vld [vmem:[%s3 + $0x9c] sm:$0xf]
      %v709 = vld [vmem:[%s3 + $0xa0] sm:$0xf]
      %v710 = vld [vmem:[%s3 + $0xa4] sm:$0xf]
      %v711 = vld [vmem:[%s3 + $0xa8] sm:$0xf]
      %v712 = vld [vmem:[%s3 + $0xac] sm:$0xf]
      %v713 = vld [vmem:[%s3 + $0xb0] sm:$0xf]
      %v714 = vld [vmem:[%s3 + $0xb4] sm:$0xf]
      %v715 = vld [vmem:[%s3 + $0xb8] sm:$0xf]
      %v716 = vld [vmem:[%s3 + $0xbc] sm:$0xf]
      %v717 = vld [vmem:[%s3 + $0xc0] sm:$0xf]
      %v718 = vld [vmem:[%s3 + $0xc4] sm:$0xf]
      %v719 = vld [vmem:[%s3 + $0xc8] sm:$0xf]
      %v720 = vld [vmem:[%s3 + $0xcc] sm:$0xf]
      %v721 = vld [vmem:[%s3 + $0xd0] sm:$0xf]
      %v722 = vld [vmem:[%s3 + $0xd4] sm:$0xf]
      %v723 = vld [vmem:[%s3 + $0xd8] sm:$0xf]
      %v724 = vld [vmem:[%s3 + $0xdc] sm:$0xf]
      %v725 = vld [vmem:[%s3 + $0xe0] sm:$0xf]
      %v726 = vld [vmem:[%s3 + $0xe4] sm:$0xf]
      %v727 = vld [vmem:[%s3 + $0xe8] sm:$0xf]
      %v728 = vld [vmem:[%s3 + $0xec] sm:$0xf]
      %v729 = vld [vmem:[%s3 + $0xf0] sm:$0xf]
      %v730 = vld [vmem:[%s3 + $0xf4] sm:$0xf]
      %v731 = vld [vmem:[%s3 + $0xf8] sm:$0xf]
      %v732 = vld [vmem:[%s3 + $0xfc] sm:$0xf]
      %v733 = vld [vmem:[%s3 + $0x100] sm:$0xf]
      %v734 = vld [vmem:[%s3 + $0x104] sm:$0xf]
      %v735 = vld [vmem:[%s3 + $0x108] sm:$0xf]
      %v736 = vld [vmem:[%s3 + $0x10c] sm:$0xf]
      %v737 = vld [vmem:[%s3 + $0x110] sm:$0xf]
      %v738 = vld [vmem:[%s3 + $0x114] sm:$0xf]
      %v739 = vld [vmem:[%s3 + $0x118] sm:$0xf]
      %v740 = vld [vmem:[%s3 + $0x11c] sm:$0xf]
      %v741 = vld [vmem:[%s3 + $0x120] sm:$0xf]
      %v742 = vld [vmem:[%s3 + $0x124] sm:$0xf]
      %v743 = vld [vmem:[%s3 + $0x128] sm:$0xf]
      %v744 = vld [vmem:[%s3 + $0x12c] sm:$0xf]
      %v745 = vld [vmem:[%s3 + $0x130] sm:$0xf]
      %v746 = vld [vmem:[%s3 + $0x134] sm:$0xf]
      %v747 = vld [vmem:[%s3 + $0x138] sm:$0xf]
      %v748 = vld [vmem:[%s3 + $0x13c] sm:$0xf]
      %v749 = vld [vmem:[%s3 + $0x140] sm:$0xf]
      %v750 = vld [vmem:[%s3 + $0x144] sm:$0xf]
      %v751 = vld [vmem:[%s3 + $0x148] sm:$0xf]
      %v752 = vld [vmem:[%s3 + $0x14c] sm:$0xf]
      %v753 = vld [vmem:[%s3 + $0x150] sm:$0xf]
      %v754 = vld [vmem:[%s3 + $0x154] sm:$0xf]
      %v755 = vld [vmem:[%s3 + $0x158] sm:$0xf]
      %v756 = vld [vmem:[%s3 + $0x15c] sm:$0xf]
      %v757 = vld [vmem:[%s3 + $0x160] sm:$0xf]
      %v758 = vld [vmem:[%s3 + $0x164] sm:$0xf]
      %v759 = vld [vmem:[%s3 + $0x168] sm:$0xf]
      %v760 = vld [vmem:[%s3 + $0x16c] sm:$0xf]
      %v761 = vld [vmem:[%s3 + $0x170] sm:$0xf]
      %v762 = vld [vmem:[%s3 + $0x174] sm:$0xf]
      %v763 = vld [vmem:[%s3 + $0x178] sm:$0xf]
      %v764 = vld [vmem:[%s3 + $0x17c] sm:$0xf]
      %v765 = vld [vmem:[%s3 + $0x180] sm:$0xf]
      %v766 = vld [vmem:[%s3 + $0x184] sm:$0xf]
      %v767 = vld [vmem:[%s3 + $0x188] sm:$0xf]
      %v768 = vld [vmem:[%s3 + $0x18c] sm:$0xf]
      %v769 = vld [vmem:[%s3 + $0x190] sm:$0xf]
      %v770 = vld [vmem:[%s3 + $0x194] sm:$0xf]
      %v771 = vld [vmem:[%s3 + $0x198] sm:$0xf]
      %v772 = vld [vmem:[%s3 + $0x19c] sm:$0xf]
      %v773 = vld [vmem:[%s3 + $0x1a0] sm:$0xf]
      %v774 = vld [vmem:[%s3 + $0x1a4] sm:$0xf]
      %v775 = vld [vmem:[%s3 + $0x1a8] sm:$0xf]
      %v776 = vld [vmem:[%s3 + $0x1ac] sm:$0xf]
      %v777 = vld [vmem:[%s3 + $0x1b0] sm:$0xf]
      %v778 = vld [vmem:[%s3 + $0x1b4] sm:$0xf]
      %v779 = vld [vmem:[%s3 + $0x1b8] sm:$0xf]
      %v780 = vld [vmem:[%s3 + $0x1bc] sm:$0xf]
      %v781 = vld [vmem:[%s3 + $0x1c0] sm:$0xf]
      %v782 = vld [vmem:[%s3 + $0x1c4] sm:$0xf]
      %v783 = vld [vmem:[%s3 + $0x1c8] sm:$0xf]
      %v784 = vld [vmem:[%s3 + $0x1cc] sm:$0xf]
      %v785 = vld [vmem:[%s3 + $0x1d0] sm:$0xf]
      %v786 = vld [vmem:[%s3 + $0x1d4] sm:$0xf]
      %v787 = vld [vmem:[%s3 + $0x1d8] sm:$0xf]
      %v788 = vld [vmem:[%s3 + $0x1dc] sm:$0xf]
      %v789 = vld [vmem:[%s3 + $0x1e0] sm:$0xf]
      %v790 = vld [vmem:[%s3 + $0x1e4] sm:$0xf]
      %v791 = vld [vmem:[%s3 + $0x1e8] sm:$0xf]
      %v792 = vld [vmem:[%s3 + $0x1ec] sm:$0xf]
      %v793 = vld [vmem:[%s3 + $0x1f0] sm:$0xf]
      %v794 = vld [vmem:[%s3 + $0x1f4] sm:$0xf]
      %v795 = vld [vmem:[%s3 + $0x1f8] sm:$0xf]
      %v796 = vld [vmem:[%s3 + $0x1fc] sm:$0xf]
      %v797 = vld [vmem:[%s3 + $0x200] sm:$0xf]
      %v798 = vld [vmem:[%s3 + $0x204] sm:$0xf]
      %v799 = vld [vmem:[%s3 + $0x208] sm:$0xf]
      %v800 = vld [vmem:[%s3 + $0x20c] sm:$0xf]
      %v801 = vld [vmem:[%s3 + $0x210] sm:$0xf]
      %v802 = vld [vmem:[%s3 + $0x214] sm:$0xf]
      %v803 = vld [vmem:[%s3 + $0x218] sm:$0xf]
      %v804 = vld [vmem:[%s3 + $0x21c] sm:$0xf]
      %v805 = vld [vmem:[%s3 + $0x220] sm:$0xf]
      %v806 = vld [vmem:[%s3 + $0x224] sm:$0xf]
      %v807 = vld [vmem:[%s3 + $0x228] sm:$0xf]
      %v808 = vld [vmem:[%s3 + $0x22c] sm:$0xf]
      %v809 = vld [vmem:[%s3 + $0x230] sm:$0xf]
      %v810 = vld [vmem:[%s3 + $0x234] sm:$0xf]
      %v811 = vld [vmem:[%s3 + $0x238] sm:$0xf]
      %v812 = vld [vmem:[%s3 + $0x23c] sm:$0xf]
      %v957 = vunpack.c.l.b16 %v669
      %v958 = vunpack.c.l.b16 %v670
      %v959 = vunpack.c.l.b16 %v671
      %v960 = vunpack.c.l.b16 %v672
      %v961 = vunpack.c.l.b16 %v673
      %v962 = vunpack.c.l.b16 %v674
      %v963 = vunpack.c.l.b16 %v675
      %v964 = vunpack.c.l.b16 %v676
      %v965 = vunpack.c.l.b16 %v677
      %v966 = vunpack.c.l.b16 %v678
      %v967 = vunpack.c.l.b16 %v679
      %v968 = vunpack.c.l.b16 %v680
      %v969 = vunpack.c.l.b16 %v681
      %v970 = vunpack.c.l.b16 %v682
      %v971 = vunpack.c.l.b16 %v683
      %v972 = vunpack.c.l.b16 %v684
      %v973 = vunpack.c.l.b16 %v685
      %v974 = vunpack.c.l.b16 %v686
      %v975 = vunpack.c.l.b16 %v687
      %v976 = vunpack.c.l.b16 %v688
      %v977 = vunpack.c.l.b16 %v689
      %v978 = vunpack.c.l.b16 %v690
      %v979 = vunpack.c.l.b16 %v691
      %v980 = vunpack.c.l.b16 %v692
      %v981 = vunpack.c.l.b16 %v693
      %v982 = vunpack.c.l.b16 %v694
      %v983 = vunpack.c.l.b16 %v695
      %v984 = vunpack.c.l.b16 %v696
      %v985 = vunpack.c.l.b16 %v697
      %v986 = vunpack.c.l.b16 %v698
      %v987 = vunpack.c.l.b16 %v699
      %v988 = vunpack.c.l.b16 %v700
      %v989 = vunpack.c.l.b16 %v701
      %v990 = vunpack.c.l.b16 %v702
      %v991 = vunpack.c.l.b16 %v703
      %v992 = vunpack.c.l.b16 %v704
      %v993 = vunpack.c.l.b16 %v705
      %v994 = vunpack.c.l.b16 %v706
      %v995 = vunpack.c.l.b16 %v707
      %v996 = vunpack.c.l.b16 %v708
      %v997 = vunpack.c.l.b16 %v709
      %v998 = vunpack.c.l.b16 %v710
      %v999 = vunpack.c.l.b16 %v711
      %v1000 = vunpack.c.l.b16 %v712
      %v1001 = vunpack.c.l.b16 %v713
      %v1002 = vunpack.c.l.b16 %v714
      %v1003 = vunpack.c.l.b16 %v715
      %v1004 = vunpack.c.l.b16 %v716
      %v1005 = vunpack.c.l.b16 %v717
      %v1006 = vunpack.c.l.b16 %v718
      %v1007 = vunpack.c.l.b16 %v719
      %v1008 = vunpack.c.l.b16 %v720
      %v1009 = vunpack.c.l.b16 %v721
      %v1010 = vunpack.c.l.b16 %v722
      %v1011 = vunpack.c.l.b16 %v723
      %v1012 = vunpack.c.l.b16 %v724
      %v1013 = vunpack.c.l.b16 %v725
      %v1014 = vunpack.c.l.b16 %v726
      %v1015 = vunpack.c.l.b16 %v727
      %v1016 = vunpack.c.l.b16 %v728
      %v1017 = vunpack.c.l.b16 %v729
      %v1018 = vunpack.c.l.b16 %v730
      %v1019 = vunpack.c.l.b16 %v731
      %v1020 = vunpack.c.l.b16 %v732
      %v1021 = vunpack.c.l.b16 %v733
      %v1022 = vunpack.c.l.b16 %v734
      %v1023 = vunpack.c.l.b16 %v735
      %v1024 = vunpack.c.l.b16 %v736
      %v1025 = vunpack.c.l.b16 %v737
      %v1026 = vunpack.c.l.b16 %v738
      %v1027 = vunpack.c.l.b16 %v739
      %v1028 = vunpack.c.l.b16 %v740
      %v1029 = vunpack.c.l.b16 %v741
      %v1030 = vunpack.c.l.b16 %v742
      %v1031 = vunpack.c.l.b16 %v743
      %v1032 = vunpack.c.l.b16 %v744
      %v1033 = vunpack.c.l.b16 %v745
      %v1034 = vunpack.c.l.b16 %v746
      %v1035 = vunpack.c.l.b16 %v747
      %v1036 = vunpack.c.l.b16 %v748
      %v1037 = vunpack.c.l.b16 %v749
      %v1038 = vunpack.c.l.b16 %v750
      %v1039 = vunpack.c.l.b16 %v751
      %v1040 = vunpack.c.l.b16 %v752
      %v1041 = vunpack.c.l.b16 %v753
      %v1042 = vunpack.c.l.b16 %v754
      %v1043 = vunpack.c.l.b16 %v755
      %v1044 = vunpack.c.l.b16 %v756
      %v1045 = vunpack.c.l.b16 %v757
      %v1046 = vunpack.c.l.b16 %v758
      %v1047 = vunpack.c.l.b16 %v759
      %v1048 = vunpack.c.l.b16 %v760
      %v1049 = vunpack.c.l.b16 %v761
      %v1050 = vunpack.c.l.b16 %v762
      %v1051 = vunpack.c.l.b16 %v763
      %v1052 = vunpack.c.l.b16 %v764
      %v1053 = vunpack.c.l.b16 %v765
      %v1054 = vunpack.c.l.b16 %v766
      %v1055 = vunpack.c.l.b16 %v767
      %v1056 = vunpack.c.l.b16 %v768
      %v1057 = vunpack.c.l.b16 %v769
      %v1058 = vunpack.c.l.b16 %v770
      %v1059 = vunpack.c.l.b16 %v771
      %v1060 = vunpack.c.l.b16 %v772
      %v1061 = vunpack.c.l.b16 %v773
      %v1062 = vunpack.c.l.b16 %v774
      %v1063 = vunpack.c.l.b16 %v775
      %v1064 = vunpack.c.l.b16 %v776
      %v1065 = vunpack.c.l.b16 %v777
      %v1066 = vunpack.c.l.b16 %v778
      %v1067 = vunpack.c.l.b16 %v779
      %v1068 = vunpack.c.l.b16 %v780
      %v1069 = vunpack.c.l.b16 %v781
      %v1070 = vunpack.c.l.b16 %v782
      %v1071 = vunpack.c.l.b16 %v783
      %v1072 = vunpack.c.l.b16 %v784
      %v1073 = vunpack.c.l.b16 %v785
      %v1074 = vunpack.c.l.b16 %v786
      %v1075 = vunpack.c.l.b16 %v787
      %v1076 = vunpack.c.l.b16 %v788
      %v1077 = vunpack.c.l.b16 %v789
      %v1078 = vunpack.c.l.b16 %v790
      %v1079 = vunpack.c.l.b16 %v791
      %v1080 = vunpack.c.l.b16 %v792
      %v1081 = vunpack.c.l.b16 %v793
      %v1082 = vunpack.c.l.b16 %v794
      %v1083 = vunpack.c.l.b16 %v795
      %v1084 = vunpack.c.l.b16 %v796
      %v1085 = vunpack.c.l.b16 %v797
      %v1086 = vunpack.c.l.b16 %v798
      %v1087 = vunpack.c.l.b16 %v799
      %v1088 = vunpack.c.l.b16 %v800
      %v1089 = vunpack.c.l.b16 %v801
      %v1090 = vunpack.c.l.b16 %v802
      %v1091 = vunpack.c.l.b16 %v803
      %v1092 = vunpack.c.l.b16 %v804
      %v1093 = vunpack.c.l.b16 %v805
      %v1094 = vunpack.c.l.b16 %v806
      %v1095 = vunpack.c.l.b16 %v807
      %v1096 = vunpack.c.l.b16 %v808
      %v1097 = vunpack.c.l.b16 %v809
      %v1098 = vunpack.c.l.b16 %v810
      %v1099 = vunpack.c.l.b16 %v811
      %v1100 = vunpack.c.l.b16 %v812
      %v1101 = vpack.c.b16 %v958, %v957
      %v1102 = vpack.c.b16 %v960, %v959
      %v1103 = vpack.c.b16 %v962, %v961
      %v1104 = vpack.c.b16 %v964, %v963
      %v1105 = vpack.c.b16 %v966, %v965
      %v1106 = vpack.c.b16 %v968, %v967
      %v1107 = vpack.c.b16 %v970, %v969
      %v1108 = vpack.c.b16 %v972, %v971
      %v1109 = vpack.c.b16 %v974, %v973
      %v1110 = vpack.c.b16 %v976, %v975
      %v1111 = vpack.c.b16 %v978, %v977
      %v1112 = vpack.c.b16 %v980, %v979
      %v1113 = vpack.c.b16 %v982, %v981
      %v1114 = vpack.c.b16 %v984, %v983
      %v1115 = vpack.c.b16 %v986, %v985
      %v1116 = vpack.c.b16 %v988, %v987
      %v1117 = vpack.c.b16 %v990, %v989
      %v1118 = vpack.c.b16 %v992, %v991
      %v1119 = vpack.c.b16 %v994, %v993
      %v1120 = vpack.c.b16 %v996, %v995
      %v1121 = vpack.c.b16 %v998, %v997
      %v1122 = vpack.c.b16 %v1000, %v999
      %v1123 = vpack.c.b16 %v1002, %v1001
      %v1124 = vpack.c.b16 %v1004, %v1003
      %v1125 = vpack.c.b16 %v1006, %v1005
      %v1126 = vpack.c.b16 %v1008, %v1007
      %v1127 = vpack.c.b16 %v1010, %v1009
      %v1128 = vpack.c.b16 %v1012, %v1011
      %v1129 = vpack.c.b16 %v1014, %v1013
      %v1130 = vpack.c.b16 %v1016, %v1015
      %v1131 = vpack.c.b16 %v1018, %v1017
      %v1132 = vpack.c.b16 %v1020, %v1019
      %v1133 = vpack.c.b16 %v1022, %v1021
      %v1134 = vpack.c.b16 %v1024, %v1023
      %v1135 = vpack.c.b16 %v1026, %v1025
      %v1136 = vpack.c.b16 %v1028, %v1027
      %v1137 = vpack.c.b16 %v1030, %v1029
      %v1138 = vpack.c.b16 %v1032, %v1031
      %v1139 = vpack.c.b16 %v1034, %v1033
      %v1140 = vpack.c.b16 %v1036, %v1035
      %v1141 = vpack.c.b16 %v1038, %v1037
      %v1142 = vpack.c.b16 %v1040, %v1039
      %v1143 = vpack.c.b16 %v1042, %v1041
      %v1144 = vpack.c.b16 %v1044, %v1043
      %v1145 = vpack.c.b16 %v1046, %v1045
      %v1146 = vpack.c.b16 %v1048, %v1047
      %v1147 = vpack.c.b16 %v1050, %v1049
      %v1148 = vpack.c.b16 %v1052, %v1051
      %v1149 = vpack.c.b16 %v1054, %v1053
      %v1150 = vpack.c.b16 %v1056, %v1055
      %v1151 = vpack.c.b16 %v1058, %v1057
      %v1152 = vpack.c.b16 %v1060, %v1059
      %v1153 = vpack.c.b16 %v1062, %v1061
      %v1154 = vpack.c.b16 %v1064, %v1063
      %v1155 = vpack.c.b16 %v1066, %v1065
      %v1156 = vpack.c.b16 %v1068, %v1067
      %v1157 = vpack.c.b16 %v1070, %v1069
      %v1158 = vpack.c.b16 %v1072, %v1071
      %v1159 = vpack.c.b16 %v1074, %v1073
      %v1160 = vpack.c.b16 %v1076, %v1075
      %v1161 = vpack.c.b16 %v1078, %v1077
      %v1162 = vpack.c.b16 %v1080, %v1079
      %v1163 = vpack.c.b16 %v1082, %v1081
      %v1164 = vpack.c.b16 %v1084, %v1083
      %v1165 = vpack.c.b16 %v1086, %v1085
      %v1166 = vpack.c.b16 %v1088, %v1087
      %v1167 = vpack.c.b16 %v1090, %v1089
      %v1168 = vpack.c.b16 %v1092, %v1091
      %v1169 = vpack.c.b16 %v1094, %v1093
      %v1170 = vpack.c.b16 %v1096, %v1095
      %v1171 = vpack.c.b16 %v1098, %v1097
      %v1172 = vpack.c.b16 %v1100, %v1099
      %1245 = vmatprep.subr.bf16.mxu0 0
      %1246 = vmatpush1.bf16.msra.mxu0 %v1101
      %1247 = vmatprep.subr.bf16.mxu0 0
      %1248 = vmatpush1.bf16.msra.mxu0 %v1102
      %1249 = vmatprep.subr.bf16.mxu0 0
      %1250 = vmatpush1.bf16.msra.mxu0 %v1103
      %1251 = vmatprep.subr.bf16.mxu0 0
      %1252 = vmatpush1.bf16.msra.mxu0 %v1104
      %1253 = vmatprep.subr.bf16.mxu0 0
      %1254 = vmatpush1.bf16.msra.mxu0 %v1105
      %1255 = vmatprep.subr.bf16.mxu0 0
      %1256 = vmatpush1.bf16.msra.mxu0 %v1106
      %1257 = vmatprep.subr.bf16.mxu0 0
      %1258 = vmatpush1.bf16.msra.mxu0 %v1107
      %1259 = vmatprep.subr.bf16.mxu0 0
      %1260 = vmatpush1.bf16.msra.mxu0 %v1108
      %1261 = vmatprep.subr.bf16.mxu0 0
      %1262 = vmatpush1.bf16.msra.mxu0 %v1109
      %1263 = vmatprep.subr.bf16.mxu0 0
      %1264 = vmatpush1.bf16.msra.mxu0 %v1110
      %1265 = vmatprep.subr.bf16.mxu0 0
      %1266 = vmatpush1.bf16.msra.mxu0 %v1111
      %1267 = vmatprep.subr.bf16.mxu0 0
      %1268 = vmatpush1.bf16.msra.mxu0 %v1112
      %1269 = vmatprep.subr.bf16.mxu0 0
      %1270 = vmatpush1.bf16.msra.mxu0 %v1113
      %1271 = vmatprep.subr.bf16.mxu0 0
      %1272 = vmatpush1.bf16.msra.mxu0 %v1114
      %1273 = vmatprep.subr.bf16.mxu0 0
      %1274 = vmatpush1.bf16.msra.mxu0 %v1115
      %1275 = vmatprep.subr.bf16.mxu0 0
      %1276 = vmatpush1.bf16.msra.mxu0 %v1116
      %1277 = vmatprep.mubr.bf16.mxu0 %v631
      %1278 = vmatmul.mubr.bf16.gmra.mrb[0].mxu0 %v615
      %v1279 = vpop.f32.mrb[0].mxu0
      %v1280 = vadd.f32 0.0, %v1279
      %v1281 = vpop.f32.mrb[0].mxu0
      %v1282 = vpop.f32.mrb[0].mxu0
      %v1283 = vadd.f32 0.0, %v1282
      %v1284 = vpop.f32.mrb[0].mxu0
      %1285 = vmatprep.mubr.bf16.mxu0 %v632
      %1286 = vmatmul.mubr.bf16.gmra.mrb[0].mxu0 %v616
      %v1287 = vpop.f32.mrb[0].mxu0
      %v1288 = vadd.f32 0.0, %v1287
      %v1289 = vpop.f32.mrb[0].mxu0
      %v1290 = vpop.f32.mrb[0].mxu0
      %v1291 = vadd.f32 0.0, %v1290
      %v1292 = vpop.f32.mrb[0].mxu0
      %1293 = vmatprep.mubr.bf16.mxu0 %v633
      %1294 = vmatmul.mubr.bf16.gmra.mrb[0].mxu0 %v617
      %v1295 = vpop.f32.mrb[0].mxu0
      %v1296 = vadd.f32 0.0, %v1295
      %v1297 = vpop.f32.mrb[0].mxu0
      %v1298 = vpop.f32.mrb[0].mxu0
      %v1299 = vadd.f32 0.0, %v1298
      %v1300 = vpop.f32.mrb[0].mxu0
      %1301 = vmatprep.mubr.bf16.mxu0 %v634
      %1302 = vmatmul.mubr.bf16.gmra.mrb[0].mxu0 %v618
      %v1303 = vpop.f32.mrb[0].mxu0
      %v1304 = vadd.f32 0.0, %v1303
      %v1305 = vpop.f32.mrb[0].mxu0
      %v1306 = vpop.f32.mrb[0].mxu0
      %v1307 = vadd.f32 0.0, %v1306
      %v1308 = vpop.f32.mrb[0].mxu0
      %1309 = vmatprep.mubr.bf16.mxu0 %v635
      %1310 = vmatmul.mubr.bf16.gmra.mrb[0].mxu0 %v619
      %v1311 = vpop.f32.mrb[0].mxu0
      %v1312 = vadd.f32 0.0, %v1311
      %v1313 = vpop.f32.mrb[0].mxu0
      %v1314 = vpop.f32.mrb[0].mxu0
      %v1315 = vadd.f32 0.0, %v1314
      %v1316 = vpop.f32.mrb[0].mxu0
      %1317 = vmatprep.mubr.bf16.mxu0 %v636
      %1318 = vmatmul.mubr.bf16.gmra.mrb[0].mxu0 %v620
      %v1319 = vpop.f32.mrb[0].mxu0
      %v1320 = vadd.f32 0.0, %v1319
      %v1321 = vpop.f32.mrb[0].mxu0
      %v1322 = vpop.f32.mrb[0].mxu0
      %v1323 = vadd.f32 0.0, %v1322
      %v1324 = vpop.f32.mrb[0].mxu0
      %1325 = vmatprep.mubr.bf16.mxu0 %v637
      %1326 = vmatmul.mubr.bf16.gmra.mrb[0].mxu0 %v621
      %v1327 = vpop.f32.mrb[0].mxu0
      %v1328 = vadd.f32 0.0, %v1327
      %v1329 = vpop.f32.mrb[0].mxu0
      %v1330 = vpop.f32.mrb[0].mxu0
      %v1331 = vadd.f32 0.0, %v1330
      %v1332 = vpop.f32.mrb[0].mxu0
      %1333 = vmatprep.mubr.bf16.mxu0 %v638
      %1334 = vmatmul.mubr.bf16.gmra.mrb[0].mxu0 %v622
      %v1335 = vpop.f32.mrb[0].mxu0
      %v1336 = vadd.f32 0.0, %v1335
      %v1337 = vpop.f32.mrb[0].mxu0
      %v1338 = vpop.f32.mrb[0].mxu0
      %v1339 = vadd.f32 0.0, %v1338
      %v1340 = vpop.f32.mrb[0].mxu0
      %1341 = vmatprep.mubr.bf16.mxu0 %v639
      %1342 = vmatmul.mubr.bf16.gmra.mrb[0].mxu0 %v623
      %v1343 = vpop.f32.mrb[0].mxu0
      %v1344 = vadd.f32 0.0, %v1343
      %v1345 = vpop.f32.mrb[0].mxu0
      %v1346 = vpop.f32.mrb[0].mxu0
      %v1347 = vadd.f32 0.0, %v1346
      %v1348 = vpop.f32.mrb[0].mxu0
      %1349 = vmatprep.mubr.bf16.mxu0 %v640
      %1350 = vmatmul.mubr.bf16.gmra.mrb[0].mxu0 %v624
      %v1351 = vpop.f32.mrb[0].mxu0
      %v1352 = vadd.f32 0.0, %v1351
      %v1353 = vpop.f32.mrb[0].mxu0
      %v1354 = vpop.f32.mrb[0].mxu0
      %v1355 = vadd.f32 0.0, %v1354
      %v1356 = vpop.f32.mrb[0].mxu0
      %1357 = vmatprep.mubr.bf16.mxu0 %v641
      %1358 = vmatmul.mubr.bf16.gmra.mrb[0].mxu0 %v625
      %v1359 = vpop.f32.mrb[0].mxu0
      %v1360 = vadd.f32 0.0, %v1359
      %v1361 = vpop.f32.mrb[0].mxu0
      %v1362 = vpop.f32.mrb[0].mxu0
      %v1363 = vadd.f32 0.0, %v1362
      %v1364 = vpop.f32.mrb[0].mxu0
      %1365 = vmatprep.mubr.bf16.mxu0 %v642
      %1366 = vmatmul.mubr.bf16.gmra.mrb[0].mxu0 %v626
      %v1367 = vpop.f32.mrb[0].mxu0
      %v1368 = vadd.f32 0.0, %v1367
      %v1369 = vpop.f32.mrb[0].mxu0
      %v1370 = vpop.f32.mrb[0].mxu0
      %v1371 = vadd.f32 0.0, %v1370
      %v1372 = vpop.f32.mrb[0].mxu0
      %1373 = vmatprep.mubr.bf16.mxu0 %v643
      %1374 = vmatmul.mubr.bf16.gmra.mrb[0].mxu0 %v627
      %v1375 = vpop.f32.mrb[0].mxu0
      %v1376 = vadd.f32 0.0, %v1375
      %v1377 = vpop.f32.mrb[0].mxu0
      %v1378 = vpop.f32.mrb[0].mxu0
      %v1379 = vadd.f32 0.0, %v1378
      %v1380 = vpop.f32.mrb[0].mxu0
      %1381 = vmatprep.mubr.bf16.mxu0 %v644
      %1382 = vmatmul.mubr.bf16.gmra.mrb[0].mxu0 %v628
      %v1383 = vpop.f32.mrb[0].mxu0
      %v1384 = vadd.f32 0.0, %v1383
      %v1385 = vpop.f32.mrb[0].mxu0
      %v1386 = vpop.f32.mrb[0].mxu0
      %v1387 = vadd.f32 0.0, %v1386
      %v1388 = vpop.f32.mrb[0].mxu0
      %1389 = vmatprep.mubr.bf16.mxu0 %v645
      %1390 = vmatmul.mubr.bf16.gmra.mrb[0].mxu0 %v629
      %v1391 = vpop.f32.mrb[0].mxu0
      %v1392 = vadd.f32 0.0, %v1391
      %v1393 = vpop.f32.mrb[0].mxu0
      %v1394 = vpop.f32.mrb[0].mxu0
      %v1395 = vadd.f32 0.0, %v1394
      %v1396 = vpop.f32.mrb[0].mxu0
      %1397 = vmatprep.mubr.bf16.mxu0 %v646
      %1398 = vmatmul.mubr.bf16.gmra.mrb[0].mxu0 %v630
      %v1399 = vpop.f32.mrb[0].mxu0
      %v1400 = vadd.f32 0.0, %v1399
      %v1401 = vpop.f32.mrb[0].mxu0
      %v1402 = vpop.f32.mrb[0].mxu0
      %v1403 = vadd.f32 0.0, %v1402
      %v1404 = vpop.f32.mrb[0].mxu0
      %1405 = vdwg.mxu0
      %1406 = vmatprep.subr.bf16.mxu0 0
      %1407 = vmatpush1.bf16.msra.mxu0 %v1117
      %1408 = vmatprep.subr.bf16.mxu0 0
      %1409 = vmatpush1.bf16.msra.mxu0 %v1118
      %1410 = vmatprep.subr.bf16.mxu0 0
      %1411 = vmatpush1.bf16.msra.mxu0 %v1119
      %1412 = vmatprep.subr.bf16.mxu0 0
      %1413 = vmatpush1.bf16.msra.mxu0 %v1120
      %1414 = vmatprep.subr.bf16.mxu0 0
      %1415 = vmatpush1.bf16.msra.mxu0 %v1121
      %1416 = vmatprep.subr.bf16.mxu0 0
      %1417 = vmatpush1.bf16.msra.mxu0 %v1122
      %1418 = vmatprep.subr.bf16.mxu0 0
      %1419 = vmatpush1.bf16.msra.mxu0 %v1123
      %1420 = vmatprep.subr.bf16.mxu0 0
      %1421 = vmatpush1.bf16.msra.mxu0 %v1124
      %1422 = vmatprep.subr.bf16.mxu0 0
      %1423 = vmatpush1.bf16.msra.mxu0 %v1125
      %1424 = vmatprep.subr.bf16.mxu0 0
      %1425 = vmatpush1.bf16.msra.mxu0 %v1126
      %1426 = vmatprep.subr.bf16.mxu0 0
      %1427 = vmatpush1.bf16.msra.mxu0 %v1127
      %1428 = vmatprep.subr.bf16.mxu0 0
      %1429 = vmatpush1.bf16.msra.mxu0 %v1128
      %1430 = vmatprep.subr.bf16.mxu0 0
      %1431 = vmatpush1.bf16.msra.mxu0 %v1129
      %1432 = vmatprep.subr.bf16.mxu0 0
      %1433 = vmatpush1.bf16.msra.mxu0 %v1130
      %1434 = vmatprep.subr.bf16.mxu0 0
      %1435 = vmatpush1.bf16.msra.mxu0 %v1131
      %1436 = vmatprep.subr.bf16.mxu0 0
      %1437 = vmatpush1.bf16.msra.mxu0 %v1132
      %1438 = vmatprep.mubr.bf16.mxu0 %v616
      %1439 = vmatmul.mubr.bf16.gmra.mrb[0].mxu0 %v647
      %v1440 = vpop.f32.mrb[0].mxu0
      %v1441 = vadd.f32 %v1280, %v1440
      %v1442 = vpop.f32.mrb[0].mxu0
      %v1443 = vpop.f32.mrb[0].mxu0
      %v1444 = vadd.f32 %v1283, %v1443
      %v1445 = vpop.f32.mrb[0].mxu0
      %1446 = vmatprep.mubr.bf16.mxu0 %v617
      %1447 = vmatmul.mubr.bf16.gmra.mrb[0].mxu0 %v648
      %v1448 = vpop.f32.mrb[0].mxu0
      %v1449 = vadd.f32 %v1288, %v1448
      %v1450 = vpop.f32.mrb[0].mxu0
      %v1451 = vpop.f32.mrb[0].mxu0
      %v1452 = vadd.f32 %v1291, %v1451
      %v1453 = vpop.f32.mrb[0].mxu0
      %1454 = vmatprep.mubr.bf16.mxu0 %v618
      %1455 = vmatmul.mubr.bf16.gmra.mrb[0].mxu0 %v649
      %v1456 = vpop.f32.mrb[0].mxu0
      %v1457 = vadd.f32 %v1296, %v1456
      %v1458 = vpop.f32.mrb[0].mxu0
      %v1459 = vpop.f32.mrb[0].mxu0
      %v1460 = vadd.f32 %v1299, %v1459
      %v1461 = vpop.f32.mrb[0].mxu0
      %1462 = vmatprep.mubr.bf16.mxu0 %v619
      %1463 = vmatmul.mubr.bf16.gmra.mrb[0].mxu0 %v650
      %v1464 = vpop.f32.mrb[0].mxu0
      %v1465 = vadd.f32 %v1304, %v1464
      %v1466 = vpop.f32.mrb[0].mxu0
      %v1467 = vpop.f32.mrb[0].mxu0
      %v1468 = vadd.f32 %v1307, %v1467
      %v1469 = vpop.f32.mrb[0].mxu0
      %1470 = vmatprep.mubr.bf16.mxu0 %v620
      %1471 = vmatmul.mubr.bf16.gmra.mrb[0].mxu0 %v651
      %v1472 = vpop.f32.mrb[0].mxu0
      %v1473 = vadd.f32 %v1312, %v1472
      %v1474 = vpop.f32.mrb[0].mxu0
      %v1475 = vpop.f32.mrb[0].mxu0
      %v1476 = vadd.f32 %v1315, %v1475
      %v1477 = vpop.f32.mrb[0].mxu0
      %1478 = vmatprep.mubr.bf16.mxu0 %v621
      %1479 = vmatmul.mubr.bf16.gmra.mrb[0].mxu0 %v652
      %v1480 = vpop.f32.mrb[0].mxu0
      %v1481 = vadd.f32 %v1320, %v1480
      %v1482 = vpop.f32.mrb[0].mxu0
      %v1483 = vpop.f32.mrb[0].mxu0
      %v1484 = vadd.f32 %v1323, %v1483
      %v1485 = vpop.f32.mrb[0].mxu0
      %1486 = vmatprep.mubr.bf16.mxu0 %v622
      %1487 = vmatmul.mubr.bf16.gmra.mrb[0].mxu0 %v653
      %v1488 = vpop.f32.mrb[0].mxu0
      %v1489 = vadd.f32 %v1328, %v1488
      %v1490 = vpop.f32.mrb[0].mxu0
      %v1491 = vpop.f32.mrb[0].mxu0
      %v1492 = vadd.f32 %v1331, %v1491
      %v1493 = vpop.f32.mrb[0].mxu0
      %1494 = vmatprep.mubr.bf16.mxu0 %v623
      %1495 = vmatmul.mubr.bf16.gmra.mrb[0].mxu0 %v654
      %v1496 = vpop.f32.mrb[0].mxu0
      %v1497 = vadd.f32 %v1336, %v1496
      %v1498 = vpop.f32.mrb[0].mxu0
      %v1499 = vpop.f32.mrb[0].mxu0
      %v1500 = vadd.f32 %v1339, %v1499
      %v1501 = vpop.f32.mrb[0].mxu0
      %1502 = vmatprep.mubr.bf16.mxu0 %v624
      %1503 = vmatmul.mubr.bf16.gmra.mrb[0].mxu0 %v655
      %v1504 = vpop.f32.mrb[0].mxu0
      %v1505 = vadd.f32 %v1344, %v1504
      %v1506 = vpop.f32.mrb[0].mxu0
      %v1507 = vpop.f32.mrb[0].mxu0
      %v1508 = vadd.f32 %v1347, %v1507
      %v1509 = vpop.f32.mrb[0].mxu0
      %1510 = vmatprep.mubr.bf16.mxu0 %v625
      %1511 = vmatmul.mubr.bf16.gmra.mrb[0].mxu0 %v656
      %v1512 = vpop.f32.mrb[0].mxu0
      %v1513 = vadd.f32 %v1352, %v1512
      %v1514 = vpop.f32.mrb[0].mxu0
      %v1515 = vpop.f32.mrb[0].mxu0
      %v1516 = vadd.f32 %v1355, %v1515
      %v1517 = vpop.f32.mrb[0].mxu0
      %1518 = vmatprep.mubr.bf16.mxu0 %v626
      %1519 = vmatmul.mubr.bf16.gmra.mrb[0].mxu0 %v657
      %v1520 = vpop.f32.mrb[0].mxu0
      %v1521 = vadd.f32 %v1360, %v1520
      %v1522 = vpop.f32.mrb[0].mxu0
      %v1523 = vpop.f32.mrb[0].mxu0
      %v1524 = vadd.f32 %v1363, %v1523
      %v1525 = vpop.f32.mrb[0].mxu0
      %1526 = vmatprep.mubr.bf16.mxu0 %v627
      %1527 = vmatmul.mubr.bf16.gmra.mrb[0].mxu0 %v658
      %v1528 = vpop.f32.mrb[0].mxu0
      %v1529 = vadd.f32 %v1368, %v1528
      %v1530 = vpop.f32.mrb[0].mxu0
      %v1531 = vpop.f32.mrb[0].mxu0
      %v1532 = vadd.f32 %v1371, %v1531
      %v1533 = vpop.f32.mrb[0].mxu0
      %1534 = vmatprep.mubr.bf16.mxu0 %v628
      %1535 = vmatmul.mubr.bf16.gmra.mrb[0].mxu0 %v659
      %v1536 = vpop.f32.mrb[0].mxu0
      %v1537 = vadd.f32 %v1376, %v1536
      %v1538 = vpop.f32.mrb[0].mxu0
      %v1539 = vpop.f32.mrb[0].mxu0
      %v1540 = vadd.f32 %v1379, %v1539
      %v1541 = vpop.f32.mrb[0].mxu0
      %1542 = vmatprep.mubr.bf16.mxu0 %v629
      %1543 = vmatmul.mubr.bf16.gmra.mrb[0].mxu0 %v660
      %v1544 = vpop.f32.mrb[0].mxu0
      %v1545 = vadd.f32 %v1384, %v1544
      %v1546 = vpop.f32.mrb[0].mxu0
      %v1547 = vpop.f32.mrb[0].mxu0
      %v1548 = vadd.f32 %v1387, %v1547
      %v1549 = vpop.f32.mrb[0].mxu0
      %1550 = vmatprep.mubr.bf16.mxu0 %v630
      %1551 = vmatmul.mubr.bf16.gmra.mrb[0].mxu0 %v661
      %v1552 = vpop.f32.mrb[0].mxu0
      %v1553 = vadd.f32 %v1392, %v1552
      %v1554 = vpop.f32.mrb[0].mxu0
      %v1555 = vpop.f32.mrb[0].mxu0
      %v1556 = vadd.f32 %v1395, %v1555
      %v1557 = vpop.f32.mrb[0].mxu0
      %1558 = vmatprep.mubr.bf16.mxu0 %v663
      %1559 = vmatmul.mubr.bf16.gmra.mrb[0].mxu0 %v662
      %v1560 = vpop.f32.mrb[0].mxu0
      %v1561 = vadd.f32 %v1400, %v1560
      %v1562 = vpop.f32.mrb[0].mxu0
      %v1563 = vpop.f32.mrb[0].mxu0
      %v1564 = vadd.f32 %v1403, %v1563
      %v1565 = vpop.f32.mrb[0].mxu0
      %1566 = vdwg.mxu0
      %1567 = vmatprep.subr.bf16.mxu0 0
      %1568 = vmatpush1.bf16.msra.mxu0 %v1133
      %1569 = vmatprep.subr.bf16.mxu0 0
      %1570 = vmatpush1.bf16.msra.mxu0 %v1134
      %1571 = vmatprep.subr.bf16.mxu0 0
      %1572 = vmatpush1.bf16.msra.mxu0 %v1135
      %1573 = vmatprep.subr.bf16.mxu0 0
      %1574 = vmatpush1.bf16.msra.mxu0 %v1136
      %1575 = vmatprep.subr.bf16.mxu0 0
      %1576 = vmatpush1.bf16.msra.mxu0 %v1137
      %1577 = vmatprep.subr.bf16.mxu0 0
      %1578 = vmatpush1.bf16.msra.mxu0 %v1138
      %1579 = vmatprep.subr.bf16.mxu0 0
      %1580 = vmatpush1.bf16.msra.mxu0 %v1139
      %1581 = vmatprep.subr.bf16.mxu0 0
      %1582 = vmatpush1.bf16.msra.mxu0 %v1140
      %1583 = vmatprep.subr.bf16.mxu0 0
      %1584 = vmatpush1.bf16.msra.mxu0 %v1141
      %1585 = vmatprep.subr.bf16.mxu0 0
      %1586 = vmatpush1.bf16.msra.mxu0 %v1142
      %1587 = vmatprep.subr.bf16.mxu0 0
      %1588 = vmatpush1.bf16.msra.mxu0 %v1143
      %1589 = vmatprep.subr.bf16.mxu0 0
      %1590 = vmatpush1.bf16.msra.mxu0 %v1144
      %1591 = vmatprep.subr.bf16.mxu0 0
      %1592 = vmatpush1.bf16.msra.mxu0 %v1145
      %1593 = vmatprep.subr.bf16.mxu0 0
      %1594 = vmatpush1.bf16.msra.mxu0 %v1146
      %1595 = vmatprep.subr.bf16.mxu0 0
      %1596 = vmatpush1.bf16.msra.mxu0 %v1147
      %1597 = vmatprep.subr.bf16.mxu0 0
      %1598 = vmatpush1.bf16.msra.mxu0 %v1148
      %1599 = vmatprep.mubr.bf16.mxu0 %v648
      %1600 = vmatmul.mubr.bf16.gmra.mrb[0].mxu0 %v632
      %v1601 = vpop.f32.mrb[0].mxu0
      %v1602 = vadd.f32 %v1441, %v1601
      %v1603 = vpop.f32.mrb[0].mxu0
      %v1604 = vpop.f32.mrb[0].mxu0
      %v1605 = vadd.f32 %v1444, %v1604
      %v1606 = vpop.f32.mrb[0].mxu0
      %1607 = vmatprep.mubr.bf16.mxu0 %v649
      %1608 = vmatmul.mubr.bf16.gmra.mrb[0].mxu0 %v633
      %v1609 = vpop.f32.mrb[0].mxu0
      %v1610 = vadd.f32 %v1449, %v1609
      %v1611 = vpop.f32.mrb[0].mxu0
      %v1612 = vpop.f32.mrb[0].mxu0
      %v1613 = vadd.f32 %v1452, %v1612
      %v1614 = vpop.f32.mrb[0].mxu0
      %1615 = vmatprep.mubr.bf16.mxu0 %v650
      %1616 = vmatmul.mubr.bf16.gmra.mrb[0].mxu0 %v634
      %v1617 = vpop.f32.mrb[0].mxu0
      %v1618 = vadd.f32 %v1457, %v1617
      %v1619 = vpop.f32.mrb[0].mxu0
      %v1620 = vpop.f32.mrb[0].mxu0
      %v1621 = vadd.f32 %v1460, %v1620
      %v1622 = vpop.f32.mrb[0].mxu0
      %1623 = vmatprep.mubr.bf16.mxu0 %v651
      %1624 = vmatmul.mubr.bf16.gmra.mrb[0].mxu0 %v635
      %v1625 = vpop.f32.mrb[0].mxu0
      %v1626 = vadd.f32 %v1465, %v1625
      %v1627 = vpop.f32.mrb[0].mxu0
      %v1628 = vpop.f32.mrb[0].mxu0
      %v1629 = vadd.f32 %v1468, %v1628
      %v1630 = vpop.f32.mrb[0].mxu0
      %1631 = vmatprep.mubr.bf16.mxu0 %v652
      %1632 = vmatmul.mubr.bf16.gmra.mrb[0].mxu0 %v636
      %v1633 = vpop.f32.mrb[0].mxu0
      %v1634 = vadd.f32 %v1473, %v1633
      %v1635 = vpop.f32.mrb[0].mxu0
      %v1636 = vpop.f32.mrb[0].mxu0
      %v1637 = vadd.f32 %v1476, %v1636
      %v1638 = vpop.f32.mrb[0].mxu0
      %1639 = vmatprep.mubr.bf16.mxu0 %v653
      %1640 = vmatmul.mubr.bf16.gmra.mrb[0].mxu0 %v637
      %v1641 = vpop.f32.mrb[0].mxu0
      %v1642 = vadd.f32 %v1481, %v1641
      %v1643 = vpop.f32.mrb[0].mxu0
      %v1644 = vpop.f32.mrb[0].mxu0
      %v1645 = vadd.f32 %v1484, %v1644
      %v1646 = vpop.f32.mrb[0].mxu0
      %1647 = vmatprep.mubr.bf16.mxu0 %v654
      %1648 = vmatmul.mubr.bf16.gmra.mrb[0].mxu0 %v638
      %v1649 = vpop.f32.mrb[0].mxu0
      %v1650 = vadd.f32 %v1489, %v1649
      %v1651 = vpop.f32.mrb[0].mxu0
      %v1652 = vpop.f32.mrb[0].mxu0
      %v1653 = vadd.f32 %v1492, %v1652
      %v1654 = vpop.f32.mrb[0].mxu0
      %1655 = vmatprep.mubr.bf16.mxu0 %v655
      %1656 = vmatmul.mubr.bf16.gmra.mrb[0].mxu0 %v639
      %v1657 = vpop.f32.mrb[0].mxu0
      %v1658 = vadd.f32 %v1497, %v1657
      %v1659 = vpop.f32.mrb[0].mxu0
      %v1660 = vpop.f32.mrb[0].mxu0
      %v1661 = vadd.f32 %v1500, %v1660
      %v1662 = vpop.f32.mrb[0].mxu0
      %1663 = vmatprep.mubr.bf16.mxu0 %v656
      %1664 = vmatmul.mubr.bf16.gmra.mrb[0].mxu0 %v640
      %v1665 = vpop.f32.mrb[0].mxu0
      %v1666 = vadd.f32 %v1505, %v1665
      %v1667 = vpop.f32.mrb[0].mxu0
      %v1668 = vpop.f32.mrb[0].mxu0
      %v1669 = vadd.f32 %v1508, %v1668
      %v1670 = vpop.f32.mrb[0].mxu0
      %1671 = vmatprep.mubr.bf16.mxu0 %v657
      %1672 = vmatmul.mubr.bf16.gmra.mrb[0].mxu0 %v641
      %v1673 = vpop.f32.mrb[0].mxu0
      %v1674 = vadd.f32 %v1513, %v1673
      %v1675 = vpop.f32.mrb[0].mxu0
      %v1676 = vpop.f32.mrb[0].mxu0
      %v1677 = vadd.f32 %v1516, %v1676
      %v1678 = vpop.f32.mrb[0].mxu0
      %1679 = vmatprep.mubr.bf16.mxu0 %v658
      %1680 = vmatmul.mubr.bf16.gmra.mrb[0].mxu0 %v642
      %v1681 = vpop.f32.mrb[0].mxu0
      %v1682 = vadd.f32 %v1521, %v1681
      %v1683 = vpop.f32.mrb[0].mxu0
      %v1684 = vpop.f32.mrb[0].mxu0
      %v1685 = vadd.f32 %v1524, %v1684
      %v1686 = vpop.f32.mrb[0].mxu0
      %1687 = vmatprep.mubr.bf16.mxu0 %v659
      %1688 = vmatmul.mubr.bf16.gmra.mrb[0].mxu0 %v643
      %v1689 = vpop.f32.mrb[0].mxu0
      %v1690 = vadd.f32 %v1529, %v1689
      %v1691 = vpop.f32.mrb[0].mxu0
      %v1692 = vpop.f32.mrb[0].mxu0
      %v1693 = vadd.f32 %v1532, %v1692
      %v1694 = vpop.f32.mrb[0].mxu0
      %1695 = vmatprep.mubr.bf16.mxu0 %v660
      %1696 = vmatmul.mubr.bf16.gmra.mrb[0].mxu0 %v644
      %v1697 = vpop.f32.mrb[0].mxu0
      %v1698 = vadd.f32 %v1537, %v1697
      %v1699 = vpop.f32.mrb[0].mxu0
      %v1700 = vpop.f32.mrb[0].mxu0
      %v1701 = vadd.f32 %v1540, %v1700
      %v1702 = vpop.f32.mrb[0].mxu0
      %1703 = vmatprep.mubr.bf16.mxu0 %v661
      %1704 = vmatmul.mubr.bf16.gmra.mrb[0].mxu0 %v645
      %v1705 = vpop.f32.mrb[0].mxu0
      %v1706 = vadd.f32 %v1545, %v1705
      %v1707 = vpop.f32.mrb[0].mxu0
      %v1708 = vpop.f32.mrb[0].mxu0
      %v1709 = vadd.f32 %v1548, %v1708
      %v1710 = vpop.f32.mrb[0].mxu0
      %1711 = vmatprep.mubr.bf16.mxu0 %v662
      %1712 = vmatmul.mubr.bf16.gmra.mrb[0].mxu0 %v646
      %v1713 = vpop.f32.mrb[0].mxu0
      %v1714 = vadd.f32 %v1553, %v1713
      %v1715 = vpop.f32.mrb[0].mxu0
      %v1716 = vpop.f32.mrb[0].mxu0
      %v1717 = vadd.f32 %v1556, %v1716
      %v1718 = vpop.f32.mrb[0].mxu0
      %1719 = vmatprep.mubr.bf16.mxu0 %v665
      %1720 = vmatmul.mubr.bf16.gmra.mrb[0].mxu0 %v664
      %v1721 = vpop.f32.mrb[0].mxu0
      %v1722 = vadd.f32 %v1561, %v1721
      %v1723 = vpop.f32.mrb[0].mxu0
      %v1724 = vpop.f32.mrb[0].mxu0
      %v1725 = vadd.f32 %v1564, %v1724
      %v1726 = vpop.f32.mrb[0].mxu0
      %1727 = vdwg.mxu0
      %1728 = vmatprep.subr.bf16.mxu0 0
      %1729 = vmatpush1.bf16.msra.mxu0 %v1149
      %1730 = vmatprep.subr.bf16.mxu0 0
      %1731 = vmatpush1.bf16.msra.mxu0 %v1150
      %1732 = vmatprep.subr.bf16.mxu0 0
      %1733 = vmatpush1.bf16.msra.mxu0 %v1151
      %1734 = vmatprep.subr.bf16.mxu0 0
      %1735 = vmatpush1.bf16.msra.mxu0 %v1152
      %1736 = vmatprep.subr.bf16.mxu0 0
      %1737 = vmatpush1.bf16.msra.mxu0 %v1153
      %1738 = vmatprep.subr.bf16.mxu0 0
      %1739 = vmatpush1.bf16.msra.mxu0 %v1154
      %1740 = vmatprep.subr.bf16.mxu0 0
      %1741 = vmatpush1.bf16.msra.mxu0 %v1155
      %1742 = vmatprep.subr.bf16.mxu0 0
      %1743 = vmatpush1.bf16.msra.mxu0 %v1156
      %1744 = vmatprep.subr.bf16.mxu0 0
      %1745 = vmatpush1.bf16.msra.mxu0 %v1157
      %1746 = vmatprep.subr.bf16.mxu0 0
      %1747 = vmatpush1.bf16.msra.mxu0 %v1158
      %1748 = vmatprep.subr.bf16.mxu0 0
      %1749 = vmatpush1.bf16.msra.mxu0 %v1159
      %1750 = vmatprep.subr.bf16.mxu0 0
      %1751 = vmatpush1.bf16.msra.mxu0 %v1160
      %1752 = vmatprep.subr.bf16.mxu0 0
      %1753 = vmatpush1.bf16.msra.mxu0 %v1161
      %1754 = vmatprep.subr.bf16.mxu0 0
      %1755 = vmatpush1.bf16.msra.mxu0 %v1162
      %1756 = vmatprep.subr.bf16.mxu0 0
      %1757 = vmatpush1.bf16.msra.mxu0 %v1163
      %1758 = vmatprep.subr.bf16.mxu0 0
      %1759 = vmatpush1.bf16.msra.mxu0 %v1164
      %1760 = vmatprep.mubr.bf16.mxu0 %v633
      %1761 = vmatmul.mubr.bf16.gmra.mrb[0].mxu0 %v617
      %v1762 = vpop.f32.mrb[0].mxu0
      %v1763 = vadd.f32 %v1602, %v1762
      %v1764 = vpop.f32.mrb[0].mxu0
      %v1765 = vpop.f32.mrb[0].mxu0
      %v1766 = vadd.f32 %v1605, %v1765
      %v1767 = vpop.f32.mrb[0].mxu0
      %1768 = vmatprep.mubr.bf16.mxu0 %v634
      %1769 = vmatmul.mubr.bf16.gmra.mrb[0].mxu0 %v618
      %v1770 = vpop.f32.mrb[0].mxu0
      %v1771 = vadd.f32 %v1610, %v1770
      %v1772 = vpop.f32.mrb[0].mxu0
      %v1773 = vpop.f32.mrb[0].mxu0
      %v1774 = vadd.f32 %v1613, %v1773
      %v1775 = vpop.f32.mrb[0].mxu0
      %1776 = vmatprep.mubr.bf16.mxu0 %v635
      %1777 = vmatmul.mubr.bf16.gmra.mrb[0].mxu0 %v619
      %v1778 = vpop.f32.mrb[0].mxu0
      %v1779 = vadd.f32 %v1618, %v1778
      %v1780 = vpop.f32.mrb[0].mxu0
      %v1781 = vpop.f32.mrb[0].mxu0
      %v1782 = vadd.f32 %v1621, %v1781
      %v1783 = vpop.f32.mrb[0].mxu0
      %1784 = vmatprep.mubr.bf16.mxu0 %v636
      %1785 = vmatmul.mubr.bf16.gmra.mrb[0].mxu0 %v620
      %v1786 = vpop.f32.mrb[0].mxu0
      %v1787 = vadd.f32 %v1626, %v1786
      %v1788 = vpop.f32.mrb[0].mxu0
      %v1789 = vpop.f32.mrb[0].mxu0
      %v1790 = vadd.f32 %v1629, %v1789
      %v1791 = vpop.f32.mrb[0].mxu0
      %1792 = vmatprep.mubr.bf16.mxu0 %v637
      %1793 = vmatmul.mubr.bf16.gmra.mrb[0].mxu0 %v621
      %v1794 = vpop.f32.mrb[0].mxu0
      %v1795 = vadd.f32 %v1634, %v1794
      %v1796 = vpop.f32.mrb[0].mxu0
      %v1797 = vpop.f32.mrb[0].mxu0
      %v1798 = vadd.f32 %v1637, %v1797
      %v1799 = vpop.f32.mrb[0].mxu0
      %1800 = vmatprep.mubr.bf16.mxu0 %v638
      %1801 = vmatmul.mubr.bf16.gmra.mrb[0].mxu0 %v622
      %v1802 = vpop.f32.mrb[0].mxu0
      %v1803 = vadd.f32 %v1642, %v1802
      %v1804 = vpop.f32.mrb[0].mxu0
      %v1805 = vpop.f32.mrb[0].mxu0
      %v1806 = vadd.f32 %v1645, %v1805
      %v1807 = vpop.f32.mrb[0].mxu0
      %1808 = vmatprep.mubr.bf16.mxu0 %v639
      %1809 = vmatmul.mubr.bf16.gmra.mrb[0].mxu0 %v623
      %v1810 = vpop.f32.mrb[0].mxu0
      %v1811 = vadd.f32 %v1650, %v1810
      %v1812 = vpop.f32.mrb[0].mxu0
      %v1813 = vpop.f32.mrb[0].mxu0
      %v1814 = vadd.f32 %v1653, %v1813
      %v1815 = vpop.f32.mrb[0].mxu0
      %1816 = vmatprep.mubr.bf16.mxu0 %v640
      %1817 = vmatmul.mubr.bf16.gmra.mrb[0].mxu0 %v624
      %v1818 = vpop.f32.mrb[0].mxu0
      %v1819 = vadd.f32 %v1658, %v1818
      %v1820 = vpop.f32.mrb[0].mxu0
      %v1821 = vpop.f32.mrb[0].mxu0
      %v1822 = vadd.f32 %v1661, %v1821
      %v1823 = vpop.f32.mrb[0].mxu0
      %1824 = vmatprep.mubr.bf16.mxu0 %v641
      %1825 = vmatmul.mubr.bf16.gmra.mrb[0].mxu0 %v625
      %v1826 = vpop.f32.mrb[0].mxu0
      %v1827 = vadd.f32 %v1666, %v1826
      %v1828 = vpop.f32.mrb[0].mxu0
      %v1829 = vpop.f32.mrb[0].mxu0
      %v1830 = vadd.f32 %v1669, %v1829
      %v1831 = vpop.f32.mrb[0].mxu0
      %1832 = vmatprep.mubr.bf16.mxu0 %v642
      %1833 = vmatmul.mubr.bf16.gmra.mrb[0].mxu0 %v626
      %v1834 = vpop.f32.mrb[0].mxu0
      %v1835 = vadd.f32 %v1674, %v1834
      %v1836 = vpop.f32.mrb[0].mxu0
      %v1837 = vpop.f32.mrb[0].mxu0
      %v1838 = vadd.f32 %v1677, %v1837
      %v1839 = vpop.f32.mrb[0].mxu0
      %1840 = vmatprep.mubr.bf16.mxu0 %v643
      %1841 = vmatmul.mubr.bf16.gmra.mrb[0].mxu0 %v627
      %v1842 = vpop.f32.mrb[0].mxu0
      %v1843 = vadd.f32 %v1682, %v1842
      %v1844 = vpop.f32.mrb[0].mxu0
      %v1845 = vpop.f32.mrb[0].mxu0
      %v1846 = vadd.f32 %v1685, %v1845
      %v1847 = vpop.f32.mrb[0].mxu0
      %1848 = vmatprep.mubr.bf16.mxu0 %v644
      %1849 = vmatmul.mubr.bf16.gmra.mrb[0].mxu0 %v628
      %v1850 = vpop.f32.mrb[0].mxu0
      %v1851 = vadd.f32 %v1690, %v1850
      %v1852 = vpop.f32.mrb[0].mxu0
      %v1853 = vpop.f32.mrb[0].mxu0
      %v1854 = vadd.f32 %v1693, %v1853
      %v1855 = vpop.f32.mrb[0].mxu0
      %1856 = vmatprep.mubr.bf16.mxu0 %v645
      %1857 = vmatmul.mubr.bf16.gmra.mrb[0].mxu0 %v629
      %v1858 = vpop.f32.mrb[0].mxu0
      %v1859 = vadd.f32 %v1698, %v1858
      %v1860 = vpop.f32.mrb[0].mxu0
      %v1861 = vpop.f32.mrb[0].mxu0
      %v1862 = vadd.f32 %v1701, %v1861
      %v1863 = vpop.f32.mrb[0].mxu0
      %1864 = vmatprep.mubr.bf16.mxu0 %v646
      %1865 = vmatmul.mubr.bf16.gmra.mrb[0].mxu0 %v630
      %v1866 = vpop.f32.mrb[0].mxu0
      %v1867 = vadd.f32 %v1706, %v1866
      %v1868 = vpop.f32.mrb[0].mxu0
      %v1869 = vpop.f32.mrb[0].mxu0
      %v1870 = vadd.f32 %v1709, %v1869
      %v1871 = vpop.f32.mrb[0].mxu0
      %1872 = vmatprep.mubr.bf16.mxu0 %v664
      %1873 = vmatmul.mubr.bf16.gmra.mrb[0].mxu0 %v663
      %v1874 = vpop.f32.mrb[0].mxu0
      %v1875 = vadd.f32 %v1714, %v1874
      %v1876 = vpop.f32.mrb[0].mxu0
      %v1877 = vpop.f32.mrb[0].mxu0
      %v1878 = vadd.f32 %v1717, %v1877
      %v1879 = vpop.f32.mrb[0].mxu0
      %1880 = vmatprep.mubr.bf16.mxu0 %v667
      %1881 = vmatmul.mubr.bf16.gmra.mrb[0].mxu0 %v666
      %v1882 = vpop.f32.mrb[0].mxu0
      %v1883 = vadd.f32 %v1722, %v1882
      %v1884 = vpop.f32.mrb[0].mxu0
      %v1885 = vpop.f32.mrb[0].mxu0
      %v1886 = vadd.f32 %v1725, %v1885
      %v1887 = vpop.f32.mrb[0].mxu0
      %1888 = vdwg.mxu0
      %1889 = vmatprep.subr.bf16.mxu0 0
      %1890 = vmatpush1.bf16.msra.mxu0 %v1165
      %1891 = vmatprep.subr.bf16.mxu0 0
      %1892 = vmatpush1.bf16.msra.mxu0 %v1166
      %1893 = vmatprep.subr.bf16.mxu0 0
      %1894 = vmatpush1.bf16.msra.mxu0 %v1167
      %1895 = vmatprep.subr.bf16.mxu0 0
      %1896 = vmatpush1.bf16.msra.mxu0 %v1168
      %1897 = vmatprep.subr.bf16.mxu0 0
      %1898 = vmatpush1.bf16.msra.mxu0 %v1169
      %1899 = vmatprep.subr.bf16.mxu0 0
      %1900 = vmatpush1.bf16.msra.mxu0 %v1170
      %1901 = vmatprep.subr.bf16.mxu0 0
      %1902 = vmatpush1.bf16.msra.mxu0 %v1171
      %1903 = vmatprep.subr.bf16.mxu0 0
      %1904 = vmatpush1.bf16.msra.mxu0 %v1172
      %1905 = vmatprep.subr.bf16.mxu0 0
      %1906 = vmatpush1.bf16.msra.mxu0 0
      %1907 = vmatprep.subr.bf16.mxu0 0
      %1908 = vmatpush1.bf16.msra.mxu0 0
      %1909 = vmatprep.subr.bf16.mxu0 0
      %1910 = vmatpush1.bf16.msra.mxu0 0
      %1911 = vmatprep.subr.bf16.mxu0 0
      %1912 = vmatpush1.bf16.msra.mxu0 0
      %1913 = vmatprep.subr.bf16.mxu0 0
      %1914 = vmatpush1.bf16.msra.mxu0 0
      %1915 = vmatprep.subr.bf16.mxu0 0
      %1916 = vmatpush1.bf16.msra.mxu0 0
      %1917 = vmatprep.subr.bf16.mxu0 0
      %1918 = vmatpush1.bf16.msra.mxu0 0
      %1919 = vmatprep.subr.bf16.mxu0 0
      %1920 = vmatpush1.bf16.msra.mxu0 0
      %1921 = vmatprep.mubr.bf16.mxu0 0
      %1922 = vmatmul.mubr.bf16.gmra.mrb[0].mxu0 %v649
      %v1923 = vpop.f32.mrb[0].mxu0
      %v1924 = vadd.f32 %v1763, %v1923
      %v1925 = vpop.f32.mrb[0].mxu0
      %v1926 = vpop.f32.mrb[0].mxu0
      %v1927 = vadd.f32 %v1766, %v1926
      %v1928 = vpop.f32.mrb[0].mxu0
      %1929 = vmatprep.mubr.bf16.mxu0 0
      %1930 = vmatmul.mubr.bf16.gmra.mrb[0].mxu0 %v650
      %v1931 = vpop.f32.mrb[0].mxu0
      %v1932 = vadd.f32 %v1771, %v1931
      %v1933 = vpop.f32.mrb[0].mxu0
      %v1934 = vpop.f32.mrb[0].mxu0
      %v1935 = vadd.f32 %v1774, %v1934
      %v1936 = vpop.f32.mrb[0].mxu0
      %1937 = vmatprep.mubr.bf16.mxu0 0
      %1938 = vmatmul.mubr.bf16.gmra.mrb[0].mxu0 %v651
      %v1939 = vpop.f32.mrb[0].mxu0
      %v1940 = vadd.f32 %v1779, %v1939
      %v1941 = vpop.f32.mrb[0].mxu0
      %v1942 = vpop.f32.mrb[0].mxu0
      %v1943 = vadd.f32 %v1782, %v1942
      %v1944 = vpop.f32.mrb[0].mxu0
      %1945 = vmatprep.mubr.bf16.mxu0 0
      %1946 = vmatmul.mubr.bf16.gmra.mrb[0].mxu0 %v652
      %v1947 = vpop.f32.mrb[0].mxu0
      %v1948 = vadd.f32 %v1787, %v1947
      %v1949 = vpop.f32.mrb[0].mxu0
      %v1950 = vpop.f32.mrb[0].mxu0
      %v1951 = vadd.f32 %v1790, %v1950
      %v1952 = vpop.f32.mrb[0].mxu0
      %1953 = vmatprep.mubr.bf16.mxu0 0
      %1954 = vmatmul.mubr.bf16.gmra.mrb[0].mxu0 %v653
      %v1955 = vpop.f32.mrb[0].mxu0
      %v1956 = vadd.f32 %v1795, %v1955
      %v1957 = vpop.f32.mrb[0].mxu0
      %v1958 = vpop.f32.mrb[0].mxu0
      %v1959 = vadd.f32 %v1798, %v1958
      %v1960 = vpop.f32.mrb[0].mxu0
      %1961 = vmatprep.mubr.bf16.mxu0 0
      %1962 = vmatmul.mubr.bf16.gmra.mrb[0].mxu0 %v654
      %v1963 = vpop.f32.mrb[0].mxu0
      %v1964 = vadd.f32 %v1803, %v1963
      %v1965 = vpop.f32.mrb[0].mxu0
      %v1966 = vpop.f32.mrb[0].mxu0
      %v1967 = vadd.f32 %v1806, %v1966
      %v1968 = vpop.f32.mrb[0].mxu0
      %1969 = vmatprep.mubr.bf16.mxu0 0
      %1970 = vmatmul.mubr.bf16.gmra.mrb[0].mxu0 %v655
      %v1971 = vpop.f32.mrb[0].mxu0
      %v1972 = vadd.f32 %v1811, %v1971
      %v1973 = vpop.f32.mrb[0].mxu0
      %v1974 = vpop.f32.mrb[0].mxu0
      %v1975 = vadd.f32 %v1814, %v1974
      %v1976 = vpop.f32.mrb[0].mxu0
      %1977 = vmatprep.mubr.bf16.mxu0 0
      %1978 = vmatmul.mubr.bf16.gmra.mrb[0].mxu0 %v656
      %v1979 = vpop.f32.mrb[0].mxu0
      %v1980 = vadd.f32 %v1819, %v1979
      %v1981 = vpop.f32.mrb[0].mxu0
      %v1982 = vpop.f32.mrb[0].mxu0
      %v1983 = vadd.f32 %v1822, %v1982
      %v1984 = vpop.f32.mrb[0].mxu0
      %1985 = vmatprep.mubr.bf16.mxu0 0
      %1986 = vmatmul.mubr.bf16.gmra.mrb[0].mxu0 %v657
      %v1987 = vpop.f32.mrb[0].mxu0
      %v1988 = vadd.f32 %v1827, %v1987
      %v1989 = vpop.f32.mrb[0].mxu0
      %v1990 = vpop.f32.mrb[0].mxu0
      %v1991 = vadd.f32 %v1830, %v1990
      %v1992 = vpop.f32.mrb[0].mxu0
      %1993 = vmatprep.mubr.bf16.mxu0 0
      %1994 = vmatmul.mubr.bf16.gmra.mrb[0].mxu0 %v658
      %v1995 = vpop.f32.mrb[0].mxu0
      %v1996 = vadd.f32 %v1835, %v1995
      %v1997 = vpop.f32.mrb[0].mxu0
      %v1998 = vpop.f32.mrb[0].mxu0
      %v1999 = vadd.f32 %v1838, %v1998
      %v2000 = vpop.f32.mrb[0].mxu0
      %2001 = vmatprep.mubr.bf16.mxu0 0
      %2002 = vmatmul.mubr.bf16.gmra.mrb[0].mxu0 %v659
      %v2003 = vpop.f32.mrb[0].mxu0
      %v2004 = vadd.f32 %v1843, %v2003
      %v2005 = vpop.f32.mrb[0].mxu0
      %v2006 = vpop.f32.mrb[0].mxu0
      %v2007 = vadd.f32 %v1846, %v2006
      %v2008 = vpop.f32.mrb[0].mxu0
      %2009 = vmatprep.mubr.bf16.mxu0 0
      %2010 = vmatmul.mubr.bf16.gmra.mrb[0].mxu0 %v660
      %v2011 = vpop.f32.mrb[0].mxu0
      %v2012 = vadd.f32 %v1851, %v2011
      %v2013 = vpop.f32.mrb[0].mxu0
      %v2014 = vpop.f32.mrb[0].mxu0
      %v2015 = vadd.f32 %v1854, %v2014
      %v2016 = vpop.f32.mrb[0].mxu0
      %2017 = vmatprep.mubr.bf16.mxu0 0
      %2018 = vmatmul.mubr.bf16.gmra.mrb[0].mxu0 %v661
      %v2019 = vpop.f32.mrb[0].mxu0
      %v2020 = vadd.f32 %v1859, %v2019
      %v2021 = vpop.f32.mrb[0].mxu0
      %v2022 = vpop.f32.mrb[0].mxu0
      %v2023 = vadd.f32 %v1862, %v2022
      %v2024 = vpop.f32.mrb[0].mxu0
      %2025 = vmatprep.mubr.bf16.mxu0 0
      %2026 = vmatmul.mubr.bf16.gmra.mrb[0].mxu0 %v662
      %v2027 = vpop.f32.mrb[0].mxu0
      %v2028 = vadd.f32 %v1867, %v2027
      %v2029 = vpop.f32.mrb[0].mxu0
      %v2030 = vpop.f32.mrb[0].mxu0
      %v2031 = vadd.f32 %v1870, %v2030
      %v2032 = vpop.f32.mrb[0].mxu0
      %2033 = vmatprep.mubr.bf16.mxu0 0
      %2034 = vmatmul.mubr.bf16.gmra.mrb[0].mxu0 %v665
      %v2035 = vpop.f32.mrb[0].mxu0
      %v2036 = vadd.f32 %v1875, %v2035
      %v2037 = vpop.f32.mrb[0].mxu0
      %v2038 = vpop.f32.mrb[0].mxu0
      %v2039 = vadd.f32 %v1878, %v2038
      %v2040 = vpop.f32.mrb[0].mxu0
      %2041 = vmatprep.mubr.bf16.mxu0 0
      %2042 = vmatmul.mubr.bf16.gmra.mrb[0].mxu0 %v668
      %v2043 = vpop.f32.mrb[0].mxu0
      %v2044 = vadd.f32 %v1883, %v2043
      %v2045 = vpop.f32.mrb[0].mxu0
      %v2046 = vpop.f32.mrb[0].mxu0
      %v2047 = vadd.f32 %v1886, %v2046
      %v2048 = vpop.f32.mrb[0].mxu0
      %2049 = vdwg.mxu0
      %v2050 = vpack.c.bf16 %v1927, %v1924
      %v2051 = vpack.c.bf16 %v1935, %v1932
      %v2052 = vpack.c.bf16 %v1943, %v1940
      %v2053 = vpack.c.bf16 %v1951, %v1948
      %v2054 = vpack.c.bf16 %v1959, %v1956
      %v2055 = vpack.c.bf16 %v1967, %v1964
      %v2056 = vpack.c.bf16 %v1975, %v1972
      %v2057 = vpack.c.bf16 %v1983, %v1980
      %v2058 = vpack.c.bf16 %v1991, %v1988
      %v2059 = vpack.c.bf16 %v1999, %v1996
      %v2060 = vpack.c.bf16 %v2007, %v2004
      %v2061 = vpack.c.bf16 %v2015, %v2012
      %v2062 = vpack.c.bf16 %v2023, %v2020
      %v2063 = vpack.c.bf16 %v2031, %v2028
      %v2064 = vpack.c.bf16 %v2039, %v2036
      %v2065 = vpack.c.bf16 %v2047, %v2044
      %v2082 = vunpack.c.l.b16 %v2050
      %v2083 = vunpack.c.h.b16 %v2050
      %v2084 = vunpack.c.l.b16 %v2051
      %v2085 = vunpack.c.h.b16 %v2051
      %v2086 = vunpack.c.l.b16 %v2052
      %v2087 = vunpack.c.h.b16 %v2052
      %v2088 = vunpack.c.l.b16 %v2053
      %v2089 = vunpack.c.h.b16 %v2053
      %v2090 = vunpack.c.l.b16 %v2054
      %v2091 = vunpack.c.h.b16 %v2054
      %v2092 = vunpack.c.l.b16 %v2055
      %v2093 = vunpack.c.h.b16 %v2055
      %v2094 = vunpack.c.l.b16 %v2056
      %v2095 = vunpack.c.h.b16 %v2056
      %v2096 = vunpack.c.l.b16 %v2057
      %v2097 = vunpack.c.h.b16 %v2057
      %v2098 = vunpack.c.l.b16 %v2058
      %v2099 = vunpack.c.h.b16 %v2058
      %v2100 = vunpack.c.l.b16 %v2059
      %v2101 = vunpack.c.h.b16 %v2059
      %v2102 = vunpack.c.l.b16 %v2060
      %v2103 = vunpack.c.h.b16 %v2060
      %v2104 = vunpack.c.l.b16 %v2061
      %v2105 = vunpack.c.h.b16 %v2061
      %v2106 = vunpack.c.l.b16 %v2062
      %v2107 = vunpack.c.h.b16 %v2062
      %v2108 = vunpack.c.l.b16 %v2063
      %v2109 = vunpack.c.h.b16 %v2063
      %v2110 = vunpack.c.l.b16 %v2064
      %v2111 = vunpack.c.h.b16 %v2064
      %v2112 = vunpack.c.l.b16 %v2065
      %v2113 = vunpack.c.h.b16 %v2065
      %v2114 = vpack.c.b16 %v2082, %v2082
      %v2115 = vpack.c.b16 %v2083, %v2083
      %v2116 = vpack.c.b16 %v2084, %v2084
      %v2117 = vpack.c.b16 %v2085, %v2085
      %v2118 = vpack.c.b16 %v2086, %v2086
      %v2119 = vpack.c.b16 %v2087, %v2087
      %v2120 = vpack.c.b16 %v2088, %v2088
      %v2121 = vpack.c.b16 %v2089, %v2089
      %v2122 = vpack.c.b16 %v2090, %v2090
      %v2123 = vpack.c.b16 %v2091, %v2091
      %v2124 = vpack.c.b16 %v2092, %v2092
      %v2125 = vpack.c.b16 %v2093, %v2093
      %v2126 = vpack.c.b16 %v2094, %v2094
      %v2127 = vpack.c.b16 %v2095, %v2095
      %v2128 = vpack.c.b16 %v2096, %v2096
      %v2129 = vpack.c.b16 %v2097, %v2097
      %v2130 = vpack.c.b16 %v2098, %v2098
      %v2131 = vpack.c.b16 %v2099, %v2099
      %v2132 = vpack.c.b16 %v2100, %v2100
      %v2133 = vpack.c.b16 %v2101, %v2101
      %v2134 = vpack.c.b16 %v2102, %v2102
      %v2135 = vpack.c.b16 %v2103, %v2103
      %v2136 = vpack.c.b16 %v2104, %v2104
      %v2137 = vpack.c.b16 %v2105, %v2105
      %v2138 = vpack.c.b16 %v2106, %v2106
      %v2139 = vpack.c.b16 %v2107, %v2107
      %v2140 = vpack.c.b16 %v2108, %v2108
      %v2141 = vpack.c.b16 %v2109, %v2109
      %v2142 = vpack.c.b16 %v2110, %v2110
      %v2143 = vpack.c.b16 %v2111, %v2111
      %v2144 = vpack.c.b16 %v2112, %v2112
      %v2145 = vpack.c.b16 %v2113, %v2113
      %2178 = vst [vmem:[%s231] sm:$0xf] %v2114
      %2179 = vst [vmem:[%s231 + $0x4] sm:$0xf] %v2115
      %2180 = vst [vmem:[%s231 + $0x8] sm:$0xf] %v2116
      %2181 = vst [vmem:[%s231 + $0xc] sm:$0xf] %v2117
      %2182 = vst [vmem:[%s231 + $0x10] sm:$0xf] %v2118
      %2183 = vst [vmem:[%s231 + $0x14] sm:$0xf] %v2119
      %2184 = vst [vmem:[%s231 + $0x18] sm:$0xf] %v2120
      %2185 = vst [vmem:[%s231 + $0x1c] sm:$0xf] %v2121
      %2186 = vst [vmem:[%s231 + $0x20] sm:$0xf] %v2122
      %2187 = vst [vmem:[%s231 + $0x24] sm:$0xf] %v2123
      %2188 = vst [vmem:[%s231 + $0x28] sm:$0xf] %v2124
      %2189 = vst [vmem:[%s231 + $0x2c] sm:$0xf] %v2125
      %2190 = vst [vmem:[%s231 + $0x30] sm:$0xf] %v2126
      %2191 = vst [vmem:[%s231 + $0x34] sm:$0xf] %v2127
      %2192 = vst [vmem:[%s231 + $0x38] sm:$0xf] %v2128
      %2193 = vst [vmem:[%s231 + $0x3c] sm:$0xf] %v2129
      %2194 = vst [vmem:[%s231 + $0x40] sm:$0xf] %v2130
      %2195 = vst [vmem:[%s231 + $0x44] sm:$0xf] %v2131
      %2196 = vst [vmem:[%s231 + $0x48] sm:$0xf] %v2132
      %2197 = vst [vmem:[%s231 + $0x4c] sm:$0xf] %v2133
      %2198 = vst [vmem:[%s231 + $0x50] sm:$0xf] %v2134
      %2199 = vst [vmem:[%s231 + $0x54] sm:$0xf] %v2135
      %2200 = vst [vmem:[%s231 + $0x58] sm:$0xf] %v2136
      %2201 = vst [vmem:[%s231 + $0x5c] sm:$0xf] %v2137
      %2202 = vst [vmem:[%s231 + $0x60] sm:$0xf] %v2138
      %2203 = vst [vmem:[%s231 + $0x64] sm:$0xf] %v2139
      %2204 = vst [vmem:[%s231 + $0x68] sm:$0xf] %v2140
      %2205 = vst [vmem:[%s231 + $0x6c] sm:$0xf] %v2141
      %2206 = vst [vmem:[%s231 + $0x70] sm:$0xf] %v2142
      %2207 = vst [vmem:[%s231 + $0x74] sm:$0xf] %v2143
      %2208 = vst [vmem:[%s231 + $0x78] sm:$0xf] %v2144
      %2209 = vst [vmem:[%s231 + $0x7c] sm:$0xf] %v2145
      %v2210 = vadd.f32 %v1924, %v1927
      %v2211 = vadd.f32 %v2210, %v1932
      %v2212 = vadd.f32 %v2211, %v1935
      %v2213 = vadd.f32 %v2212, %v1940
      %v2214 = vadd.f32 %v2213, %v1943
      %v2215 = vadd.f32 %v2214, %v1948
      %v2216 = vadd.f32 %v2215, %v1951
      %v2217 = vadd.f32 %v2216, %v1956
      %v2218 = vadd.f32 %v2217, %v1959
      %v2219 = vadd.f32 %v2218, %v1964
      %v2220 = vadd.f32 %v2219, %v1967
      %v2221 = vadd.f32 %v2220, %v1972
      %v2222 = vadd.f32 %v2221, %v1975
      %v2223 = vadd.f32 %v2222, %v1980
      %v2224 = vadd.f32 %v2223, %v1983
      %v2225 = vadd.f32 %v2224, %v1988
      %v2226 = vadd.f32 %v2225, %v1991
      %v2227 = vadd.f32 %v2226, %v1996
      %v2228 = vadd.f32 %v2227, %v1999
      %v2229 = vadd.f32 %v2228, %v2004
      %v2230 = vadd.f32 %v2229, %v2007
      %v2231 = vadd.f32 %v2230, %v2012
      %v2232 = vadd.f32 %v2231, %v2015
      %v2233 = vadd.f32 %v2232, %v2020
      %v2234 = vadd.f32 %v2233, %v2023
      %v2235 = vadd.f32 %v2234, %v2028
      %v2236 = vadd.f32 %v2235, %v2031
      %v2237 = vadd.f32 %v2236, %v2036
      %v2238 = vadd.f32 %v2237, %v2039
      %v2239 = vadd.f32 %v2238, %v2044
      %v2240 = vadd.f32 %v2239, %v2047
      %v2241 = vrot.slane %v2240, 4
      %v2242 = vadd.f32 %v2240, %v2241
      %v2243 = vrot.slane %v2242, 2
      %v2244 = vadd.f32 %v2242, %v2243
      %v2245 = vrot.slane %v2244, 1
      %v2246 = vadd.f32 %v2244, %v2245
      %v2247 = vmul.f32 %v1924, %v1924
      %v2248 = vmul.f32 %v1927, %v1927
      %v2249 = vmul.f32 %v1932, %v1932
      %v2250 = vmul.f32 %v1935, %v1935
      %v2251 = vmul.f32 %v1940, %v1940
      %v2252 = vmul.f32 %v1943, %v1943
      %v2253 = vmul.f32 %v1948, %v1948
      %v2254 = vmul.f32 %v1951, %v1951
      %v2255 = vmul.f32 %v1956, %v1956
      %v2256 = vmul.f32 %v1959, %v1959
      %v2257 = vmul.f32 %v1964, %v1964
      %v2258 = vmul.f32 %v1967, %v1967
      %v2259 = vmul.f32 %v1972, %v1972
      %v2260 = vmul.f32 %v1975, %v1975
      %v2261 = vmul.f32 %v1980, %v1980
      %v2262 = vmul.f32 %v1983, %v1983
      %v2263 = vmul.f32 %v1988, %v1988
      %v2264 = vmul.f32 %v1991, %v1991
      %v2265 = vmul.f32 %v1996, %v1996
      %v2266 = vmul.f32 %v1999, %v1999
      %v2267 = vmul.f32 %v2004, %v2004
      %v2268 = vmul.f32 %v2007, %v2007
      %v2269 = vmul.f32 %v2012, %v2012
      %v2270 = vmul.f32 %v2015, %v2015
      %v2271 = vmul.f32 %v2020, %v2020
      %v2272 = vmul.f32 %v2023, %v2023
      %v2273 = vmul.f32 %v2028, %v2028
      %v2274 = vmul.f32 %v2031, %v2031
      %v2275 = vmul.f32 %v2036, %v2036
      %v2276 = vmul.f32 %v2039, %v2039
      %v2277 = vmul.f32 %v2044, %v2044
      %v2278 = vmul.f32 %v2047, %v2047
      %v2279 = vadd.f32 %v2247, %v2248
      %v2280 = vadd.f32 %v2279, %v2249
      %v2281 = vadd.f32 %v2280, %v2250
      %v2282 = vadd.f32 %v2281, %v2251
      %v2283 = vadd.f32 %v2282, %v2252
      %v2284 = vadd.f32 %v2283, %v2253
      %v2285 = vadd.f32 %v2284, %v2254
      %v2286 = vadd.f32 %v2285, %v2255
      %v2287 = vadd.f32 %v2286, %v2256
      %v2288 = vadd.f32 %v2287, %v2257
      %v2289 = vadd.f32 %v2288, %v2258
      %v2290 = vadd.f32 %v2289, %v2259
      %v2291 = vadd.f32 %v2290, %v2260
      %v2292 = vadd.f32 %v2291, %v2261
      %v2293 = vadd.f32 %v2292, %v2262
      %v2294 = vadd.f32 %v2293, %v2263
      %v2295 = vadd.f32 %v2294, %v2264
      %v2296 = vadd.f32 %v2295, %v2265
      %v2297 = vadd.f32 %v2296, %v2266
      %v2298 = vadd.f32 %v2297, %v2267
      %v2299 = vadd.f32 %v2298, %v2268
      %v2300 = vadd.f32 %v2299, %v2269
      %v2301 = vadd.f32 %v2300, %v2270
      %v2302 = vadd.f32 %v2301, %v2271
      %v2303 = vadd.f32 %v2302, %v2272
      %v2304 = vadd.f32 %v2303, %v2273
      %v2305 = vadd.f32 %v2304, %v2274
      %v2306 = vadd.f32 %v2305, %v2275
      %v2307 = vadd.f32 %v2306, %v2276
      %v2308 = vadd.f32 %v2307, %v2277
      %v2309 = vadd.f32 %v2308, %v2278
      %v2310 = vrot.slane %v2309, 4
      %v2311 = vadd.f32 %v2309, %v2310
      %v2312 = vrot.slane %v2311, 2
      %v2313 = vadd.f32 %v2311, %v2312
      %v2314 = vrot.slane %v2313, 1
      %v2315 = vadd.f32 %v2313, %v2314
      %vm2316 = vcmask 1040384
      %v2317 = vsel %vm2316, %v2246, %v2315
      %2318 = vst [vmem:[%s235] sm:$0x3] %v2317
      %p2319 = scmp.lt.s32.totalorder %s17, 1
      %s2320 = scalar_select %p2319, %s17, 1
      %s2321 = smul.addr %s2320, 32
      %s2322 = smul.addr %s2321, 4
      %s2323 = scalar_lea.vmem %s4, %s2322
      %p2324 = scmp.lt.s32.totalorder %s17, 1
      %s2325 = scalar_select %p2324, %s17, 1
      %s2326 = smul.addr %s2325, 2
      %s2327 = scalar_lea.vmem %s5, %s2326
      // Predicated region
      $region37: #{resblock_pallas.4} parent=35 // pred_check
        %p2328 = pneg %p124
      $region38: #{resblock_pallas.4} parent=35 // pred_check_branch
        %2330 = sbr.rel (%p2328) target = $region40
      $region39: #{resblock_pallas.4} parent=35 // pred_region
        _
      $region40: #{resblock_pallas.4} parent=35 // pred_fallthru
        _
      // Predicated region
      $region41: #{resblock_pallas.4} parent=35 // pred_check
        %p2331 = pneg %p150
      $region42: #{resblock_pallas.4} parent=35 // pred_check_branch
        %2333 = sbr.rel (%p2331) target = $region44
      $region43: #{resblock_pallas.4} parent=35 // pred_region
        _
      $region44: #{resblock_pallas.4} parent=35 // pred_fallthru
        _
    $region36: #{resblock_pallas.4} parent=5 // pred_fallthru
      _
    %p2334 = scmp.le.s32.totalorder 2, %s12
    // Predicated region
    $region45: #{resblock_pallas.4} parent=5 // pred_check
      %p2335 = pneg %p2334
    $region46: #{resblock_pallas.4} parent=5 // pred_check_branch
      %2337 = sbr.rel (%p2335) target = $region48
    $region47: #{resblock_pallas.4} parent=5 // pred_region
      %s2338 = ssub.s32 %s12, 2
      // Predicated region
      $region49: #{resblock_pallas.4} parent=47 // pred_check
        %p2339 = pneg %p130
      $region50: #{resblock_pallas.4} parent=47 // pred_check_branch
        %2341 = sbr.rel (%p2339) target = $region52
      $region51: #{resblock_pallas.4} parent=47 // pred_region
        %p2342 = scmp.lt.s32.totalorder %s18, 1
        %s2343 = scalar_select %p2342, %s18, 1
        %s2344 = smul.addr %s2343, 32
        %s2345 = smul.addr %s2344, 4
        %s2346 = scalar_lea.vmem %s4, %s2345
      $region52: #{resblock_pallas.4} parent=47 // pred_fallthru
        _
      // Predicated region
      $region53: #{resblock_pallas.4} parent=47 // pred_check
        %p2347 = pneg %p156
      $region54: #{resblock_pallas.4} parent=47 // pred_check_branch
        %2349 = sbr.rel (%p2347) target = $region56
      $region55: #{resblock_pallas.4} parent=47 // pred_region
        %p2350 = scmp.lt.s32.totalorder %s18, 1
        %s2351 = scalar_select %p2350, %s18, 1
        %s2352 = smul.addr %s2351, 2
        %s2353 = scalar_lea.vmem %s5, %s2352
      $region56: #{resblock_pallas.4} parent=47 // pred_fallthru
        _
    $region48: #{resblock_pallas.4} parent=5 // pred_fallthru
      _
  $region6: #{resblock_pallas.4} parent=0 // loop_footer
    %s16 = sadd.s32 1, %s12
  $region7: #{resblock_pallas.4} parent=0 // loop_footer_branch
    %11 = sbr.rel target = $region3
  $region8: #{resblock_pallas.4} parent=0 // loop_exit
    _

// kernel: resblock_pallas.3
$region0: #{resblock_pallas.3}
  #allocation0 [shape = 'u32[]', space=smem, size = 0x4, offset = 0x4, fixed_abs, tag = 'smem constant byte address 0x4 - core index']
  #allocation1 [shape = 'u32[144,128]{1,0:T(1,128)}', space=vmem, size = 0x12000, scoped, tag = 'internal scratch']
  #allocation2 [shape = 'f32[1,18,24,128]{3,2,1,0:T(8,128)}', space=vmem, size = 0x36000, scoped, tag = 'scratch operand']
  %s0 = inlined_call_operand.vmem [shape: f32[2,16,16,128], index: 0, kind: input, shape index: {}]
  %s1 = inlined_call_operand.vmem [shape: bf16[1152,128], index: 1, kind: input, shape index: {}]
  %s2 = inlined_call_operand.vmem [shape: bf16[2,16,16,128], index: 2, kind: output, shape index: {0}]
  %s3 = inlined_call_operand.vmem [shape: f32[2,2,128], index: 3, kind: output, shape index: {1}]
  %4 = xla_tuple %s2, %s3
  %s5 = sld [smem:[#allocation0]]
  $region49: #{resblock_pallas.3} parent=0
    _
  %s7 = ssub.s32 1, %s5
  %s8 = scalar_select 0, %s7, %s5
  loop: start=0, step=1, limit=4
  $region2: #{resblock_pallas.3} parent=0 // loop_pre_header
    _
  $region3: #{resblock_pallas.3} parent=0 // loop_header
    %s10 = sphi 0, %s14
    %p11 = scmp.ge.s32.totalorder %s10, 4
    %s20 = sphi 0, %s22
    %s23 = sphi 0, %s20
    %s24 = sphi 0, %s23
    %s40 = sphi 0, %s24
    %s44 = sphi 0, %s44
    %s46 = sphi 0, %s44
    %s47 = sphi 0, %s46
    %s61 = sphi 0, %s47
    %s67 = sphi 0, %s69
    %s70 = sphi 0, %s67
    %s71 = sphi 0, %s70
    %s87 = sphi 0, %s71
    %s93 = sphi 0, %s95
    %s96 = sphi 0, %s93
    %s97 = sphi 0, %s96
    %s113 = sphi 0, %s97
  $region4: #{resblock_pallas.3} parent=0 // loop_header_branch
    %13 = sbr.rel (%p11) target = $region8
  $region5: #{resblock_pallas.3} parent=0 // loop_body
    %s15 = ssub.s32 %s10, 1
    %s16 = ssub.s32 %s10, 2
    %s17 = sadd.s32 %s10, 1
    %s18 = ssub.s32 %s10, %s17
    %p19 = scmp.eq.s32.totalorder %s18, 0
    %s21 = sadd.s32 %s20, 1
    %s22 = scalar_select %p19, %s20, %s21
    %p25 = pneg %p19
    %p26 = scmp.eq.s32.totalorder %s10, 1
    %p27 = por %p25, %p26
    %p28 = scmp.ne.s32.totalorder %s20, %s23
    %p29 = scmp.eq.s32.totalorder %s10, 0
    %p30 = por %p28, %p29
    %p31 = scmp.ne.s32.totalorder %s20, %s23
    %p32 = scmp.eq.s32.totalorder %s15, 1
    %p33 = por %p31, %p32
    %p34 = scmp.ne.s32.totalorder %s23, %s24
    %p35 = scmp.eq.s32.totalorder %s15, 0
    %p36 = por %p34, %p35
    %p37 = scmp.ne.s32.totalorder %s23, %s24
    %p38 = scmp.eq.s32.totalorder %s16, 1
    %p39 = por %p37, %p38
    %p41 = scmp.ne.s32.totalorder %s24, %s40
    %p42 = scmp.eq.s32.totalorder %s16, 0
    %p43 = por %p41, %p42
    %s45 = sadd.s32 %s44, 1
    %p48 = scmp.eq.s32.totalorder %s10, 1
    %p49 = scmp.ne.s32.totalorder %s44, %s46
    %p50 = scmp.eq.s32.totalorder %s10, 0
    %p51 = por %p49, %p50
    %p52 = scmp.ne.s32.totalorder %s44, %s46
    %p53 = scmp.eq.s32.totalorder %s15, 1
    %p54 = por %p52, %p53
    %p55 = scmp.ne.s32.totalorder %s46, %s47
    %p56 = scmp.eq.s32.totalorder %s15, 0
    %p57 = por %p55, %p56
    %p58 = scmp.ne.s32.totalorder %s46, %s47
    %p59 = scmp.eq.s32.totalorder %s16, 1
    %p60 = por %p58, %p59
    %p62 = scmp.ne.s32.totalorder %s47, %s61
    %p63 = scmp.eq.s32.totalorder %s16, 0
    %p64 = por %p62, %p63
    %s65 = ssub.s32 %s10, %s17
    %p66 = scmp.eq.s32.totalorder %s65, 0
    %s68 = sadd.s32 %s67, 1
    %s69 = scalar_select %p66, %s67, %s68
    %p72 = pneg %p66
    %p73 = scmp.eq.s32.totalorder %s10, 1
    %p74 = por %p72, %p73
    %p75 = scmp.ne.s32.totalorder %s67, %s70
    %p76 = scmp.eq.s32.totalorder %s10, 0
    %p77 = por %p75, %p76
    %p78 = scmp.ne.s32.totalorder %s67, %s70
    %p79 = scmp.eq.s32.totalorder %s15, 1
    %p80 = por %p78, %p79
    %p81 = scmp.ne.s32.totalorder %s70, %s71
    %p82 = scmp.eq.s32.totalorder %s15, 0
    %p83 = por %p81, %p82
    %p84 = scmp.ne.s32.totalorder %s70, %s71
    %p85 = scmp.eq.s32.totalorder %s16, 1
    %p86 = por %p84, %p85
    %p88 = scmp.ne.s32.totalorder %s71, %s87
    %p89 = scmp.eq.s32.totalorder %s16, 0
    %p90 = por %p88, %p89
    %s91 = ssub.s32 %s10, %s17
    %p92 = scmp.eq.s32.totalorder %s91, 0
    %s94 = sadd.s32 %s93, 1
    %s95 = scalar_select %p92, %s93, %s94
    %p98 = pneg %p92
    %p99 = scmp.eq.s32.totalorder %s10, 1
    %p100 = por %p98, %p99
    %p101 = scmp.ne.s32.totalorder %s93, %s96
    %p102 = scmp.eq.s32.totalorder %s10, 0
    %p103 = por %p101, %p102
    %p104 = scmp.ne.s32.totalorder %s93, %s96
    %p105 = scmp.eq.s32.totalorder %s15, 1
    %p106 = por %p104, %p105
    %p107 = scmp.ne.s32.totalorder %s96, %s97
    %p108 = scmp.eq.s32.totalorder %s15, 0
    %p109 = por %p107, %p108
    %p110 = scmp.ne.s32.totalorder %s96, %s97
    %p111 = scmp.eq.s32.totalorder %s16, 1
    %p112 = por %p110, %p111
    %p114 = scmp.ne.s32.totalorder %s97, %s113
    %p115 = scmp.eq.s32.totalorder %s16, 0
    %p116 = por %p114, %p115
    %p117 = scmp.le.s32.totalorder 1, %s10
    %p118 = scmp.lt.s32.totalorder %s10, 3
    %p119 = pnand %p117, %p118
    %p120 = pneg %p119
    // Predicated region
    $region9: #{resblock_pallas.3} parent=5 // pred_check
      _
    $region10: #{resblock_pallas.3} parent=5 // pred_check_branch
      %122 = sbr.rel (%p119) target = $region12
    $region11: #{resblock_pallas.3} parent=5 // pred_region
      %s123 = ssub.s32 %s10, 1
      // Predicated region
      $region13: #{resblock_pallas.3} parent=11 // pred_check
        %p124 = pneg %p57
      $region14: #{resblock_pallas.3} parent=11 // pred_check_branch
        %126 = sbr.rel (%p124) target = $region16
      $region15: #{resblock_pallas.3} parent=11 // pred_region
        _
      $region16: #{resblock_pallas.3} parent=11 // pred_fallthru
        _
    $region12: #{resblock_pallas.3} parent=5 // pred_fallthru
      _
    %p127 = scmp.lt.s32.totalorder %s10, 2
    // Predicated region
    $region17: #{resblock_pallas.3} parent=5 // pred_check
      %p128 = pneg %p127
    $region18: #{resblock_pallas.3} parent=5 // pred_check_branch
      %130 = sbr.rel (%p128) target = $region20
    $region19: #{resblock_pallas.3} parent=5 // pred_region
      // Predicated region
      $region21: #{resblock_pallas.3} parent=19 // pred_check
        %p131 = pneg %p30
      $region22: #{resblock_pallas.3} parent=19 // pred_check_branch
        %133 = sbr.rel (%p131) target = $region24
      $region23: #{resblock_pallas.3} parent=19 // pred_region
        %p134 = scmp.lt.s32.totalorder %s10, 1
        %s135 = scalar_select %p134, %s10, 1
        %s136 = smul.addr %s135, 32
        %s137 = smul.addr %s136, 8
        %s138 = scalar_lea.vmem %s0, %s137
      $region24: #{resblock_pallas.3} parent=19 // pred_fallthru
        _
    $region20: #{resblock_pallas.3} parent=5 // pred_fallthru
      _
    %p139 = scmp.le.s32.totalorder 1, %s10
    %p140 = scmp.lt.s32.totalorder %s10, 3
    %p141 = pnand %p139, %p140
    %p142 = pneg %p141
    // Predicated region
    $region25: #{resblock_pallas.3} parent=5 // pred_check
      _
    $region26: #{resblock_pallas.3} parent=5 // pred_check_branch
      %144 = sbr.rel (%p141) target = $region28
    $region27: #{resblock_pallas.3} parent=5 // pred_region
      %s145 = ssub.s32 %s10, 1
      %p146 = scmp.lt.s32.totalorder %s15, 1
      %s147 = scalar_select %p146, %s15, 1
      %s148 = smul.addr %s147, 32
      %s149 = smul.addr %s148, 8
      %s150 = scalar_lea.vmem %s0, %s149
      %p151 = pneg %p36
      %p152 = pneg %p33
      %p153 = pneg %p57
      %p154 = pneg %p54
      %p155 = pneg %p83
      %p156 = pneg %p80
      %p157 = scmp.lt.s32.totalorder %s15, 1
      %s158 = scalar_select %p157, %s15, 1
      %s159 = smul.addr %s158, 32
      %s160 = smul.addr %s159, 4
      %s161 = scalar_lea.vmem %s2, %s160
      %p162 = pneg %p109
      %p163 = pneg %p106
      %p164 = scmp.lt.s32.totalorder %s15, 1
      %s165 = scalar_select %p164, %s15, 1
      %s166 = smul.addr %s165, 2
      %s167 = scalar_lea.vmem %s3, %s166
      %p168 = scmp.lt.s32.totalorder %s15, 1
      %s169 = scalar_select %p168, %s15, 1
      %s170 = smul.addr %s169, 32
      %s171 = smul.addr %s170, 8
      %s172 = scalar_lea.vmem %s0, %s171
      %p173 = scmp.lt.s32.totalorder %s15, 1
      %s174 = scalar_select %p173, %s15, 1
      %s175 = smul.addr %s174, 32
      %s176 = smul.addr %s175, 4
      %s177 = scalar_lea.vmem %s2, %s176
      %p178 = scmp.lt.s32.totalorder %s15, 1
      %s179 = scalar_select %p178, %s15, 1
      %s180 = smul.addr %s179, 2
      %s181 = scalar_lea.vmem %s3, %s180
      %v183 = vld [vmem:[%s172] sm:$0xff]
      %v184 = vld [vmem:[%s172 + $0x8] sm:$0xff]
      %v185 = vld [vmem:[%s172 + $0x10] sm:$0xff]
      %v186 = vld [vmem:[%s172 + $0x18] sm:$0xff]
      %v187 = vld [vmem:[%s172 + $0x20] sm:$0xff]
      %v188 = vld [vmem:[%s172 + $0x28] sm:$0xff]
      %v189 = vld [vmem:[%s172 + $0x30] sm:$0xff]
      %v190 = vld [vmem:[%s172 + $0x38] sm:$0xff]
      %v191 = vld [vmem:[%s172 + $0x40] sm:$0xff]
      %v192 = vld [vmem:[%s172 + $0x48] sm:$0xff]
      %v193 = vld [vmem:[%s172 + $0x50] sm:$0xff]
      %v194 = vld [vmem:[%s172 + $0x58] sm:$0xff]
      %v195 = vld [vmem:[%s172 + $0x60] sm:$0xff]
      %v196 = vld [vmem:[%s172 + $0x68] sm:$0xff]
      %v197 = vld [vmem:[%s172 + $0x70] sm:$0xff]
      %v198 = vld [vmem:[%s172 + $0x78] sm:$0xff]
      %v199 = vld [vmem:[%s172 + $0x80] sm:$0xff]
      %v200 = vld [vmem:[%s172 + $0x88] sm:$0xff]
      %v201 = vld [vmem:[%s172 + $0x90] sm:$0xff]
      %v202 = vld [vmem:[%s172 + $0x98] sm:$0xff]
      %v203 = vld [vmem:[%s172 + $0xa0] sm:$0xff]
      %v204 = vld [vmem:[%s172 + $0xa8] sm:$0xff]
      %v205 = vld [vmem:[%s172 + $0xb0] sm:$0xff]
      %v206 = vld [vmem:[%s172 + $0xb8] sm:$0xff]
      %v207 = vld [vmem:[%s172 + $0xc0] sm:$0xff]
      %v208 = vld [vmem:[%s172 + $0xc8] sm:$0xff]
      %v209 = vld [vmem:[%s172 + $0xd0] sm:$0xff]
      %v210 = vld [vmem:[%s172 + $0xd8] sm:$0xff]
      %v211 = vld [vmem:[%s172 + $0xe0] sm:$0xff]
      %v212 = vld [vmem:[%s172 + $0xe8] sm:$0xff]
      %v213 = vld [vmem:[%s172 + $0xf0] sm:$0xff]
      %v214 = vld [vmem:[%s172 + $0xf8] sm:$0xff]
      %215 = vst [vmem:[#allocation2] sm:$0xff] 0.0
      %216 = vst [vmem:[#allocation2 + $0x8] sm:$0xff] 0.0
      %217 = vst [vmem:[#allocation2 + $0x10] sm:$0xff] 0.0
      %s218 = scalar_lea.vmem [#allocation2], 408
      %219 = vst [vmem:[%s218] sm:$0xff] 0.0
      %220 = vst [vmem:[%s218 + $0x8] sm:$0xff] 0.0
      %221 = vst [vmem:[%s218 + $0x10] sm:$0xff] 0.0
      %222 = vst [vmem:[#allocation2] sm:$0x1] 0.0
      %223 = vst [vmem:[#allocation2 + $0x18] sm:$0x1] 0.0
      %224 = vst [vmem:[#allocation2 + $0x30] sm:$0x1] 0.0
      %225 = vst [vmem:[#allocation2 + $0x48] sm:$0x1] 0.0
      %226 = vst [vmem:[#allocation2 + $0x60] sm:$0x1] 0.0
      %227 = vst [vmem:[#allocation2 + $0x78] sm:$0x1] 0.0
      %228 = vst [vmem:[#allocation2 + $0x90] sm:$0x1] 0.0
      %229 = vst [vmem:[#allocation2 + $0xa8] sm:$0x1] 0.0
      %230 = vst [vmem:[#allocation2 + $0xc0] sm:$0x1] 0.0
      %231 = vst [vmem:[#allocation2 + $0xd8] sm:$0x1] 0.0
      %232 = vst [vmem:[#allocation2 + $0xf0] sm:$0x1] 0.0
      %233 = vst [vmem:[#allocation2 + $0x108] sm:$0x1] 0.0
      %234 = vst [vmem:[#allocation2 + $0x120] sm:$0x1] 0.0
      %235 = vst [vmem:[#allocation2 + $0x138] sm:$0x1] 0.0
      %236 = vst [vmem:[#allocation2 + $0x150] sm:$0x1] 0.0
      %237 = vst [vmem:[#allocation2 + $0x168] sm:$0x1] 0.0
      %238 = vst [vmem:[#allocation2 + $0x180] sm:$0x1] 0.0
      %239 = vst [vmem:[#allocation2 + $0x198] sm:$0x1] 0.0
      %240 = vst [vmem:[#allocation2 + $0x11] sm:$0x7f] 0.0
      %241 = vst [vmem:[#allocation2 + $0x29] sm:$0x7f] 0.0
      %242 = vst [vmem:[#allocation2 + $0x41] sm:$0x7f] 0.0
      %243 = vst [vmem:[#allocation2 + $0x59] sm:$0x7f] 0.0
      %244 = vst [vmem:[#allocation2 + $0x71] sm:$0x7f] 0.0
      %245 = vst [vmem:[#allocation2 + $0x89] sm:$0x7f] 0.0
      %246 = vst [vmem:[#allocation2 + $0xa1] sm:$0x7f] 0.0
      %247 = vst [vmem:[#allocation2 + $0xb9] sm:$0x7f] 0.0
      %248 = vst [vmem:[#allocation2 + $0xd1] sm:$0x7f] 0.0
      %249 = vst [vmem:[#allocation2 + $0xe9] sm:$0x7f] 0.0
      %250 = vst [vmem:[#allocation2 + $0x101] sm:$0x7f] 0.0
      %251 = vst [vmem:[#allocation2 + $0x119] sm:$0x7f] 0.0
      %252 = vst [vmem:[#allocation2 + $0x131] sm:$0x7f] 0.0
      %253 = vst [vmem:[#allocation2 + $0x149] sm:$0x7f] 0.0
      %254 = vst [vmem:[#allocation2 + $0x161] sm:$0x7f] 0.0
      %255 = vst [vmem:[#allocation2 + $0x179] sm:$0x7f] 0.0
      %256 = vst [vmem:[#allocation2 + $0x191] sm:$0x7f] 0.0
      %257 = vst [vmem:[#allocation2 + $0x1a9] sm:$0x7f] 0.0
      %s258 = scalar_lea.vmem [#allocation2], 24
      %259 = vst [vmem:[%s258 + $0x1] sm:$0xff] %v183
      %260 = vst [vmem:[%s258 + $0x9] sm:$0xff] %v184
      %261 = vst [vmem:[%s258 + $0x19] sm:$0xff] %v185
      %262 = vst [vmem:[%s258 + $0x21] sm:$0xff] %v186
      %263 = vst [vmem:[%s258 + $0x31] sm:$0xff] %v187
      %264 = vst [vmem:[%s258 + $0x39] sm:$0xff] %v188
      %265 = vst [vmem:[%s258 + $0x49] sm:$0xff] %v189
      %266 = vst [vmem:[%s258 + $0x51] sm:$0xff] %v190
      %267 = vst [vmem:[%s258 + $0x61] sm:$0xff] %v191
      %268 = vst [vmem:[%s258 + $0x69] sm:$0xff] %v192
      %269 = vst [vmem:[%s258 + $0x79] sm:$0xff] %v193
      %270 = vst [vmem:[%s258 + $0x81] sm:$0xff] %v194
      %271 = vst [vmem:[%s258 + $0x91] sm:$0xff] %v195
      %272 = vst [vmem:[%s258 + $0x99] sm:$0xff] %v196
      %273 = vst [vmem:[%s258 + $0xa9] sm:$0xff] %v197
      %274 = vst [vmem:[%s258 + $0xb1] sm:$0xff] %v198
      %275 = vst [vmem:[%s258 + $0xc1] sm:$0xff] %v199
      %276 = vst [vmem:[%s258 + $0xc9] sm:$0xff] %v200
      %277 = vst [vmem:[%s258 + $0xd9] sm:$0xff] %v201
      %278 = vst [vmem:[%s258 + $0xe1] sm:$0xff] %v202
      %279 = vst [vmem:[%s258 + $0xf1] sm:$0xff] %v203
      %280 = vst [vmem:[%s258 + $0xf9] sm:$0xff] %v204
      %281 = vst [vmem:[%s258 + $0x109] sm:$0xff] %v205
      %282 = vst [vmem:[%s258 + $0x111] sm:$0xff] %v206
      %283 = vst [vmem:[%s258 + $0x121] sm:$0xff] %v207
      %284 = vst [vmem:[%s258 + $0x129] sm:$0xff] %v208
      %285 = vst [vmem:[%s258 + $0x139] sm:$0xff] %v209
      %286 = vst [vmem:[%s258 + $0x141] sm:$0xff] %v210
      %287 = vst [vmem:[%s258 + $0x151] sm:$0xff] %v211
      %288 = vst [vmem:[%s258 + $0x159] sm:$0xff] %v212
      %289 = vst [vmem:[%s258 + $0x169] sm:$0xff] %v213
      %290 = vst [vmem:[%s258 + $0x171] sm:$0xff] %v214
      %v291 = vld [vmem:[#allocation2] sm:$0xff]
      %v292 = vld [vmem:[#allocation2 + $0x8] sm:$0xff]
      %v293 = vld [vmem:[#allocation2 + $0x18] sm:$0xff]
      %v294 = vld [vmem:[#allocation2 + $0x20] sm:$0xff]
      %v295 = vld [vmem:[#allocation2 + $0x30] sm:$0xff]
      %v296 = vld [vmem:[#allocation2 + $0x38] sm:$0xff]
      %v297 = vld [vmem:[#allocation2 + $0x48] sm:$0xff]
      %v298 = vld [vmem:[#allocation2 + $0x50] sm:$0xff]
      %v299 = vld [vmem:[#allocation2 + $0x60] sm:$0xff]
      %v300 = vld [vmem:[#allocation2 + $0x68] sm:$0xff]
      %v301 = vld [vmem:[#allocation2 + $0x78] sm:$0xff]
      %v302 = vld [vmem:[#allocation2 + $0x80] sm:$0xff]
      %v303 = vld [vmem:[#allocation2 + $0x90] sm:$0xff]
      %v304 = vld [vmem:[#allocation2 + $0x98] sm:$0xff]
      %v305 = vld [vmem:[#allocation2 + $0xa8] sm:$0xff]
      %v306 = vld [vmem:[#allocation2 + $0xb0] sm:$0xff]
      %v307 = vld [vmem:[#allocation2 + $0xc0] sm:$0xff]
      %v308 = vld [vmem:[#allocation2 + $0xc8] sm:$0xff]
      %v309 = vld [vmem:[#allocation2 + $0xd8] sm:$0xff]
      %v310 = vld [vmem:[#allocation2 + $0xe0] sm:$0xff]
      %v311 = vld [vmem:[#allocation2 + $0xf0] sm:$0xff]
      %v312 = vld [vmem:[#allocation2 + $0xf8] sm:$0xff]
      %v313 = vld [vmem:[#allocation2 + $0x108] sm:$0xff]
      %v314 = vld [vmem:[#allocation2 + $0x110] sm:$0xff]
      %v315 = vld [vmem:[#allocation2 + $0x120] sm:$0xff]
      %v316 = vld [vmem:[#allocation2 + $0x128] sm:$0xff]
      %v317 = vld [vmem:[#allocation2 + $0x138] sm:$0xff]
      %v318 = vld [vmem:[#allocation2 + $0x140] sm:$0xff]
      %v319 = vld [vmem:[#allocation2 + $0x150] sm:$0xff]
      %v320 = vld [vmem:[#allocation2 + $0x158] sm:$0xff]
      %v321 = vld [vmem:[#allocation2 + $0x168] sm:$0xff]
      %v322 = vld [vmem:[#allocation2 + $0x170] sm:$0xff]
      %v323 = vld [vmem:[#allocation2 + $0x180] sm:$0xff]
      %v324 = vld [vmem:[#allocation2 + $0x188] sm:$0xff]
      %v325 = vld [vmem:[#allocation2 + $0x198] sm:$0xff]
      %v326 = vld [vmem:[#allocation2 + $0x1a0] sm:$0xff]
      %v327 = vld [vmem:[#allocation2 + $0x1] sm:$0xff]
      %v328 = vld [vmem:[#allocation2 + $0x9] sm:$0xff]
      %v329 = vld [vmem:[#allocation2 + $0x19] sm:$0xff]
      %v330 = vld [vmem:[#allocation2 + $0x21] sm:$0xff]
      %v331 = vld [vmem:[#allocation2 + $0x31] sm:$0xff]
      %v332 = vld [vmem:[#allocation2 + $0x39] sm:$0xff]
      %v333 = vld [vmem:[#allocation2 + $0x49] sm:$0xff]
      %v334 = vld [vmem:[#allocation2 + $0x51] sm:$0xff]
      %v335 = vld [vmem:[#allocation2 + $0x61] sm:$0xff]
      %v336 = vld [vmem:[#allocation2 + $0x69] sm:$0xff]
      %v337 = vld [vmem:[#allocation2 + $0x79] sm:$0xff]
      %v338 = vld [vmem:[#allocation2 + $0x81] sm:$0xff]
      %v339 = vld [vmem:[#allocation2 + $0x91] sm:$0xff]
      %v340 = vld [vmem:[#allocation2 + $0x99] sm:$0xff]
      %v341 = vld [vmem:[#allocation2 + $0xa9] sm:$0xff]
      %v342 = vld [vmem:[#allocation2 + $0xb1] sm:$0xff]
      %v343 = vld [vmem:[#allocation2 + $0xc1] sm:$0xff]
      %v344 = vld [vmem:[#allocation2 + $0xc9] sm:$0xff]
      %v345 = vld [vmem:[#allocation2 + $0xd9] sm:$0xff]
      %v346 = vld [vmem:[#allocation2 + $0xe1] sm:$0xff]
      %v347 = vld [vmem:[#allocation2 + $0xf1] sm:$0xff]
      %v348 = vld [vmem:[#allocation2 + $0xf9] sm:$0xff]
      %v349 = vld [vmem:[#allocation2 + $0x109] sm:$0xff]
      %v350 = vld [vmem:[#allocation2 + $0x111] sm:$0xff]
      %v351 = vld [vmem:[#allocation2 + $0x121] sm:$0xff]
      %v352 = vld [vmem:[#allocation2 + $0x129] sm:$0xff]
      %v353 = vld [vmem:[#allocation2 + $0x139] sm:$0xff]
      %v354 = vld [vmem:[#allocation2 + $0x141] sm:$0xff]
      %v355 = vld [vmem:[#allocation2 + $0x151] sm:$0xff]
      %v356 = vld [vmem:[#allocation2 + $0x159] sm:$0xff]
      %v357 = vld [vmem:[#allocation2 + $0x169] sm:$0xff]
      %v358 = vld [vmem:[#allocation2 + $0x171] sm:$0xff]
      %v359 = vld [vmem:[#allocation2 + $0x181] sm:$0xff]
      %v360 = vld [vmem:[#allocation2 + $0x189] sm:$0xff]
      %v361 = vld [vmem:[#allocation2 + $0x199] sm:$0xff]
      %v362 = vld [vmem:[#allocation2 + $0x1a1] sm:$0xff]
      %v363 = vld [vmem:[#allocation2 + $0x2] sm:$0xff]
      %v364 = vld [vmem:[#allocation2 + $0xa] sm:$0xff]
      %v365 = vld [vmem:[#allocation2 + $0x1a] sm:$0xff]
      %v366 = vld [vmem:[#allocation2 + $0x22] sm:$0xff]
      %v367 = vld [vmem:[#allocation2 + $0x32] sm:$0xff]
      %v368 = vld [vmem:[#allocation2 + $0x3a] sm:$0xff]
      %v369 = vld [vmem:[#allocation2 + $0x4a] sm:$0xff]
      %v370 = vld [vmem:[#allocation2 + $0x52] sm:$0xff]
      %v371 = vld [vmem:[#allocation2 + $0x62] sm:$0xff]
      %v372 = vld [vmem:[#allocation2 + $0x6a] sm:$0xff]
      %v373 = vld [vmem:[#allocation2 + $0x7a] sm:$0xff]
      %v374 = vld [vmem:[#allocation2 + $0x82] sm:$0xff]
      %v375 = vld [vmem:[#allocation2 + $0x92] sm:$0xff]
      %v376 = vld [vmem:[#allocation2 + $0x9a] sm:$0xff]
      %v377 = vld [vmem:[#allocation2 + $0xaa] sm:$0xff]
      %v378 = vld [vmem:[#allocation2 + $0xb2] sm:$0xff]
      %v379 = vld [vmem:[#allocation2 + $0xc2] sm:$0xff]
      %v380 = vld [vmem:[#allocation2 + $0xca] sm:$0xff]
      %v381 = vld [vmem:[#allocation2 + $0xda] sm:$0xff]
      %v382 = vld [vmem:[#allocation2 + $0xe2] sm:$0xff]
      %v383 = vld [vmem:[#allocation2 + $0xf2] sm:$0xff]
      %v384 = vld [vmem:[#allocation2 + $0xfa] sm:$0xff]
      %v385 = vld [vmem:[#allocation2 + $0x10a] sm:$0xff]
      %v386 = vld [vmem:[#allocation2 + $0x112] sm:$0xff]
      %v387 = vld [vmem:[#allocation2 + $0x122] sm:$0xff]
      %v388 = vld [vmem:[#allocation2 + $0x12a] sm:$0xff]
      %v389 = vld [vmem:[#allocation2 + $0x13a] sm:$0xff]
      %v390 = vld [vmem:[#allocation2 + $0x142] sm:$0xff]
      %v391 = vld [vmem:[#allocation2 + $0x152] sm:$0xff]
      %v392 = vld [vmem:[#allocation2 + $0x15a] sm:$0xff]
      %v393 = vld [vmem:[#allocation2 + $0x16a] sm:$0xff]
      %v394 = vld [vmem:[#allocation2 + $0x172] sm:$0xff]
      %v395 = vld [vmem:[#allocation2 + $0x182] sm:$0xff]
      %v396 = vld [vmem:[#allocation2 + $0x18a] sm:$0xff]
      %v397 = vld [vmem:[#allocation2 + $0x19a] sm:$0xff]
      %v398 = vld [vmem:[#allocation2 + $0x1a2] sm:$0xff]
      %v399 = vpack.c.bf16 %v292, %v291
      %v400 = vpack.c.bf16 %v294, %v293
      %v401 = vpack.c.bf16 %v296, %v295
      %v402 = vpack.c.bf16 %v298, %v297
      %v403 = vpack.c.bf16 %v300, %v299
      %v404 = vpack.c.bf16 %v302, %v301
      %v405 = vpack.c.bf16 %v304, %v303
      %v406 = vpack.c.bf16 %v306, %v305
      %v407 = vpack.c.bf16 %v308, %v307
      %v408 = vpack.c.bf16 %v310, %v309
      %v409 = vpack.c.bf16 %v312, %v311
      %v410 = vpack.c.bf16 %v314, %v313
      %v411 = vpack.c.bf16 %v316, %v315
      %v412 = vpack.c.bf16 %v318, %v317
      %v413 = vpack.c.bf16 %v320, %v319
      %v414 = vpack.c.bf16 %v322, %v321
      %v415 = vpack.c.bf16 %v328, %v327
      %v416 = vpack.c.bf16 %v330, %v329
      %v417 = vpack.c.bf16 %v332, %v331
      %v418 = vpack.c.bf16 %v334, %v333
      %v419 = vpack.c.bf16 %v336, %v335
      %v420 = vpack.c.bf16 %v338, %v337
      %v421 = vpack.c.bf16 %v340, %v339
      %v422 = vpack.c.bf16 %v342, %v341
      %v423 = vpack.c.bf16 %v344, %v343
      %v424 = vpack.c.bf16 %v346, %v345
      %v425 = vpack.c.bf16 %v348, %v347
      %v426 = vpack.c.bf16 %v350, %v349
      %v427 = vpack.c.bf16 %v352, %v351
      %v428 = vpack.c.bf16 %v354, %v353
      %v429 = vpack.c.bf16 %v356, %v355
      %v430 = vpack.c.bf16 %v358, %v357
      %v431 = vpack.c.bf16 %v364, %v363
      %v432 = vpack.c.bf16 %v366, %v365
      %v433 = vpack.c.bf16 %v368, %v367
      %v434 = vpack.c.bf16 %v370, %v369
      %v435 = vpack.c.bf16 %v372, %v371
      %v436 = vpack.c.bf16 %v374, %v373
      %v437 = vpack.c.bf16 %v376, %v375
      %v438 = vpack.c.bf16 %v378, %v377
      %v439 = vpack.c.bf16 %v380, %v379
      %v440 = vpack.c.bf16 %v382, %v381
      %v441 = vpack.c.bf16 %v384, %v383
      %v442 = vpack.c.bf16 %v386, %v385
      %v443 = vpack.c.bf16 %v388, %v387
      %v444 = vpack.c.bf16 %v390, %v389
      %v445 = vpack.c.bf16 %v392, %v391
      %v446 = vpack.c.bf16 %v394, %v393
      %v447 = vpack.c.bf16 %v324, %v323
      %v448 = vpack.c.bf16 %v360, %v359
      %v449 = vpack.c.bf16 %v396, %v395
      %v450 = vpack.c.bf16 %v326, %v325
      %v451 = vpack.c.bf16 %v362, %v361
      %v452 = vpack.c.bf16 %v398, %v397
      %v453 = vld [vmem:[%s1] sm:$0xf]
      %v454 = vld [vmem:[%s1 + $0x4] sm:$0xf]
      %v455 = vld [vmem:[%s1 + $0x8] sm:$0xf]
      %v456 = vld [vmem:[%s1 + $0xc] sm:$0xf]
      %v457 = vld [vmem:[%s1 + $0x10] sm:$0xf]
      %v458 = vld [vmem:[%s1 + $0x14] sm:$0xf]
      %v459 = vld [vmem:[%s1 + $0x18] sm:$0xf]
      %v460 = vld [vmem:[%s1 + $0x1c] sm:$0xf]
      %v461 = vld [vmem:[%s1 + $0x20] sm:$0xf]
      %v462 = vld [vmem:[%s1 + $0x24] sm:$0xf]
      %v463 = vld [vmem:[%s1 + $0x28] sm:$0xf]
      %v464 = vld [vmem:[%s1 + $0x2c] sm:$0xf]
      %v465 = vld [vmem:[%s1 + $0x30] sm:$0xf]
      %v466 = vld [vmem:[%s1 + $0x34] sm:$0xf]
      %v467 = vld [vmem:[%s1 + $0x38] sm:$0xf]
      %v468 = vld [vmem:[%s1 + $0x3c] sm:$0xf]
      %v469 = vld [vmem:[%s1 + $0x40] sm:$0xf]
      %v470 = vld [vmem:[%s1 + $0x44] sm:$0xf]
      %v471 = vld [vmem:[%s1 + $0x48] sm:$0xf]
      %v472 = vld [vmem:[%s1 + $0x4c] sm:$0xf]
      %v473 = vld [vmem:[%s1 + $0x50] sm:$0xf]
      %v474 = vld [vmem:[%s1 + $0x54] sm:$0xf]
      %v475 = vld [vmem:[%s1 + $0x58] sm:$0xf]
      %v476 = vld [vmem:[%s1 + $0x5c] sm:$0xf]
      %v477 = vld [vmem:[%s1 + $0x60] sm:$0xf]
      %v478 = vld [vmem:[%s1 + $0x64] sm:$0xf]
      %v479 = vld [vmem:[%s1 + $0x68] sm:$0xf]
      %v480 = vld [vmem:[%s1 + $0x6c] sm:$0xf]
      %v481 = vld [vmem:[%s1 + $0x70] sm:$0xf]
      %v482 = vld [vmem:[%s1 + $0x74] sm:$0xf]
      %v483 = vld [vmem:[%s1 + $0x78] sm:$0xf]
      %v484 = vld [vmem:[%s1 + $0x7c] sm:$0xf]
      %v485 = vld [vmem:[%s1 + $0x80] sm:$0xf]
      %v486 = vld [vmem:[%s1 + $0x84] sm:$0xf]
      %v487 = vld [vmem:[%s1 + $0x88] sm:$0xf]
      %v488 = vld [vmem:[%s1 + $0x8c] sm:$0xf]
      %v489 = vld [vmem:[%s1 + $0x90] sm:$0xf]
      %v490 = vld [vmem:[%s1 + $0x94] sm:$0xf]
      %v491 = vld [vmem:[%s1 + $0x98] sm:$0xf]
      %v492 = vld [vmem:[%s1 + $0x9c] sm:$0xf]
      %v493 = vld [vmem:[%s1 + $0xa0] sm:$0xf]
      %v494 = vld [vmem:[%s1 + $0xa4] sm:$0xf]
      %v495 = vld [vmem:[%s1 + $0xa8] sm:$0xf]
      %v496 = vld [vmem:[%s1 + $0xac] sm:$0xf]
      %v497 = vld [vmem:[%s1 + $0xb0] sm:$0xf]
      %v498 = vld [vmem:[%s1 + $0xb4] sm:$0xf]
      %v499 = vld [vmem:[%s1 + $0xb8] sm:$0xf]
      %v500 = vld [vmem:[%s1 + $0xbc] sm:$0xf]
      %v501 = vld [vmem:[%s1 + $0xc0] sm:$0xf]
      %v502 = vld [vmem:[%s1 + $0xc4] sm:$0xf]
      %v503 = vld [vmem:[%s1 + $0xc8] sm:$0xf]
      %v504 = vld [vmem:[%s1 + $0xcc] sm:$0xf]
      %v505 = vld [vmem:[%s1 + $0xd0] sm:$0xf]
      %v506 = vld [vmem:[%s1 + $0xd4] sm:$0xf]
      %v507 = vld [vmem:[%s1 + $0xd8] sm:$0xf]
      %v508 = vld [vmem:[%s1 + $0xdc] sm:$0xf]
      %v509 = vld [vmem:[%s1 + $0xe0] sm:$0xf]
      %v510 = vld [vmem:[%s1 + $0xe4] sm:$0xf]
      %v511 = vld [vmem:[%s1 + $0xe8] sm:$0xf]
      %v512 = vld [vmem:[%s1 + $0xec] sm:$0xf]
      %v513 = vld [vmem:[%s1 + $0xf0] sm:$0xf]
      %v514 = vld [vmem:[%s1 + $0xf4] sm:$0xf]
      %v515 = vld [vmem:[%s1 + $0xf8] sm:$0xf]
      %v516 = vld [vmem:[%s1 + $0xfc] sm:$0xf]
      %v517 = vld [vmem:[%s1 + $0x100] sm:$0xf]
      %v518 = vld [vmem:[%s1 + $0x104] sm:$0xf]
      %v519 = vld [vmem:[%s1 + $0x108] sm:$0xf]
      %v520 = vld [vmem:[%s1 + $0x10c] sm:$0xf]
      %v521 = vld [vmem:[%s1 + $0x110] sm:$0xf]
      %v522 = vld [vmem:[%s1 + $0x114] sm:$0xf]
      %v523 = vld [vmem:[%s1 + $0x118] sm:$0xf]
      %v524 = vld [vmem:[%s1 + $0x11c] sm:$0xf]
      %v525 = vld [vmem:[%s1 + $0x120] sm:$0xf]
      %v526 = vld [vmem:[%s1 + $0x124] sm:$0xf]
      %v527 = vld [vmem:[%s1 + $0x128] sm:$0xf]
      %v528 = vld [vmem:[%s1 + $0x12c] sm:$0xf]
      %v529 = vld [vmem:[%s1 + $0x130] sm:$0xf]
      %v530 = vld [vmem:[%s1 + $0x134] sm:$0xf]
      %v531 = vld [vmem:[%s1 + $0x138] sm:$0xf]
      %v532 = vld [vmem:[%s1 + $0x13c] sm:$0xf]
      %v533 = vld [vmem:[%s1 + $0x140] sm:$0xf]
      %v534 = vld [vmem:[%s1 + $0x144] sm:$0xf]
      %v535 = vld [vmem:[%s1 + $0x148] sm:$0xf]
      %v536 = vld [vmem:[%s1 + $0x14c] sm:$0xf]
      %v537 = vld [vmem:[%s1 + $0x150] sm:$0xf]
      %v538 = vld [vmem:[%s1 + $0x154] sm:$0xf]
      %v539 = vld [vmem:[%s1 + $0x158] sm:$0xf]
      %v540 = vld [vmem:[%s1 + $0x15c] sm:$0xf]
      %v541 = vld [vmem:[%s1 + $0x160] sm:$0xf]
      %v542 = vld [vmem:[%s1 + $0x164] sm:$0xf]
      %v543 = vld [vmem:[%s1 + $0x168] sm:$0xf]
      %v544 = vld [vmem:[%s1 + $0x16c] sm:$0xf]
      %v545 = vld [vmem:[%s1 + $0x170] sm:$0xf]
      %v546 = vld [vmem:[%s1 + $0x174] sm:$0xf]
      %v547 = vld [vmem:[%s1 + $0x178] sm:$0xf]
      %v548 = vld [vmem:[%s1 + $0x17c] sm:$0xf]
      %v549 = vld [vmem:[%s1 + $0x180] sm:$0xf]
      %v550 = vld [vmem:[%s1 + $0x184] sm:$0xf]
      %v551 = vld [vmem:[%s1 + $0x188] sm:$0xf]
      %v552 = vld [vmem:[%s1 + $0x18c] sm:$0xf]
      %v553 = vld [vmem:[%s1 + $0x190] sm:$0xf]
      %v554 = vld [vmem:[%s1 + $0x194] sm:$0xf]
      %v555 = vld [vmem:[%s1 + $0x198] sm:$0xf]
      %v556 = vld [vmem:[%s1 + $0x19c] sm:$0xf]
      %v557 = vld [vmem:[%s1 + $0x1a0] sm:$0xf]
      %v558 = vld [vmem:[%s1 + $0x1a4] sm:$0xf]
      %v559 = vld [vmem:[%s1 + $0x1a8] sm:$0xf]
      %v560 = vld [vmem:[%s1 + $0x1ac] sm:$0xf]
      %v561 = vld [vmem:[%s1 + $0x1b0] sm:$0xf]
      %v562 = vld [vmem:[%s1 + $0x1b4] sm:$0xf]
      %v563 = vld [vmem:[%s1 + $0x1b8] sm:$0xf]
      %v564 = vld [vmem:[%s1 + $0x1bc] sm:$0xf]
      %v565 = vld [vmem:[%s1 + $0x1c0] sm:$0xf]
      %v566 = vld [vmem:[%s1 + $0x1c4] sm:$0xf]
      %v567 = vld [vmem:[%s1 + $0x1c8] sm:$0xf]
      %v568 = vld [vmem:[%s1 + $0x1cc] sm:$0xf]
      %v569 = vld [vmem:[%s1 + $0x1d0] sm:$0xf]
      %v570 = vld [vmem:[%s1 + $0x1d4] sm:$0xf]
      %v571 = vld [vmem:[%s1 + $0x1d8] sm:$0xf]
      %v572 = vld [vmem:[%s1 + $0x1dc] sm:$0xf]
      %v573 = vld [vmem:[%s1 + $0x1e0] sm:$0xf]
      %v574 = vld [vmem:[%s1 + $0x1e4] sm:$0xf]
      %v575 = vld [vmem:[%s1 + $0x1e8] sm:$0xf]
      %v576 = vld [vmem:[%s1 + $0x1ec] sm:$0xf]
      %v577 = vld [vmem:[%s1 + $0x1f0] sm:$0xf]
      %v578 = vld [vmem:[%s1 + $0x1f4] sm:$0xf]
      %v579 = vld [vmem:[%s1 + $0x1f8] sm:$0xf]
      %v580 = vld [vmem:[%s1 + $0x1fc] sm:$0xf]
      %v581 = vld [vmem:[%s1 + $0x200] sm:$0xf]
      %v582 = vld [vmem:[%s1 + $0x204] sm:$0xf]
      %v583 = vld [vmem:[%s1 + $0x208] sm:$0xf]
      %v584 = vld [vmem:[%s1 + $0x20c] sm:$0xf]
      %v585 = vld [vmem:[%s1 + $0x210] sm:$0xf]
      %v586 = vld [vmem:[%s1 + $0x214] sm:$0xf]
      %v587 = vld [vmem:[%s1 + $0x218] sm:$0xf]
      %v588 = vld [vmem:[%s1 + $0x21c] sm:$0xf]
      %v589 = vld [vmem:[%s1 + $0x220] sm:$0xf]
      %v590 = vld [vmem:[%s1 + $0x224] sm:$0xf]
      %v591 = vld [vmem:[%s1 + $0x228] sm:$0xf]
      %v592 = vld [vmem:[%s1 + $0x22c] sm:$0xf]
      %v593 = vld [vmem:[%s1 + $0x230] sm:$0xf]
      %v594 = vld [vmem:[%s1 + $0x234] sm:$0xf]
      %v595 = vld [vmem:[%s1 + $0x238] sm:$0xf]
      %v596 = vld [vmem:[%s1 + $0x23c] sm:$0xf]
      %v741 = vunpack.c.l.b16 %v453
      %v742 = vunpack.c.l.b16 %v454
      %v743 = vunpack.c.l.b16 %v455
      %v744 = vunpack.c.l.b16 %v456
      %v745 = vunpack.c.l.b16 %v457
      %v746 = vunpack.c.l.b16 %v458
      %v747 = vunpack.c.l.b16 %v459
      %v748 = vunpack.c.l.b16 %v460
      %v749 = vunpack.c.l.b16 %v461
      %v750 = vunpack.c.l.b16 %v462
      %v751 = vunpack.c.l.b16 %v463
      %v752 = vunpack.c.l.b16 %v464
      %v753 = vunpack.c.l.b16 %v465
      %v754 = vunpack.c.l.b16 %v466
      %v755 = vunpack.c.l.b16 %v467
      %v756 = vunpack.c.l.b16 %v468
      %v757 = vunpack.c.l.b16 %v469
      %v758 = vunpack.c.l.b16 %v470
      %v759 = vunpack.c.l.b16 %v471
      %v760 = vunpack.c.l.b16 %v472
      %v761 = vunpack.c.l.b16 %v473
      %v762 = vunpack.c.l.b16 %v474
      %v763 = vunpack.c.l.b16 %v475
      %v764 = vunpack.c.l.b16 %v476
      %v765 = vunpack.c.l.b16 %v477
      %v766 = vunpack.c.l.b16 %v478
      %v767 = vunpack.c.l.b16 %v479
      %v768 = vunpack.c.l.b16 %v480
      %v769 = vunpack.c.l.b16 %v481
      %v770 = vunpack.c.l.b16 %v482
      %v771 = vunpack.c.l.b16 %v483
      %v772 = vunpack.c.l.b16 %v484
      %v773 = vunpack.c.l.b16 %v485
      %v774 = vunpack.c.l.b16 %v486
      %v775 = vunpack.c.l.b16 %v487
      %v776 = vunpack.c.l.b16 %v488
      %v777 = vunpack.c.l.b16 %v489
      %v778 = vunpack.c.l.b16 %v490
      %v779 = vunpack.c.l.b16 %v491
      %v780 = vunpack.c.l.b16 %v492
      %v781 = vunpack.c.l.b16 %v493
      %v782 = vunpack.c.l.b16 %v494
      %v783 = vunpack.c.l.b16 %v495
      %v784 = vunpack.c.l.b16 %v496
      %v785 = vunpack.c.l.b16 %v497
      %v786 = vunpack.c.l.b16 %v498
      %v787 = vunpack.c.l.b16 %v499
      %v788 = vunpack.c.l.b16 %v500
      %v789 = vunpack.c.l.b16 %v501
      %v790 = vunpack.c.l.b16 %v502
      %v791 = vunpack.c.l.b16 %v503
      %v792 = vunpack.c.l.b16 %v504
      %v793 = vunpack.c.l.b16 %v505
      %v794 = vunpack.c.l.b16 %v506
      %v795 = vunpack.c.l.b16 %v507
      %v796 = vunpack.c.l.b16 %v508
      %v797 = vunpack.c.l.b16 %v509
      %v798 = vunpack.c.l.b16 %v510
      %v799 = vunpack.c.l.b16 %v511
      %v800 = vunpack.c.l.b16 %v512
      %v801 = vunpack.c.l.b16 %v513
      %v802 = vunpack.c.l.b16 %v514
      %v803 = vunpack.c.l.b16 %v515
      %v804 = vunpack.c.l.b16 %v516
      %v805 = vunpack.c.l.b16 %v517
      %v806 = vunpack.c.l.b16 %v518
      %v807 = vunpack.c.l.b16 %v519
      %v808 = vunpack.c.l.b16 %v520
      %v809 = vunpack.c.l.b16 %v521
      %v810 = vunpack.c.l.b16 %v522
      %v811 = vunpack.c.l.b16 %v523
      %v812 = vunpack.c.l.b16 %v524
      %v813 = vunpack.c.l.b16 %v525
      %v814 = vunpack.c.l.b16 %v526
      %v815 = vunpack.c.l.b16 %v527
      %v816 = vunpack.c.l.b16 %v528
      %v817 = vunpack.c.l.b16 %v529
      %v818 = vunpack.c.l.b16 %v530
      %v819 = vunpack.c.l.b16 %v531
      %v820 = vunpack.c.l.b16 %v532
      %v821 = vunpack.c.l.b16 %v533
      %v822 = vunpack.c.l.b16 %v534
      %v823 = vunpack.c.l.b16 %v535
      %v824 = vunpack.c.l.b16 %v536
      %v825 = vunpack.c.l.b16 %v537
      %v826 = vunpack.c.l.b16 %v538
      %v827 = vunpack.c.l.b16 %v539
      %v828 = vunpack.c.l.b16 %v540
      %v829 = vunpack.c.l.b16 %v541
      %v830 = vunpack.c.l.b16 %v542
      %v831 = vunpack.c.l.b16 %v543
      %v832 = vunpack.c.l.b16 %v544
      %v833 = vunpack.c.l.b16 %v545
      %v834 = vunpack.c.l.b16 %v546
      %v835 = vunpack.c.l.b16 %v547
      %v836 = vunpack.c.l.b16 %v548
      %v837 = vunpack.c.l.b16 %v549
      %v838 = vunpack.c.l.b16 %v550
      %v839 = vunpack.c.l.b16 %v551
      %v840 = vunpack.c.l.b16 %v552
      %v841 = vunpack.c.l.b16 %v553
      %v842 = vunpack.c.l.b16 %v554
      %v843 = vunpack.c.l.b16 %v555
      %v844 = vunpack.c.l.b16 %v556
      %v845 = vunpack.c.l.b16 %v557
      %v846 = vunpack.c.l.b16 %v558
      %v847 = vunpack.c.l.b16 %v559
      %v848 = vunpack.c.l.b16 %v560
      %v849 = vunpack.c.l.b16 %v561
      %v850 = vunpack.c.l.b16 %v562
      %v851 = vunpack.c.l.b16 %v563
      %v852 = vunpack.c.l.b16 %v564
      %v853 = vunpack.c.l.b16 %v565
      %v854 = vunpack.c.l.b16 %v566
      %v855 = vunpack.c.l.b16 %v567
      %v856 = vunpack.c.l.b16 %v568
      %v857 = vunpack.c.l.b16 %v569
      %v858 = vunpack.c.l.b16 %v570
      %v859 = vunpack.c.l.b16 %v571
      %v860 = vunpack.c.l.b16 %v572
      %v861 = vunpack.c.l.b16 %v573
      %v862 = vunpack.c.l.b16 %v574
      %v863 = vunpack.c.l.b16 %v575
      %v864 = vunpack.c.l.b16 %v576
      %v865 = vunpack.c.l.b16 %v577
      %v866 = vunpack.c.l.b16 %v578
      %v867 = vunpack.c.l.b16 %v579
      %v868 = vunpack.c.l.b16 %v580
      %v869 = vunpack.c.l.b16 %v581
      %v870 = vunpack.c.l.b16 %v582
      %v871 = vunpack.c.l.b16 %v583
      %v872 = vunpack.c.l.b16 %v584
      %v873 = vunpack.c.l.b16 %v585
      %v874 = vunpack.c.l.b16 %v586
      %v875 = vunpack.c.l.b16 %v587
      %v876 = vunpack.c.l.b16 %v588
      %v877 = vunpack.c.l.b16 %v589
      %v878 = vunpack.c.l.b16 %v590
      %v879 = vunpack.c.l.b16 %v591
      %v880 = vunpack.c.l.b16 %v592
      %v881 = vunpack.c.l.b16 %v593
      %v882 = vunpack.c.l.b16 %v594
      %v883 = vunpack.c.l.b16 %v595
      %v884 = vunpack.c.l.b16 %v596
      %v885 = vpack.c.b16 %v742, %v741
      %v886 = vpack.c.b16 %v744, %v743
      %v887 = vpack.c.b16 %v746, %v745
      %v888 = vpack.c.b16 %v748, %v747
      %v889 = vpack.c.b16 %v750, %v749
      %v890 = vpack.c.b16 %v752, %v751
      %v891 = vpack.c.b16 %v754, %v753
      %v892 = vpack.c.b16 %v756, %v755
      %v893 = vpack.c.b16 %v758, %v757
      %v894 = vpack.c.b16 %v760, %v759
      %v895 = vpack.c.b16 %v762, %v761
      %v896 = vpack.c.b16 %v764, %v763
      %v897 = vpack.c.b16 %v766, %v765
      %v898 = vpack.c.b16 %v768, %v767
      %v899 = vpack.c.b16 %v770, %v769
      %v900 = vpack.c.b16 %v772, %v771
      %v901 = vpack.c.b16 %v774, %v773
      %v902 = vpack.c.b16 %v776, %v775
      %v903 = vpack.c.b16 %v778, %v777
      %v904 = vpack.c.b16 %v780, %v779
      %v905 = vpack.c.b16 %v782, %v781
      %v906 = vpack.c.b16 %v784, %v783
      %v907 = vpack.c.b16 %v786, %v785
      %v908 = vpack.c.b16 %v788, %v787
      %v909 = vpack.c.b16 %v790, %v789
      %v910 = vpack.c.b16 %v792, %v791
      %v911 = vpack.c.b16 %v794, %v793
      %v912 = vpack.c.b16 %v796, %v795
      %v913 = vpack.c.b16 %v798, %v797
      %v914 = vpack.c.b16 %v800, %v799
      %v915 = vpack.c.b16 %v802, %v801
      %v916 = vpack.c.b16 %v804, %v803
      %v917 = vpack.c.b16 %v806, %v805
      %v918 = vpack.c.b16 %v808, %v807
      %v919 = vpack.c.b16 %v810, %v809
      %v920 = vpack.c.b16 %v812, %v811
      %v921 = vpack.c.b16 %v814, %v813
      %v922 = vpack.c.b16 %v816, %v815
      %v923 = vpack.c.b16 %v818, %v817
      %v924 = vpack.c.b16 %v820, %v819
      %v925 = vpack.c.b16 %v822, %v821
      %v926 = vpack.c.b16 %v824, %v823
      %v927 = vpack.c.b16 %v826, %v825
      %v928 = vpack.c.b16 %v828, %v827
      %v929 = vpack.c.b16 %v830, %v829
      %v930 = vpack.c.b16 %v832, %v831
      %v931 = vpack.c.b16 %v834, %v833
      %v932 = vpack.c.b16 %v836, %v835
      %v933 = vpack.c.b16 %v838, %v837
      %v934 = vpack.c.b16 %v840, %v839
      %v935 = vpack.c.b16 %v842, %v841
      %v936 = vpack.c.b16 %v844, %v843
      %v937 = vpack.c.b16 %v846, %v845
      %v938 = vpack.c.b16 %v848, %v847
      %v939 = vpack.c.b16 %v850, %v849
      %v940 = vpack.c.b16 %v852, %v851
      %v941 = vpack.c.b16 %v854, %v853
      %v942 = vpack.c.b16 %v856, %v855
      %v943 = vpack.c.b16 %v858, %v857
      %v944 = vpack.c.b16 %v860, %v859
      %v945 = vpack.c.b16 %v862, %v861
      %v946 = vpack.c.b16 %v864, %v863
      %v947 = vpack.c.b16 %v866, %v865
      %v948 = vpack.c.b16 %v868, %v867
      %v949 = vpack.c.b16 %v870, %v869
      %v950 = vpack.c.b16 %v872, %v871
      %v951 = vpack.c.b16 %v874, %v873
      %v952 = vpack.c.b16 %v876, %v875
      %v953 = vpack.c.b16 %v878, %v877
      %v954 = vpack.c.b16 %v880, %v879
      %v955 = vpack.c.b16 %v882, %v881
      %v956 = vpack.c.b16 %v884, %v883
      %1029 = vmatprep.subr.bf16.mxu0 0
      %1030 = vmatpush1.bf16.msra.mxu0 %v885
      %1031 = vmatprep.subr.bf16.mxu0 0
      %1032 = vmatpush1.bf16.msra.mxu0 %v886
      %1033 = vmatprep.subr.bf16.mxu0 0
      %1034 = vmatpush1.bf16.msra.mxu0 %v887
      %1035 = vmatprep.subr.bf16.mxu0 0
      %1036 = vmatpush1.bf16.msra.mxu0 %v888
      %1037 = vmatprep.subr.bf16.mxu0 0
      %1038 = vmatpush1.bf16.msra.mxu0 %v889
      %1039 = vmatprep.subr.bf16.mxu0 0
      %1040 = vmatpush1.bf16.msra.mxu0 %v890
      %1041 = vmatprep.subr.bf16.mxu0 0
      %1042 = vmatpush1.bf16.msra.mxu0 %v891
      %1043 = vmatprep.subr.bf16.mxu0 0
      %1044 = vmatpush1.bf16.msra.mxu0 %v892
      %1045 = vmatprep.subr.bf16.mxu0 0
      %1046 = vmatpush1.bf16.msra.mxu0 %v893
      %1047 = vmatprep.subr.bf16.mxu0 0
      %1048 = vmatpush1.bf16.msra.mxu0 %v894
      %1049 = vmatprep.subr.bf16.mxu0 0
      %1050 = vmatpush1.bf16.msra.mxu0 %v895
      %1051 = vmatprep.subr.bf16.mxu0 0
      %1052 = vmatpush1.bf16.msra.mxu0 %v896
      %1053 = vmatprep.subr.bf16.mxu0 0
      %1054 = vmatpush1.bf16.msra.mxu0 %v897
      %1055 = vmatprep.subr.bf16.mxu0 0
      %1056 = vmatpush1.bf16.msra.mxu0 %v898
      %1057 = vmatprep.subr.bf16.mxu0 0
      %1058 = vmatpush1.bf16.msra.mxu0 %v899
      %1059 = vmatprep.subr.bf16.mxu0 0
      %1060 = vmatpush1.bf16.msra.mxu0 %v900
      %1061 = vmatprep.mubr.bf16.mxu0 %v415
      %1062 = vmatmul.mubr.bf16.gmra.mrb[0].mxu0 %v399
      %v1063 = vpop.f32.mrb[0].mxu0
      %v1064 = vadd.f32 0.0, %v1063
      %v1065 = vpop.f32.mrb[0].mxu0
      %v1066 = vpop.f32.mrb[0].mxu0
      %v1067 = vadd.f32 0.0, %v1066
      %v1068 = vpop.f32.mrb[0].mxu0
      %1069 = vmatprep.mubr.bf16.mxu0 %v416
      %1070 = vmatmul.mubr.bf16.gmra.mrb[0].mxu0 %v400
      %v1071 = vpop.f32.mrb[0].mxu0
      %v1072 = vadd.f32 0.0, %v1071
      %v1073 = vpop.f32.mrb[0].mxu0
      %v1074 = vpop.f32.mrb[0].mxu0
      %v1075 = vadd.f32 0.0, %v1074
      %v1076 = vpop.f32.mrb[0].mxu0
      %1077 = vmatprep.mubr.bf16.mxu0 %v417
      %1078 = vmatmul.mubr.bf16.gmra.mrb[0].mxu0 %v401
      %v1079 = vpop.f32.mrb[0].mxu0
      %v1080 = vadd.f32 0.0, %v1079
      %v1081 = vpop.f32.mrb[0].mxu0
      %v1082 = vpop.f32.mrb[0].mxu0
      %v1083 = vadd.f32 0.0, %v1082
      %v1084 = vpop.f32.mrb[0].mxu0
      %1085 = vmatprep.mubr.bf16.mxu0 %v418
      %1086 = vmatmul.mubr.bf16.gmra.mrb[0].mxu0 %v402
      %v1087 = vpop.f32.mrb[0].mxu0
      %v1088 = vadd.f32 0.0, %v1087
      %v1089 = vpop.f32.mrb[0].mxu0
      %v1090 = vpop.f32.mrb[0].mxu0
      %v1091 = vadd.f32 0.0, %v1090
      %v1092 = vpop.f32.mrb[0].mxu0
      %1093 = vmatprep.mubr.bf16.mxu0 %v419
      %1094 = vmatmul.mubr.bf16.gmra.mrb[0].mxu0 %v403
      %v1095 = vpop.f32.mrb[0].mxu0
      %v1096 = vadd.f32 0.0, %v1095
      %v1097 = vpop.f32.mrb[0].mxu0
      %v1098 = vpop.f32.mrb[0].mxu0
      %v1099 = vadd.f32 0.0, %v1098
      %v1100 = vpop.f32.mrb[0].mxu0
      %1101 = vmatprep.mubr.bf16.mxu0 %v420
      %1102 = vmatmul.mubr.bf16.gmra.mrb[0].mxu0 %v404
      %v1103 = vpop.f32.mrb[0].mxu0
      %v1104 = vadd.f32 0.0, %v1103
      %v1105 = vpop.f32.mrb[0].mxu0
      %v1106 = vpop.f32.mrb[0].mxu0
      %v1107 = vadd.f32 0.0, %v1106
      %v1108 = vpop.f32.mrb[0].mxu0
      %1109 = vmatprep.mubr.bf16.mxu0 %v421
      %1110 = vmatmul.mubr.bf16.gmra.mrb[0].mxu0 %v405
      %v1111 = vpop.f32.mrb[0].mxu0
      %v1112 = vadd.f32 0.0, %v1111
      %v1113 = vpop.f32.mrb[0].mxu0
      %v1114 = vpop.f32.mrb[0].mxu0
      %v1115 = vadd.f32 0.0, %v1114
      %v1116 = vpop.f32.mrb[0].mxu0
      %1117 = vmatprep.mubr.bf16.mxu0 %v422
      %1118 = vmatmul.mubr.bf16.gmra.mrb[0].mxu0 %v406
      %v1119 = vpop.f32.mrb[0].mxu0
      %v1120 = vadd.f32 0.0, %v1119
      %v1121 = vpop.f32.mrb[0].mxu0
      %v1122 = vpop.f32.mrb[0].mxu0
      %v1123 = vadd.f32 0.0, %v1122
      %v1124 = vpop.f32.mrb[0].mxu0
      %1125 = vmatprep.mubr.bf16.mxu0 %v423
      %1126 = vmatmul.mubr.bf16.gmra.mrb[0].mxu0 %v407
      %v1127 = vpop.f32.mrb[0].mxu0
      %v1128 = vadd.f32 0.0, %v1127
      %v1129 = vpop.f32.mrb[0].mxu0
      %v1130 = vpop.f32.mrb[0].mxu0
      %v1131 = vadd.f32 0.0, %v1130
      %v1132 = vpop.f32.mrb[0].mxu0
      %1133 = vmatprep.mubr.bf16.mxu0 %v424
      %1134 = vmatmul.mubr.bf16.gmra.mrb[0].mxu0 %v408
      %v1135 = vpop.f32.mrb[0].mxu0
      %v1136 = vadd.f32 0.0, %v1135
      %v1137 = vpop.f32.mrb[0].mxu0
      %v1138 = vpop.f32.mrb[0].mxu0
      %v1139 = vadd.f32 0.0, %v1138
      %v1140 = vpop.f32.mrb[0].mxu0
      %1141 = vmatprep.mubr.bf16.mxu0 %v425
      %1142 = vmatmul.mubr.bf16.gmra.mrb[0].mxu0 %v409
      %v1143 = vpop.f32.mrb[0].mxu0
      %v1144 = vadd.f32 0.0, %v1143
      %v1145 = vpop.f32.mrb[0].mxu0
      %v1146 = vpop.f32.mrb[0].mxu0
      %v1147 = vadd.f32 0.0, %v1146
      %v1148 = vpop.f32.mrb[0].mxu0
      %1149 = vmatprep.mubr.bf16.mxu0 %v426
      %1150 = vmatmul.mubr.bf16.gmra.mrb[0].mxu0 %v410
      %v1151 = vpop.f32.mrb[0].mxu0
      %v1152 = vadd.f32 0.0, %v1151
      %v1153 = vpop.f32.mrb[0].mxu0
      %v1154 = vpop.f32.mrb[0].mxu0
      %v1155 = vadd.f32 0.0, %v1154
      %v1156 = vpop.f32.mrb[0].mxu0
      %1157 = vmatprep.mubr.bf16.mxu0 %v427
      %1158 = vmatmul.mubr.bf16.gmra.mrb[0].mxu0 %v411
      %v1159 = vpop.f32.mrb[0].mxu0
      %v1160 = vadd.f32 0.0, %v1159
      %v1161 = vpop.f32.mrb[0].mxu0
      %v1162 = vpop.f32.mrb[0].mxu0
      %v1163 = vadd.f32 0.0, %v1162
      %v1164 = vpop.f32.mrb[0].mxu0
      %1165 = vmatprep.mubr.bf16.mxu0 %v428
      %1166 = vmatmul.mubr.bf16.gmra.mrb[0].mxu0 %v412
      %v1167 = vpop.f32.mrb[0].mxu0
      %v1168 = vadd.f32 0.0, %v1167
      %v1169 = vpop.f32.mrb[0].mxu0
      %v1170 = vpop.f32.mrb[0].mxu0
      %v1171 = vadd.f32 0.0, %v1170
      %v1172 = vpop.f32.mrb[0].mxu0
      %1173 = vmatprep.mubr.bf16.mxu0 %v429
      %1174 = vmatmul.mubr.bf16.gmra.mrb[0].mxu0 %v413
      %v1175 = vpop.f32.mrb[0].mxu0
      %v1176 = vadd.f32 0.0, %v1175
      %v1177 = vpop.f32.mrb[0].mxu0
      %v1178 = vpop.f32.mrb[0].mxu0
      %v1179 = vadd.f32 0.0, %v1178
      %v1180 = vpop.f32.mrb[0].mxu0
      %1181 = vmatprep.mubr.bf16.mxu0 %v430
      %1182 = vmatmul.mubr.bf16.gmra.mrb[0].mxu0 %v414
      %v1183 = vpop.f32.mrb[0].mxu0
      %v1184 = vadd.f32 0.0, %v1183
      %v1185 = vpop.f32.mrb[0].mxu0
      %v1186 = vpop.f32.mrb[0].mxu0
      %v1187 = vadd.f32 0.0, %v1186
      %v1188 = vpop.f32.mrb[0].mxu0
      %1189 = vdwg.mxu0
      %1190 = vmatprep.subr.bf16.mxu0 0
      %1191 = vmatpush1.bf16.msra.mxu0 %v901
      %1192 = vmatprep.subr.bf16.mxu0 0
      %1193 = vmatpush1.bf16.msra.mxu0 %v902
      %1194 = vmatprep.subr.bf16.mxu0 0
      %1195 = vmatpush1.bf16.msra.mxu0 %v903
      %1196 = vmatprep.subr.bf16.mxu0 0
      %1197 = vmatpush1.bf16.msra.mxu0 %v904
      %1198 = vmatprep.subr.bf16.mxu0 0
      %1199 = vmatpush1.bf16.msra.mxu0 %v905
      %1200 = vmatprep.subr.bf16.mxu0 0
      %1201 = vmatpush1.bf16.msra.mxu0 %v906
      %1202 = vmatprep.subr.bf16.mxu0 0
      %1203 = vmatpush1.bf16.msra.mxu0 %v907
      %1204 = vmatprep.subr.bf16.mxu0 0
      %1205 = vmatpush1.bf16.msra.mxu0 %v908
      %1206 = vmatprep.subr.bf16.mxu0 0
      %1207 = vmatpush1.bf16.msra.mxu0 %v909
      %1208 = vmatprep.subr.bf16.mxu0 0
      %1209 = vmatpush1.bf16.msra.mxu0 %v910
      %1210 = vmatprep.subr.bf16.mxu0 0
      %1211 = vmatpush1.bf16.msra.mxu0 %v911
      %1212 = vmatprep.subr.bf16.mxu0 0
      %1213 = vmatpush1.bf16.msra.mxu0 %v912
      %1214 = vmatprep.subr.bf16.mxu0 0
      %1215 = vmatpush1.bf16.msra.mxu0 %v913
      %1216 = vmatprep.subr.bf16.mxu0 0
      %1217 = vmatpush1.bf16.msra.mxu0 %v914
      %1218 = vmatprep.subr.bf16.mxu0 0
      %1219 = vmatpush1.bf16.msra.mxu0 %v915
      %1220 = vmatprep.subr.bf16.mxu0 0
      %1221 = vmatpush1.bf16.msra.mxu0 %v916
      %1222 = vmatprep.mubr.bf16.mxu0 %v400
      %1223 = vmatmul.mubr.bf16.gmra.mrb[0].mxu0 %v431
      %v1224 = vpop.f32.mrb[0].mxu0
      %v1225 = vadd.f32 %v1064, %v1224
      %v1226 = vpop.f32.mrb[0].mxu0
      %v1227 = vpop.f32.mrb[0].mxu0
      %v1228 = vadd.f32 %v1067, %v1227
      %v1229 = vpop.f32.mrb[0].mxu0
      %1230 = vmatprep.mubr.bf16.mxu0 %v401
      %1231 = vmatmul.mubr.bf16.gmra.mrb[0].mxu0 %v432
      %v1232 = vpop.f32.mrb[0].mxu0
      %v1233 = vadd.f32 %v1072, %v1232
      %v1234 = vpop.f32.mrb[0].mxu0
      %v1235 = vpop.f32.mrb[0].mxu0
      %v1236 = vadd.f32 %v1075, %v1235
      %v1237 = vpop.f32.mrb[0].mxu0
      %1238 = vmatprep.mubr.bf16.mxu0 %v402
      %1239 = vmatmul.mubr.bf16.gmra.mrb[0].mxu0 %v433
      %v1240 = vpop.f32.mrb[0].mxu0
      %v1241 = vadd.f32 %v1080, %v1240
      %v1242 = vpop.f32.mrb[0].mxu0
      %v1243 = vpop.f32.mrb[0].mxu0
      %v1244 = vadd.f32 %v1083, %v1243
      %v1245 = vpop.f32.mrb[0].mxu0
      %1246 = vmatprep.mubr.bf16.mxu0 %v403
      %1247 = vmatmul.mubr.bf16.gmra.mrb[0].mxu0 %v434
      %v1248 = vpop.f32.mrb[0].mxu0
      %v1249 = vadd.f32 %v1088, %v1248
      %v1250 = vpop.f32.mrb[0].mxu0
      %v1251 = vpop.f32.mrb[0].mxu0
      %v1252 = vadd.f32 %v1091, %v1251
      %v1253 = vpop.f32.mrb[0].mxu0
      %1254 = vmatprep.mubr.bf16.mxu0 %v404
      %1255 = vmatmul.mubr.bf16.gmra.mrb[0].mxu0 %v435
      %v1256 = vpop.f32.mrb[0].mxu0
      %v1257 = vadd.f32 %v1096, %v1256
      %v1258 = vpop.f32.mrb[0].mxu0
      %v1259 = vpop.f32.mrb[0].mxu0
      %v1260 = vadd.f32 %v1099, %v1259
      %v1261 = vpop.f32.mrb[0].mxu0
      %1262 = vmatprep.mubr.bf16.mxu0 %v405
      %1263 = vmatmul.mubr.bf16.gmra.mrb[0].mxu0 %v436
      %v1264 = vpop.f32.mrb[0].mxu0
      %v1265 = vadd.f32 %v1104, %v1264
      %v1266 = vpop.f32.mrb[0].mxu0
      %v1267 = vpop.f32.mrb[0].mxu0
      %v1268 = vadd.f32 %v1107, %v1267
      %v1269 = vpop.f32.mrb[0].mxu0
      %1270 = vmatprep.mubr.bf16.mxu0 %v406
      %1271 = vmatmul.mubr.bf16.gmra.mrb[0].mxu0 %v437
      %v1272 = vpop.f32.mrb[0].mxu0
      %v1273 = vadd.f32 %v1112, %v1272
      %v1274 = vpop.f32.mrb[0].mxu0
      %v1275 = vpop.f32.mrb[0].mxu0
      %v1276 = vadd.f32 %v1115, %v1275
      %v1277 = vpop.f32.mrb[0].mxu0
      %1278 = vmatprep.mubr.bf16.mxu0 %v407
      %1279 = vmatmul.mubr.bf16.gmra.mrb[0].mxu0 %v438
      %v1280 = vpop.f32.mrb[0].mxu0
      %v1281 = vadd.f32 %v1120, %v1280
      %v1282 = vpop.f32.mrb[0].mxu0
      %v1283 = vpop.f32.mrb[0].mxu0
      %v1284 = vadd.f32 %v1123, %v1283
      %v1285 = vpop.f32.mrb[0].mxu0
      %1286 = vmatprep.mubr.bf16.mxu0 %v408
      %1287 = vmatmul.mubr.bf16.gmra.mrb[0].mxu0 %v439
      %v1288 = vpop.f32.mrb[0].mxu0
      %v1289 = vadd.f32 %v1128, %v1288
      %v1290 = vpop.f32.mrb[0].mxu0
      %v1291 = vpop.f32.mrb[0].mxu0
      %v1292 = vadd.f32 %v1131, %v1291
      %v1293 = vpop.f32.mrb[0].mxu0
      %1294 = vmatprep.mubr.bf16.mxu0 %v409
      %1295 = vmatmul.mubr.bf16.gmra.mrb[0].mxu0 %v440
      %v1296 = vpop.f32.mrb[0].mxu0
      %v1297 = vadd.f32 %v1136, %v1296
      %v1298 = vpop.f32.mrb[0].mxu0
      %v1299 = vpop.f32.mrb[0].mxu0
      %v1300 = vadd.f32 %v1139, %v1299
      %v1301 = vpop.f32.mrb[0].mxu0
      %1302 = vmatprep.mubr.bf16.mxu0 %v410
      %1303 = vmatmul.mubr.bf16.gmra.mrb[0].mxu0 %v441
      %v1304 = vpop.f32.mrb[0].mxu0
      %v1305 = vadd.f32 %v1144, %v1304
      %v1306 = vpop.f32.mrb[0].mxu0
      %v1307 = vpop.f32.mrb[0].mxu0
      %v1308 = vadd.f32 %v1147, %v1307
      %v1309 = vpop.f32.mrb[0].mxu0
      %1310 = vmatprep.mubr.bf16.mxu0 %v411
      %1311 = vmatmul.mubr.bf16.gmra.mrb[0].mxu0 %v442
      %v1312 = vpop.f32.mrb[0].mxu0
      %v1313 = vadd.f32 %v1152, %v1312
      %v1314 = vpop.f32.mrb[0].mxu0
      %v1315 = vpop.f32.mrb[0].mxu0
      %v1316 = vadd.f32 %v1155, %v1315
      %v1317 = vpop.f32.mrb[0].mxu0
      %1318 = vmatprep.mubr.bf16.mxu0 %v412
      %1319 = vmatmul.mubr.bf16.gmra.mrb[0].mxu0 %v443
      %v1320 = vpop.f32.mrb[0].mxu0
      %v1321 = vadd.f32 %v1160, %v1320
      %v1322 = vpop.f32.mrb[0].mxu0
      %v1323 = vpop.f32.mrb[0].mxu0
      %v1324 = vadd.f32 %v1163, %v1323
      %v1325 = vpop.f32.mrb[0].mxu0
      %1326 = vmatprep.mubr.bf16.mxu0 %v413
      %1327 = vmatmul.mubr.bf16.gmra.mrb[0].mxu0 %v444
      %v1328 = vpop.f32.mrb[0].mxu0
      %v1329 = vadd.f32 %v1168, %v1328
      %v1330 = vpop.f32.mrb[0].mxu0
      %v1331 = vpop.f32.mrb[0].mxu0
      %v1332 = vadd.f32 %v1171, %v1331
      %v1333 = vpop.f32.mrb[0].mxu0
      %1334 = vmatprep.mubr.bf16.mxu0 %v414
      %1335 = vmatmul.mubr.bf16.gmra.mrb[0].mxu0 %v445
      %v1336 = vpop.f32.mrb[0].mxu0
      %v1337 = vadd.f32 %v1176, %v1336
      %v1338 = vpop.f32.mrb[0].mxu0
      %v1339 = vpop.f32.mrb[0].mxu0
      %v1340 = vadd.f32 %v1179, %v1339
      %v1341 = vpop.f32.mrb[0].mxu0
      %1342 = vmatprep.mubr.bf16.mxu0 %v447
      %1343 = vmatmul.mubr.bf16.gmra.mrb[0].mxu0 %v446
      %v1344 = vpop.f32.mrb[0].mxu0
      %v1345 = vadd.f32 %v1184, %v1344
      %v1346 = vpop.f32.mrb[0].mxu0
      %v1347 = vpop.f32.mrb[0].mxu0
      %v1348 = vadd.f32 %v1187, %v1347
      %v1349 = vpop.f32.mrb[0].mxu0
      %1350 = vdwg.mxu0
      %1351 = vmatprep.subr.bf16.mxu0 0
      %1352 = vmatpush1.bf16.msra.mxu0 %v917
      %1353 = vmatprep.subr.bf16.mxu0 0
      %1354 = vmatpush1.bf16.msra.mxu0 %v918
      %1355 = vmatprep.subr.bf16.mxu0 0
      %1356 = vmatpush1.bf16.msra.mxu0 %v919
      %1357 = vmatprep.subr.bf16.mxu0 0
      %1358 = vmatpush1.bf16.msra.mxu0 %v920
      %1359 = vmatprep.subr.bf16.mxu0 0
      %1360 = vmatpush1.bf16.msra.mxu0 %v921
      %1361 = vmatprep.subr.bf16.mxu0 0
      %1362 = vmatpush1.bf16.msra.mxu0 %v922
      %1363 = vmatprep.subr.bf16.mxu0 0
      %1364 = vmatpush1.bf16.msra.mxu0 %v923
      %1365 = vmatprep.subr.bf16.mxu0 0
      %1366 = vmatpush1.bf16.msra.mxu0 %v924
      %1367 = vmatprep.subr.bf16.mxu0 0
      %1368 = vmatpush1.bf16.msra.mxu0 %v925
      %1369 = vmatprep.subr.bf16.mxu0 0
      %1370 = vmatpush1.bf16.msra.mxu0 %v926
      %1371 = vmatprep.subr.bf16.mxu0 0
      %1372 = vmatpush1.bf16.msra.mxu0 %v927
      %1373 = vmatprep.subr.bf16.mxu0 0
      %1374 = vmatpush1.bf16.msra.mxu0 %v928
      %1375 = vmatprep.subr.bf16.mxu0 0
      %1376 = vmatpush1.bf16.msra.mxu0 %v929
      %1377 = vmatprep.subr.bf16.mxu0 0
      %1378 = vmatpush1.bf16.msra.mxu0 %v930
      %1379 = vmatprep.subr.bf16.mxu0 0
      %1380 = vmatpush1.bf16.msra.mxu0 %v931
      %1381 = vmatprep.subr.bf16.mxu0 0
      %1382 = vmatpush1.bf16.msra.mxu0 %v932
      %1383 = vmatprep.mubr.bf16.mxu0 %v432
      %1384 = vmatmul.mubr.bf16.gmra.mrb[0].mxu0 %v416
      %v1385 = vpop.f32.mrb[0].mxu0
      %v1386 = vadd.f32 %v1225, %v1385
      %v1387 = vpop.f32.mrb[0].mxu0
      %v1388 = vpop.f32.mrb[0].mxu0
      %v1389 = vadd.f32 %v1228, %v1388
      %v1390 = vpop.f32.mrb[0].mxu0
      %1391 = vmatprep.mubr.bf16.mxu0 %v433
      %1392 = vmatmul.mubr.bf16.gmra.mrb[0].mxu0 %v417
      %v1393 = vpop.f32.mrb[0].mxu0
      %v1394 = vadd.f32 %v1233, %v1393
      %v1395 = vpop.f32.mrb[0].mxu0
      %v1396 = vpop.f32.mrb[0].mxu0
      %v1397 = vadd.f32 %v1236, %v1396
      %v1398 = vpop.f32.mrb[0].mxu0
      %1399 = vmatprep.mubr.bf16.mxu0 %v434
      %1400 = vmatmul.mubr.bf16.gmra.mrb[0].mxu0 %v418
      %v1401 = vpop.f32.mrb[0].mxu0
      %v1402 = vadd.f32 %v1241, %v1401
      %v1403 = vpop.f32.mrb[0].mxu0
      %v1404 = vpop.f32.mrb[0].mxu0
      %v1405 = vadd.f32 %v1244, %v1404
      %v1406 = vpop.f32.mrb[0].mxu0
      %1407 = vmatprep.mubr.bf16.mxu0 %v435
      %1408 = vmatmul.mubr.bf16.gmra.mrb[0].mxu0 %v419
      %v1409 = vpop.f32.mrb[0].mxu0
      %v1410 = vadd.f32 %v1249, %v1409
      %v1411 = vpop.f32.mrb[0].mxu0
      %v1412 = vpop.f32.mrb[0].mxu0
      %v1413 = vadd.f32 %v1252, %v1412
      %v1414 = vpop.f32.mrb[0].mxu0
      %1415 = vmatprep.mubr.bf16.mxu0 %v436
      %1416 = vmatmul.mubr.bf16.gmra.mrb[0].mxu0 %v420
      %v1417 = vpop.f32.mrb[0].mxu0
      %v1418 = vadd.f32 %v1257, %v1417
      %v1419 = vpop.f32.mrb[0].mxu0
      %v1420 = vpop.f32.mrb[0].mxu0
      %v1421 = vadd.f32 %v1260, %v1420
      %v1422 = vpop.f32.mrb[0].mxu0
      %1423 = vmatprep.mubr.bf16.mxu0 %v437
      %1424 = vmatmul.mubr.bf16.gmra.mrb[0].mxu0 %v421
      %v1425 = vpop.f32.mrb[0].mxu0
      %v1426 = vadd.f32 %v1265, %v1425
      %v1427 = vpop.f32.mrb[0].mxu0
      %v1428 = vpop.f32.mrb[0].mxu0
      %v1429 = vadd.f32 %v1268, %v1428
      %v1430 = vpop.f32.mrb[0].mxu0
      %1431 = vmatprep.mubr.bf16.mxu0 %v438
      %1432 = vmatmul.mubr.bf16.gmra.mrb[0].mxu0 %v422
      %v1433 = vpop.f32.mrb[0].mxu0
      %v1434 = vadd.f32 %v1273, %v1433
      %v1435 = vpop.f32.mrb[0].mxu0
      %v1436 = vpop.f32.mrb[0].mxu0
      %v1437 = vadd.f32 %v1276, %v1436
      %v1438 = vpop.f32.mrb[0].mxu0
      %1439 = vmatprep.mubr.bf16.mxu0 %v439
      %1440 = vmatmul.mubr.bf16.gmra.mrb[0].mxu0 %v423
      %v1441 = vpop.f32.mrb[0].mxu0
      %v1442 = vadd.f32 %v1281, %v1441
      %v1443 = vpop.f32.mrb[0].mxu0
      %v1444 = vpop.f32.mrb[0].mxu0
      %v1445 = vadd.f32 %v1284, %v1444
      %v1446 = vpop.f32.mrb[0].mxu0
      %1447 = vmatprep.mubr.bf16.mxu0 %v440
      %1448 = vmatmul.mubr.bf16.gmra.mrb[0].mxu0 %v424
      %v1449 = vpop.f32.mrb[0].mxu0
      %v1450 = vadd.f32 %v1289, %v1449
      %v1451 = vpop.f32.mrb[0].mxu0
      %v1452 = vpop.f32.mrb[0].mxu0
      %v1453 = vadd.f32 %v1292, %v1452
      %v1454 = vpop.f32.mrb[0].mxu0
      %1455 = vmatprep.mubr.bf16.mxu0 %v441
      %1456 = vmatmul.mubr.bf16.gmra.mrb[0].mxu0 %v425
      %v1457 = vpop.f32.mrb[0].mxu0
      %v1458 = vadd.f32 %v1297, %v1457
      %v1459 = vpop.f32.mrb[0].mxu0
      %v1460 = vpop.f32.mrb[0].mxu0
      %v1461 = vadd.f32 %v1300, %v1460
      %v1462 = vpop.f32.mrb[0].mxu0
      %1463 = vmatprep.mubr.bf16.mxu0 %v442
      %1464 = vmatmul.mubr.bf16.gmra.mrb[0].mxu0 %v426
      %v1465 = vpop.f32.mrb[0].mxu0
      %v1466 = vadd.f32 %v1305, %v1465
      %v1467 = vpop.f32.mrb[0].mxu0
      %v1468 = vpop.f32.mrb[0].mxu0
      %v1469 = vadd.f32 %v1308, %v1468
      %v1470 = vpop.f32.mrb[0].mxu0
      %1471 = vmatprep.mubr.bf16.mxu0 %v443
      %1472 = vmatmul.mubr.bf16.gmra.mrb[0].mxu0 %v427
      %v1473 = vpop.f32.mrb[0].mxu0
      %v1474 = vadd.f32 %v1313, %v1473
      %v1475 = vpop.f32.mrb[0].mxu0
      %v1476 = vpop.f32.mrb[0].mxu0
      %v1477 = vadd.f32 %v1316, %v1476
      %v1478 = vpop.f32.mrb[0].mxu0
      %1479 = vmatprep.mubr.bf16.mxu0 %v444
      %1480 = vmatmul.mubr.bf16.gmra.mrb[0].mxu0 %v428
      %v1481 = vpop.f32.mrb[0].mxu0
      %v1482 = vadd.f32 %v1321, %v1481
      %v1483 = vpop.f32.mrb[0].mxu0
      %v1484 = vpop.f32.mrb[0].mxu0
      %v1485 = vadd.f32 %v1324, %v1484
      %v1486 = vpop.f32.mrb[0].mxu0
      %1487 = vmatprep.mubr.bf16.mxu0 %v445
      %1488 = vmatmul.mubr.bf16.gmra.mrb[0].mxu0 %v429
      %v1489 = vpop.f32.mrb[0].mxu0
      %v1490 = vadd.f32 %v1329, %v1489
      %v1491 = vpop.f32.mrb[0].mxu0
      %v1492 = vpop.f32.mrb[0].mxu0
      %v1493 = vadd.f32 %v1332, %v1492
      %v1494 = vpop.f32.mrb[0].mxu0
      %1495 = vmatprep.mubr.bf16.mxu0 %v446
      %1496 = vmatmul.mubr.bf16.gmra.mrb[0].mxu0 %v430
      %v1497 = vpop.f32.mrb[0].mxu0
      %v1498 = vadd.f32 %v1337, %v1497
      %v1499 = vpop.f32.mrb[0].mxu0
      %v1500 = vpop.f32.mrb[0].mxu0
      %v1501 = vadd.f32 %v1340, %v1500
      %v1502 = vpop.f32.mrb[0].mxu0
      %1503 = vmatprep.mubr.bf16.mxu0 %v449
      %1504 = vmatmul.mubr.bf16.gmra.mrb[0].mxu0 %v448
      %v1505 = vpop.f32.mrb[0].mxu0
      %v1506 = vadd.f32 %v1345, %v1505
      %v1507 = vpop.f32.mrb[0].mxu0
      %v1508 = vpop.f32.mrb[0].mxu0
      %v1509 = vadd.f32 %v1348, %v1508
      %v1510 = vpop.f32.mrb[0].mxu0
      %1511 = vdwg.mxu0
      %1512 = vmatprep.subr.bf16.mxu0 0
      %1513 = vmatpush1.bf16.msra.mxu0 %v933
      %1514 = vmatprep.subr.bf16.mxu0 0
      %1515 = vmatpush1.bf16.msra.mxu0 %v934
      %1516 = vmatprep.subr.bf16.mxu0 0
      %1517 = vmatpush1.bf16.msra.mxu0 %v935
      %1518 = vmatprep.subr.bf16.mxu0 0
      %1519 = vmatpush1.bf16.msra.mxu0 %v936
      %1520 = vmatprep.subr.bf16.mxu0 0
      %1521 = vmatpush1.bf16.msra.mxu0 %v937
      %1522 = vmatprep.subr.bf16.mxu0 0
      %1523 = vmatpush1.bf16.msra.mxu0 %v938
      %1524 = vmatprep.subr.bf16.mxu0 0
      %1525 = vmatpush1.bf16.msra.mxu0 %v939
      %1526 = vmatprep.subr.bf16.mxu0 0
      %1527 = vmatpush1.bf16.msra.mxu0 %v940
      %1528 = vmatprep.subr.bf16.mxu0 0
      %1529 = vmatpush1.bf16.msra.mxu0 %v941
      %1530 = vmatprep.subr.bf16.mxu0 0
      %1531 = vmatpush1.bf16.msra.mxu0 %v942
      %1532 = vmatprep.subr.bf16.mxu0 0
      %1533 = vmatpush1.bf16.msra.mxu0 %v943
      %1534 = vmatprep.subr.bf16.mxu0 0
      %1535 = vmatpush1.bf16.msra.mxu0 %v944
      %1536 = vmatprep.subr.bf16.mxu0 0
      %1537 = vmatpush1.bf16.msra.mxu0 %v945
      %1538 = vmatprep.subr.bf16.mxu0 0
      %1539 = vmatpush1.bf16.msra.mxu0 %v946
      %1540 = vmatprep.subr.bf16.mxu0 0
      %1541 = vmatpush1.bf16.msra.mxu0 %v947
      %1542 = vmatprep.subr.bf16.mxu0 0
      %1543 = vmatpush1.bf16.msra.mxu0 %v948
      %1544 = vmatprep.mubr.bf16.mxu0 %v417
      %1545 = vmatmul.mubr.bf16.gmra.mrb[0].mxu0 %v401
      %v1546 = vpop.f32.mrb[0].mxu0
      %v1547 = vadd.f32 %v1386, %v1546
      %v1548 = vpop.f32.mrb[0].mxu0
      %v1549 = vpop.f32.mrb[0].mxu0
      %v1550 = vadd.f32 %v1389, %v1549
      %v1551 = vpop.f32.mrb[0].mxu0
      %1552 = vmatprep.mubr.bf16.mxu0 %v418
      %1553 = vmatmul.mubr.bf16.gmra.mrb[0].mxu0 %v402
      %v1554 = vpop.f32.mrb[0].mxu0
      %v1555 = vadd.f32 %v1394, %v1554
      %v1556 = vpop.f32.mrb[0].mxu0
      %v1557 = vpop.f32.mrb[0].mxu0
      %v1558 = vadd.f32 %v1397, %v1557
      %v1559 = vpop.f32.mrb[0].mxu0
      %1560 = vmatprep.mubr.bf16.mxu0 %v419
      %1561 = vmatmul.mubr.bf16.gmra.mrb[0].mxu0 %v403
      %v1562 = vpop.f32.mrb[0].mxu0
      %v1563 = vadd.f32 %v1402, %v1562
      %v1564 = vpop.f32.mrb[0].mxu0
      %v1565 = vpop.f32.mrb[0].mxu0
      %v1566 = vadd.f32 %v1405, %v1565
      %v1567 = vpop.f32.mrb[0].mxu0
      %1568 = vmatprep.mubr.bf16.mxu0 %v420
      %1569 = vmatmul.mubr.bf16.gmra.mrb[0].mxu0 %v404
      %v1570 = vpop.f32.mrb[0].mxu0
      %v1571 = vadd.f32 %v1410, %v1570
      %v1572 = vpop.f32.mrb[0].mxu0
      %v1573 = vpop.f32.mrb[0].mxu0
      %v1574 = vadd.f32 %v1413, %v1573
      %v1575 = vpop.f32.mrb[0].mxu0
      %1576 = vmatprep.mubr.bf16.mxu0 %v421
      %1577 = vmatmul.mubr.bf16.gmra.mrb[0].mxu0 %v405
      %v1578 = vpop.f32.mrb[0].mxu0
      %v1579 = vadd.f32 %v1418, %v1578
      %v1580 = vpop.f32.mrb[0].mxu0
      %v1581 = vpop.f32.mrb[0].mxu0
      %v1582 = vadd.f32 %v1421, %v1581
      %v1583 = vpop.f32.mrb[0].mxu0
      %1584 = vmatprep.mubr.bf16.mxu0 %v422
      %1585 = vmatmul.mubr.bf16.gmra.mrb[0].mxu0 %v406
      %v1586 = vpop.f32.mrb[0].mxu0
      %v1587 = vadd.f32 %v1426, %v1586
      %v1588 = vpop.f32.mrb[0].mxu0
      %v1589 = vpop.f32.mrb[0].mxu0
      %v1590 = vadd.f32 %v1429, %v1589
      %v1591 = vpop.f32.mrb[0].mxu0
      %1592 = vmatprep.mubr.bf16.mxu0 %v423
      %1593 = vmatmul.mubr.bf16.gmra.mrb[0].mxu0 %v407
      %v1594 = vpop.f32.mrb[0].mxu0
      %v1595 = vadd.f32 %v1434, %v1594
      %v1596 = vpop.f32.mrb[0].mxu0
      %v1597 = vpop.f32.mrb[0].mxu0
      %v1598 = vadd.f32 %v1437, %v1597
      %v1599 = vpop.f32.mrb[0].mxu0
      %1600 = vmatprep.mubr.bf16.mxu0 %v424
      %1601 = vmatmul.mubr.bf16.gmra.mrb[0].mxu0 %v408
      %v1602 = vpop.f32.mrb[0].mxu0
      %v1603 = vadd.f32 %v1442, %v1602
      %v1604 = vpop.f32.mrb[0].mxu0
      %v1605 = vpop.f32.mrb[0].mxu0
      %v1606 = vadd.f32 %v1445, %v1605
      %v1607 = vpop.f32.mrb[0].mxu0
      %1608 = vmatprep.mubr.bf16.mxu0 %v425
      %1609 = vmatmul.mubr.bf16.gmra.mrb[0].mxu0 %v409
      %v1610 = vpop.f32.mrb[0].mxu0
      %v1611 = vadd.f32 %v1450, %v1610
      %v1612 = vpop.f32.mrb[0].mxu0
      %v1613 = vpop.f32.mrb[0].mxu0
      %v1614 = vadd.f32 %v1453, %v1613
      %v1615 = vpop.f32.mrb[0].mxu0
      %1616 = vmatprep.mubr.bf16.mxu0 %v426
      %1617 = vmatmul.mubr.bf16.gmra.mrb[0].mxu0 %v410
      %v1618 = vpop.f32.mrb[0].mxu0
      %v1619 = vadd.f32 %v1458, %v1618
      %v1620 = vpop.f32.mrb[0].mxu0
      %v1621 = vpop.f32.mrb[0].mxu0
      %v1622 = vadd.f32 %v1461, %v1621
      %v1623 = vpop.f32.mrb[0].mxu0
      %1624 = vmatprep.mubr.bf16.mxu0 %v427
      %1625 = vmatmul.mubr.bf16.gmra.mrb[0].mxu0 %v411
      %v1626 = vpop.f32.mrb[0].mxu0
      %v1627 = vadd.f32 %v1466, %v1626
      %v1628 = vpop.f32.mrb[0].mxu0
      %v1629 = vpop.f32.mrb[0].mxu0
      %v1630 = vadd.f32 %v1469, %v1629
      %v1631 = vpop.f32.mrb[0].mxu0
      %1632 = vmatprep.mubr.bf16.mxu0 %v428
      %1633 = vmatmul.mubr.bf16.gmra.mrb[0].mxu0 %v412
      %v1634 = vpop.f32.mrb[0].mxu0
      %v1635 = vadd.f32 %v1474, %v1634
      %v1636 = vpop.f32.mrb[0].mxu0
      %v1637 = vpop.f32.mrb[0].mxu0
      %v1638 = vadd.f32 %v1477, %v1637
      %v1639 = vpop.f32.mrb[0].mxu0
      %1640 = vmatprep.mubr.bf16.mxu0 %v429
      %1641 = vmatmul.mubr.bf16.gmra.mrb[0].mxu0 %v413
      %v1642 = vpop.f32.mrb[0].mxu0
      %v1643 = vadd.f32 %v1482, %v1642
      %v1644 = vpop.f32.mrb[0].mxu0
      %v1645 = vpop.f32.mrb[0].mxu0
      %v1646 = vadd.f32 %v1485, %v1645
      %v1647 = vpop.f32.mrb[0].mxu0
      %1648 = vmatprep.mubr.bf16.mxu0 %v430
      %1649 = vmatmul.mubr.bf16.gmra.mrb[0].mxu0 %v414
      %v1650 = vpop.f32.mrb[0].mxu0
      %v1651 = vadd.f32 %v1490, %v1650
      %v1652 = vpop.f32.mrb[0].mxu0
      %v1653 = vpop.f32.mrb[0].mxu0
      %v1654 = vadd.f32 %v1493, %v1653
      %v1655 = vpop.f32.mrb[0].mxu0
      %1656 = vmatprep.mubr.bf16.mxu0 %v448
      %1657 = vmatmul.mubr.bf16.gmra.mrb[0].mxu0 %v447
      %v1658 = vpop.f32.mrb[0].mxu0
      %v1659 = vadd.f32 %v1498, %v1658
      %v1660 = vpop.f32.mrb[0].mxu0
      %v1661 = vpop.f32.mrb[0].mxu0
      %v1662 = vadd.f32 %v1501, %v1661
      %v1663 = vpop.f32.mrb[0].mxu0
      %1664 = vmatprep.mubr.bf16.mxu0 %v451
      %1665 = vmatmul.mubr.bf16.gmra.mrb[0].mxu0 %v450
      %v1666 = vpop.f32.mrb[0].mxu0
      %v1667 = vadd.f32 %v1506, %v1666
      %v1668 = vpop.f32.mrb[0].mxu0
      %v1669 = vpop.f32.mrb[0].mxu0
      %v1670 = vadd.f32 %v1509, %v1669
      %v1671 = vpop.f32.mrb[0].mxu0
      %1672 = vdwg.mxu0
      %1673 = vmatprep.subr.bf16.mxu0 0
      %1674 = vmatpush1.bf16.msra.mxu0 %v949
      %1675 = vmatprep.subr.bf16.mxu0 0
      %1676 = vmatpush1.bf16.msra.mxu0 %v950
      %1677 = vmatprep.subr.bf16.mxu0 0
      %1678 = vmatpush1.bf16.msra.mxu0 %v951
      %1679 = vmatprep.subr.bf16.mxu0 0
      %1680 = vmatpush1.bf16.msra.mxu0 %v952
      %1681 = vmatprep.subr.bf16.mxu0 0
      %1682 = vmatpush1.bf16.msra.mxu0 %v953
      %1683 = vmatprep.subr.bf16.mxu0 0
      %1684 = vmatpush1.bf16.msra.mxu0 %v954
      %1685 = vmatprep.subr.bf16.mxu0 0
      %1686 = vmatpush1.bf16.msra.mxu0 %v955
      %1687 = vmatprep.subr.bf16.mxu0 0
      %1688 = vmatpush1.bf16.msra.mxu0 %v956
      %1689 = vmatprep.subr.bf16.mxu0 0
      %1690 = vmatpush1.bf16.msra.mxu0 0
      %1691 = vmatprep.subr.bf16.mxu0 0
      %1692 = vmatpush1.bf16.msra.mxu0 0
      %1693 = vmatprep.subr.bf16.mxu0 0
      %1694 = vmatpush1.bf16.msra.mxu0 0
      %1695 = vmatprep.subr.bf16.mxu0 0
      %1696 = vmatpush1.bf16.msra.mxu0 0
      %1697 = vmatprep.subr.bf16.mxu0 0
      %1698 = vmatpush1.bf16.msra.mxu0 0
      %1699 = vmatprep.subr.bf16.mxu0 0
      %1700 = vmatpush1.bf16.msra.mxu0 0
      %1701 = vmatprep.subr.bf16.mxu0 0
      %1702 = vmatpush1.bf16.msra.mxu0 0
      %1703 = vmatprep.subr.bf16.mxu0 0
      %1704 = vmatpush1.bf16.msra.mxu0 0
      %1705 = vmatprep.mubr.bf16.mxu0 0
      %1706 = vmatmul.mubr.bf16.gmra.mrb[0].mxu0 %v433
      %v1707 = vpop.f32.mrb[0].mxu0
      %v1708 = vadd.f32 %v1547, %v1707
      %v1709 = vpop.f32.mrb[0].mxu0
      %v1710 = vpop.f32.mrb[0].mxu0
      %v1711 = vadd.f32 %v1550, %v1710
      %v1712 = vpop.f32.mrb[0].mxu0
      %1713 = vmatprep.mubr.bf16.mxu0 0
      %1714 = vmatmul.mubr.bf16.gmra.mrb[0].mxu0 %v434
      %v1715 = vpop.f32.mrb[0].mxu0
      %v1716 = vadd.f32 %v1555, %v1715
      %v1717 = vpop.f32.mrb[0].mxu0
      %v1718 = vpop.f32.mrb[0].mxu0
      %v1719 = vadd.f32 %v1558, %v1718
      %v1720 = vpop.f32.mrb[0].mxu0
      %1721 = vmatprep.mubr.bf16.mxu0 0
      %1722 = vmatmul.mubr.bf16.gmra.mrb[0].mxu0 %v435
      %v1723 = vpop.f32.mrb[0].mxu0
      %v1724 = vadd.f32 %v1563, %v1723
      %v1725 = vpop.f32.mrb[0].mxu0
      %v1726 = vpop.f32.mrb[0].mxu0
      %v1727 = vadd.f32 %v1566, %v1726
      %v1728 = vpop.f32.mrb[0].mxu0
      %1729 = vmatprep.mubr.bf16.mxu0 0
      %1730 = vmatmul.mubr.bf16.gmra.mrb[0].mxu0 %v436
      %v1731 = vpop.f32.mrb[0].mxu0
      %v1732 = vadd.f32 %v1571, %v1731
      %v1733 = vpop.f32.mrb[0].mxu0
      %v1734 = vpop.f32.mrb[0].mxu0
      %v1735 = vadd.f32 %v1574, %v1734
      %v1736 = vpop.f32.mrb[0].mxu0
      %1737 = vmatprep.mubr.bf16.mxu0 0
      %1738 = vmatmul.mubr.bf16.gmra.mrb[0].mxu0 %v437
      %v1739 = vpop.f32.mrb[0].mxu0
      %v1740 = vadd.f32 %v1579, %v1739
      %v1741 = vpop.f32.mrb[0].mxu0
      %v1742 = vpop.f32.mrb[0].mxu0
      %v1743 = vadd.f32 %v1582, %v1742
      %v1744 = vpop.f32.mrb[0].mxu0
      %1745 = vmatprep.mubr.bf16.mxu0 0
      %1746 = vmatmul.mubr.bf16.gmra.mrb[0].mxu0 %v438
      %v1747 = vpop.f32.mrb[0].mxu0
      %v1748 = vadd.f32 %v1587, %v1747
      %v1749 = vpop.f32.mrb[0].mxu0
      %v1750 = vpop.f32.mrb[0].mxu0
      %v1751 = vadd.f32 %v1590, %v1750
      %v1752 = vpop.f32.mrb[0].mxu0
      %1753 = vmatprep.mubr.bf16.mxu0 0
      %1754 = vmatmul.mubr.bf16.gmra.mrb[0].mxu0 %v439
      %v1755 = vpop.f32.mrb[0].mxu0
      %v1756 = vadd.f32 %v1595, %v1755
      %v1757 = vpop.f32.mrb[0].mxu0
      %v1758 = vpop.f32.mrb[0].mxu0
      %v1759 = vadd.f32 %v1598, %v1758
      %v1760 = vpop.f32.mrb[0].mxu0
      %1761 = vmatprep.mubr.bf16.mxu0 0
      %1762 = vmatmul.mubr.bf16.gmra.mrb[0].mxu0 %v440
      %v1763 = vpop.f32.mrb[0].mxu0
      %v1764 = vadd.f32 %v1603, %v1763
      %v1765 = vpop.f32.mrb[0].mxu0
      %v1766 = vpop.f32.mrb[0].mxu0
      %v1767 = vadd.f32 %v1606, %v1766
      %v1768 = vpop.f32.mrb[0].mxu0
      %1769 = vmatprep.mubr.bf16.mxu0 0
      %1770 = vmatmul.mubr.bf16.gmra.mrb[0].mxu0 %v441
      %v1771 = vpop.f32.mrb[0].mxu0
      %v1772 = vadd.f32 %v1611, %v1771
      %v1773 = vpop.f32.mrb[0].mxu0
      %v1774 = vpop.f32.mrb[0].mxu0
      %v1775 = vadd.f32 %v1614, %v1774
      %v1776 = vpop.f32.mrb[0].mxu0
      %1777 = vmatprep.mubr.bf16.mxu0 0
      %1778 = vmatmul.mubr.bf16.gmra.mrb[0].mxu0 %v442
      %v1779 = vpop.f32.mrb[0].mxu0
      %v1780 = vadd.f32 %v1619, %v1779
      %v1781 = vpop.f32.mrb[0].mxu0
      %v1782 = vpop.f32.mrb[0].mxu0
      %v1783 = vadd.f32 %v1622, %v1782
      %v1784 = vpop.f32.mrb[0].mxu0
      %1785 = vmatprep.mubr.bf16.mxu0 0
      %1786 = vmatmul.mubr.bf16.gmra.mrb[0].mxu0 %v443
      %v1787 = vpop.f32.mrb[0].mxu0
      %v1788 = vadd.f32 %v1627, %v1787
      %v1789 = vpop.f32.mrb[0].mxu0
      %v1790 = vpop.f32.mrb[0].mxu0
      %v1791 = vadd.f32 %v1630, %v1790
      %v1792 = vpop.f32.mrb[0].mxu0
      %1793 = vmatprep.mubr.bf16.mxu0 0
      %1794 = vmatmul.mubr.bf16.gmra.mrb[0].mxu0 %v444
      %v1795 = vpop.f32.mrb[0].mxu0
      %v1796 = vadd.f32 %v1635, %v1795
      %v1797 = vpop.f32.mrb[0].mxu0
      %v1798 = vpop.f32.mrb[0].mxu0
      %v1799 = vadd.f32 %v1638, %v1798
      %v1800 = vpop.f32.mrb[0].mxu0
      %1801 = vmatprep.mubr.bf16.mxu0 0
      %1802 = vmatmul.mubr.bf16.gmra.mrb[0].mxu0 %v445
      %v1803 = vpop.f32.mrb[0].mxu0
      %v1804 = vadd.f32 %v1643, %v1803
      %v1805 = vpop.f32.mrb[0].mxu0
      %v1806 = vpop.f32.mrb[0].mxu0
      %v1807 = vadd.f32 %v1646, %v1806
      %v1808 = vpop.f32.mrb[0].mxu0
      %1809 = vmatprep.mubr.bf16.mxu0 0
      %1810 = vmatmul.mubr.bf16.gmra.mrb[0].mxu0 %v446
      %v1811 = vpop.f32.mrb[0].mxu0
      %v1812 = vadd.f32 %v1651, %v1811
      %v1813 = vpop.f32.mrb[0].mxu0
      %v1814 = vpop.f32.mrb[0].mxu0
      %v1815 = vadd.f32 %v1654, %v1814
      %v1816 = vpop.f32.mrb[0].mxu0
      %1817 = vmatprep.mubr.bf16.mxu0 0
      %1818 = vmatmul.mubr.bf16.gmra.mrb[0].mxu0 %v449
      %v1819 = vpop.f32.mrb[0].mxu0
      %v1820 = vadd.f32 %v1659, %v1819
      %v1821 = vpop.f32.mrb[0].mxu0
      %v1822 = vpop.f32.mrb[0].mxu0
      %v1823 = vadd.f32 %v1662, %v1822
      %v1824 = vpop.f32.mrb[0].mxu0
      %1825 = vmatprep.mubr.bf16.mxu0 0
      %1826 = vmatmul.mubr.bf16.gmra.mrb[0].mxu0 %v452
      %v1827 = vpop.f32.mrb[0].mxu0
      %v1828 = vadd.f32 %v1667, %v1827
      %v1829 = vpop.f32.mrb[0].mxu0
      %v1830 = vpop.f32.mrb[0].mxu0
      %v1831 = vadd.f32 %v1670, %v1830
      %v1832 = vpop.f32.mrb[0].mxu0
      %1833 = vdwg.mxu0
      %v1834 = vpack.c.bf16 %v1711, %v1708
      %v1835 = vpack.c.bf16 %v1719, %v1716
      %v1836 = vpack.c.bf16 %v1727, %v1724
      %v1837 = vpack.c.bf16 %v1735, %v1732
      %v1838 = vpack.c.bf16 %v1743, %v1740
      %v1839 = vpack.c.bf16 %v1751, %v1748
      %v1840 = vpack.c.bf16 %v1759, %v1756
      %v1841 = vpack.c.bf16 %v1767, %v1764
      %v1842 = vpack.c.bf16 %v1775, %v1772
      %v1843 = vpack.c.bf16 %v1783, %v1780
      %v1844 = vpack.c.bf16 %v1791, %v1788
      %v1845 = vpack.c.bf16 %v1799, %v1796
      %v1846 = vpack.c.bf16 %v1807, %v1804
      %v1847 = vpack.c.bf16 %v1815, %v1812
      %v1848 = vpack.c.bf16 %v1823, %v1820
      %v1849 = vpack.c.bf16 %v1831, %v1828
      %v1866 = vunpack.c.l.b16 %v1834
      %v1867 = vunpack.c.h.b16 %v1834
      %v1868 = vunpack.c.l.b16 %v1835
      %v1869 = vunpack.c.h.b16 %v1835
      %v1870 = vunpack.c.l.b16 %v1836
      %v1871 = vunpack.c.h.b16 %v1836
      %v1872 = vunpack.c.l.b16 %v1837
      %v1873 = vunpack.c.h.b16 %v1837
      %v1874 = vunpack.c.l.b16 %v1838
      %v1875 = vunpack.c.h.b16 %v1838
      %v1876 = vunpack.c.l.b16 %v1839
      %v1877 = vunpack.c.h.b16 %v1839
      %v1878 = vunpack.c.l.b16 %v1840
      %v1879 = vunpack.c.h.b16 %v1840
      %v1880 = vunpack.c.l.b16 %v1841
      %v1881 = vunpack.c.h.b16 %v1841
      %v1882 = vunpack.c.l.b16 %v1842
      %v1883 = vunpack.c.h.b16 %v1842
      %v1884 = vunpack.c.l.b16 %v1843
      %v1885 = vunpack.c.h.b16 %v1843
      %v1886 = vunpack.c.l.b16 %v1844
      %v1887 = vunpack.c.h.b16 %v1844
      %v1888 = vunpack.c.l.b16 %v1845
      %v1889 = vunpack.c.h.b16 %v1845
      %v1890 = vunpack.c.l.b16 %v1846
      %v1891 = vunpack.c.h.b16 %v1846
      %v1892 = vunpack.c.l.b16 %v1847
      %v1893 = vunpack.c.h.b16 %v1847
      %v1894 = vunpack.c.l.b16 %v1848
      %v1895 = vunpack.c.h.b16 %v1848
      %v1896 = vunpack.c.l.b16 %v1849
      %v1897 = vunpack.c.h.b16 %v1849
      %v1898 = vpack.c.b16 %v1866, %v1866
      %v1899 = vpack.c.b16 %v1867, %v1867
      %v1900 = vpack.c.b16 %v1868, %v1868
      %v1901 = vpack.c.b16 %v1869, %v1869
      %v1902 = vpack.c.b16 %v1870, %v1870
      %v1903 = vpack.c.b16 %v1871, %v1871
      %v1904 = vpack.c.b16 %v1872, %v1872
      %v1905 = vpack.c.b16 %v1873, %v1873
      %v1906 = vpack.c.b16 %v1874, %v1874
      %v1907 = vpack.c.b16 %v1875, %v1875
      %v1908 = vpack.c.b16 %v1876, %v1876
      %v1909 = vpack.c.b16 %v1877, %v1877
      %v1910 = vpack.c.b16 %v1878, %v1878
      %v1911 = vpack.c.b16 %v1879, %v1879
      %v1912 = vpack.c.b16 %v1880, %v1880
      %v1913 = vpack.c.b16 %v1881, %v1881
      %v1914 = vpack.c.b16 %v1882, %v1882
      %v1915 = vpack.c.b16 %v1883, %v1883
      %v1916 = vpack.c.b16 %v1884, %v1884
      %v1917 = vpack.c.b16 %v1885, %v1885
      %v1918 = vpack.c.b16 %v1886, %v1886
      %v1919 = vpack.c.b16 %v1887, %v1887
      %v1920 = vpack.c.b16 %v1888, %v1888
      %v1921 = vpack.c.b16 %v1889, %v1889
      %v1922 = vpack.c.b16 %v1890, %v1890
      %v1923 = vpack.c.b16 %v1891, %v1891
      %v1924 = vpack.c.b16 %v1892, %v1892
      %v1925 = vpack.c.b16 %v1893, %v1893
      %v1926 = vpack.c.b16 %v1894, %v1894
      %v1927 = vpack.c.b16 %v1895, %v1895
      %v1928 = vpack.c.b16 %v1896, %v1896
      %v1929 = vpack.c.b16 %v1897, %v1897
      %1962 = vst [vmem:[%s177] sm:$0xf] %v1898
      %1963 = vst [vmem:[%s177 + $0x4] sm:$0xf] %v1899
      %1964 = vst [vmem:[%s177 + $0x8] sm:$0xf] %v1900
      %1965 = vst [vmem:[%s177 + $0xc] sm:$0xf] %v1901
      %1966 = vst [vmem:[%s177 + $0x10] sm:$0xf] %v1902
      %1967 = vst [vmem:[%s177 + $0x14] sm:$0xf] %v1903
      %1968 = vst [vmem:[%s177 + $0x18] sm:$0xf] %v1904
      %1969 = vst [vmem:[%s177 + $0x1c] sm:$0xf] %v1905
      %1970 = vst [vmem:[%s177 + $0x20] sm:$0xf] %v1906
      %1971 = vst [vmem:[%s177 + $0x24] sm:$0xf] %v1907
      %1972 = vst [vmem:[%s177 + $0x28] sm:$0xf] %v1908
      %1973 = vst [vmem:[%s177 + $0x2c] sm:$0xf] %v1909
      %1974 = vst [vmem:[%s177 + $0x30] sm:$0xf] %v1910
      %1975 = vst [vmem:[%s177 + $0x34] sm:$0xf] %v1911
      %1976 = vst [vmem:[%s177 + $0x38] sm:$0xf] %v1912
      %1977 = vst [vmem:[%s177 + $0x3c] sm:$0xf] %v1913
      %1978 = vst [vmem:[%s177 + $0x40] sm:$0xf] %v1914
      %1979 = vst [vmem:[%s177 + $0x44] sm:$0xf] %v1915
      %1980 = vst [vmem:[%s177 + $0x48] sm:$0xf] %v1916
      %1981 = vst [vmem:[%s177 + $0x4c] sm:$0xf] %v1917
      %1982 = vst [vmem:[%s177 + $0x50] sm:$0xf] %v1918
      %1983 = vst [vmem:[%s177 + $0x54] sm:$0xf] %v1919
      %1984 = vst [vmem:[%s177 + $0x58] sm:$0xf] %v1920
      %1985 = vst [vmem:[%s177 + $0x5c] sm:$0xf] %v1921
      %1986 = vst [vmem:[%s177 + $0x60] sm:$0xf] %v1922
      %1987 = vst [vmem:[%s177 + $0x64] sm:$0xf] %v1923
      %1988 = vst [vmem:[%s177 + $0x68] sm:$0xf] %v1924
      %1989 = vst [vmem:[%s177 + $0x6c] sm:$0xf] %v1925
      %1990 = vst [vmem:[%s177 + $0x70] sm:$0xf] %v1926
      %1991 = vst [vmem:[%s177 + $0x74] sm:$0xf] %v1927
      %1992 = vst [vmem:[%s177 + $0x78] sm:$0xf] %v1928
      %1993 = vst [vmem:[%s177 + $0x7c] sm:$0xf] %v1929
      %v1994 = vadd.f32 %v1708, %v1711
      %v1995 = vadd.f32 %v1994, %v1716
      %v1996 = vadd.f32 %v1995, %v1719
      %v1997 = vadd.f32 %v1996, %v1724
      %v1998 = vadd.f32 %v1997, %v1727
      %v1999 = vadd.f32 %v1998, %v1732
      %v2000 = vadd.f32 %v1999, %v1735
      %v2001 = vadd.f32 %v2000, %v1740
      %v2002 = vadd.f32 %v2001, %v1743
      %v2003 = vadd.f32 %v2002, %v1748
      %v2004 = vadd.f32 %v2003, %v1751
      %v2005 = vadd.f32 %v2004, %v1756
      %v2006 = vadd.f32 %v2005, %v1759
      %v2007 = vadd.f32 %v2006, %v1764
      %v2008 = vadd.f32 %v2007, %v1767
      %v2009 = vadd.f32 %v2008, %v1772
      %v2010 = vadd.f32 %v2009, %v1775
      %v2011 = vadd.f32 %v2010, %v1780
      %v2012 = vadd.f32 %v2011, %v1783
      %v2013 = vadd.f32 %v2012, %v1788
      %v2014 = vadd.f32 %v2013, %v1791
      %v2015 = vadd.f32 %v2014, %v1796
      %v2016 = vadd.f32 %v2015, %v1799
      %v2017 = vadd.f32 %v2016, %v1804
      %v2018 = vadd.f32 %v2017, %v1807
      %v2019 = vadd.f32 %v2018, %v1812
      %v2020 = vadd.f32 %v2019, %v1815
      %v2021 = vadd.f32 %v2020, %v1820
      %v2022 = vadd.f32 %v2021, %v1823
      %v2023 = vadd.f32 %v2022, %v1828
      %v2024 = vadd.f32 %v2023, %v1831
      %v2025 = vrot.slane %v2024, 4
      %v2026 = vadd.f32 %v2024, %v2025
      %v2027 = vrot.slane %v2026, 2
      %v2028 = vadd.f32 %v2026, %v2027
      %v2029 = vrot.slane %v2028, 1
      %v2030 = vadd.f32 %v2028, %v2029
      %v2031 = vmul.f32 %v1708, %v1708
      %v2032 = vmul.f32 %v1711, %v1711
      %v2033 = vmul.f32 %v1716, %v1716
      %v2034 = vmul.f32 %v1719, %v1719
      %v2035 = vmul.f32 %v1724, %v1724
      %v2036 = vmul.f32 %v1727, %v1727
      %v2037 = vmul.f32 %v1732, %v1732
      %v2038 = vmul.f32 %v1735, %v1735
      %v2039 = vmul.f32 %v1740, %v1740
      %v2040 = vmul.f32 %v1743, %v1743
      %v2041 = vmul.f32 %v1748, %v1748
      %v2042 = vmul.f32 %v1751, %v1751
      %v2043 = vmul.f32 %v1756, %v1756
      %v2044 = vmul.f32 %v1759, %v1759
      %v2045 = vmul.f32 %v1764, %v1764
      %v2046 = vmul.f32 %v1767, %v1767
      %v2047 = vmul.f32 %v1772, %v1772
      %v2048 = vmul.f32 %v1775, %v1775
      %v2049 = vmul.f32 %v1780, %v1780
      %v2050 = vmul.f32 %v1783, %v1783
      %v2051 = vmul.f32 %v1788, %v1788
      %v2052 = vmul.f32 %v1791, %v1791
      %v2053 = vmul.f32 %v1796, %v1796
      %v2054 = vmul.f32 %v1799, %v1799
      %v2055 = vmul.f32 %v1804, %v1804
      %v2056 = vmul.f32 %v1807, %v1807
      %v2057 = vmul.f32 %v1812, %v1812
      %v2058 = vmul.f32 %v1815, %v1815
      %v2059 = vmul.f32 %v1820, %v1820
      %v2060 = vmul.f32 %v1823, %v1823
      %v2061 = vmul.f32 %v1828, %v1828
      %v2062 = vmul.f32 %v1831, %v1831
      %v2063 = vadd.f32 %v2031, %v2032
      %v2064 = vadd.f32 %v2063, %v2033
      %v2065 = vadd.f32 %v2064, %v2034
      %v2066 = vadd.f32 %v2065, %v2035
      %v2067 = vadd.f32 %v2066, %v2036
      %v2068 = vadd.f32 %v2067, %v2037
      %v2069 = vadd.f32 %v2068, %v2038
      %v2070 = vadd.f32 %v2069, %v2039
      %v2071 = vadd.f32 %v2070, %v2040
      %v2072 = vadd.f32 %v2071, %v2041
      %v2073 = vadd.f32 %v2072, %v2042
      %v2074 = vadd.f32 %v2073, %v2043
      %v2075 = vadd.f32 %v2074, %v2044
      %v2076 = vadd.f32 %v2075, %v2045
      %v2077 = vadd.f32 %v2076, %v2046
      %v2078 = vadd.f32 %v2077, %v2047
      %v2079 = vadd.f32 %v2078, %v2048
      %v2080 = vadd.f32 %v2079, %v2049
      %v2081 = vadd.f32 %v2080, %v2050
      %v2082 = vadd.f32 %v2081, %v2051
      %v2083 = vadd.f32 %v2082, %v2052
      %v2084 = vadd.f32 %v2083, %v2053
      %v2085 = vadd.f32 %v2084, %v2054
      %v2086 = vadd.f32 %v2085, %v2055
      %v2087 = vadd.f32 %v2086, %v2056
      %v2088 = vadd.f32 %v2087, %v2057
      %v2089 = vadd.f32 %v2088, %v2058
      %v2090 = vadd.f32 %v2089, %v2059
      %v2091 = vadd.f32 %v2090, %v2060
      %v2092 = vadd.f32 %v2091, %v2061
      %v2093 = vadd.f32 %v2092, %v2062
      %v2094 = vrot.slane %v2093, 4
      %v2095 = vadd.f32 %v2093, %v2094
      %v2096 = vrot.slane %v2095, 2
      %v2097 = vadd.f32 %v2095, %v2096
      %v2098 = vrot.slane %v2097, 1
      %v2099 = vadd.f32 %v2097, %v2098
      %vm2100 = vcmask 1040384
      %v2101 = vsel %vm2100, %v2030, %v2099
      %2102 = vst [vmem:[%s181] sm:$0x3] %v2101
      %p2103 = scmp.lt.s32.totalorder %s15, 1
      %s2104 = scalar_select %p2103, %s15, 1
      %s2105 = smul.addr %s2104, 32
      %s2106 = smul.addr %s2105, 4
      %s2107 = scalar_lea.vmem %s2, %s2106
      %p2108 = scmp.lt.s32.totalorder %s15, 1
      %s2109 = scalar_select %p2108, %s15, 1
      %s2110 = smul.addr %s2109, 2
      %s2111 = scalar_lea.vmem %s3, %s2110
      // Predicated region
      $region29: #{resblock_pallas.3} parent=27 // pred_check
        %p2112 = pneg %p80
      $region30: #{resblock_pallas.3} parent=27 // pred_check_branch
        %2114 = sbr.rel (%p2112) target = $region32
      $region31: #{resblock_pallas.3} parent=27 // pred_region
        _
      $region32: #{resblock_pallas.3} parent=27 // pred_fallthru
        _
      // Predicated region
      $region33: #{resblock_pallas.3} parent=27 // pred_check
        %p2115 = pneg %p106
      $region34: #{resblock_pallas.3} parent=27 // pred_check_branch
        %2117 = sbr.rel (%p2115) target = $region36
      $region35: #{resblock_pallas.3} parent=27 // pred_region
        _
      $region36: #{resblock_pallas.3} parent=27 // pred_fallthru
        _
    $region28: #{resblock_pallas.3} parent=5 // pred_fallthru
      _
    %p2118 = scmp.le.s32.totalorder 2, %s10
    // Predicated region
    $region37: #{resblock_pallas.3} parent=5 // pred_check
      %p2119 = pneg %p2118
    $region38: #{resblock_pallas.3} parent=5 // pred_check_branch
      %2121 = sbr.rel (%p2119) target = $region40
    $region39: #{resblock_pallas.3} parent=5 // pred_region
      %s2122 = ssub.s32 %s10, 2
      // Predicated region
      $region41: #{resblock_pallas.3} parent=39 // pred_check
        %p2123 = pneg %p86
      $region42: #{resblock_pallas.3} parent=39 // pred_check_branch
        %2125 = sbr.rel (%p2123) target = $region44
      $region43: #{resblock_pallas.3} parent=39 // pred_region
        %p2126 = scmp.lt.s32.totalorder %s16, 1
        %s2127 = scalar_select %p2126, %s16, 1
        %s2128 = smul.addr %s2127, 32
        %s2129 = smul.addr %s2128, 4
        %s2130 = scalar_lea.vmem %s2, %s2129
      $region44: #{resblock_pallas.3} parent=39 // pred_fallthru
        _
      // Predicated region
      $region45: #{resblock_pallas.3} parent=39 // pred_check
        %p2131 = pneg %p112
      $region46: #{resblock_pallas.3} parent=39 // pred_check_branch
        %2133 = sbr.rel (%p2131) target = $region48
      $region47: #{resblock_pallas.3} parent=39 // pred_region
        %p2134 = scmp.lt.s32.totalorder %s16, 1
        %s2135 = scalar_select %p2134, %s16, 1
        %s2136 = smul.addr %s2135, 2
        %s2137 = scalar_lea.vmem %s3, %s2136
      $region48: #{resblock_pallas.3} parent=39 // pred_fallthru
        _
    $region40: #{resblock_pallas.3} parent=5 // pred_fallthru
      _
  $region6: #{resblock_pallas.3} parent=0 // loop_footer
    %s14 = sadd.s32 1, %s10
  $region7: #{resblock_pallas.3} parent=0 // loop_footer_branch
    %9 = sbr.rel target = $region3
  $region8: #{resblock_pallas.3} parent=0 // loop_exit
    _

</llo_original>
